<compile_context>
chip_gen: v6e
topology: v6e:2x2x1
jax: 0.10.0
libtpu: 0.0.40
codegen_flags: <defaults>
</compile_context>

<pallas_src>
import functools

import jax
import jax.numpy as jnp
from jax.experimental import pallas as pl
from jax.experimental.pallas import tpu as pltpu

GROUPS = 8
PAD = 2          # max padding needed (dilated 3x3); other convs index with an offset
NUM_TAPS = 19    # 9 (gwc1) + 9 (gwc2, dilated) + 1 (pwc)


def _tap_offsets():
    """Offsets of every kernel tap inside the pad-2 padded image."""
    offs = []
    for kh in range(3):                       # gwc1: 3x3, dilation=1, pad=1
        for kw in range(3):
            offs.append((1 + kh, 1 + kw))
    for kh in range(3):                       # gwc2: 3x3, dilation=2, pad=2
        for kw in range(3):
            offs.append((2 * kh, 2 * kw))
    offs.append((2, 2))                       # pwc: 1x1
    return tuple(offs)


def mconv2_kernel(x_ref, w_ref, b_ref, o_ref, xpad_ref, xcol_ref, *, taps, tpg):
    # x_ref:    [NB, H, W, Cin]         bf16 (NHWC, unpadded)
    # w_ref:    [Cout, K_pad]           bf16, taps stacked along K (block-diag/group),
    #                                   zero-padded K to a multiple of 128
    # b_ref:    [Cout, 1]               f32, summed biases of the three convs
    # o_ref:    [NB, Cout, H*W]         bf16, lane-dense (H*W on the lane axis)
    # xpad_ref: [H+4, W+4, Cin]         bf16 VMEM scratch (pad-2 frame, reused per image)
    # xcol_ref: [NB*H*W, K_pad]         bf16 VMEM scratch (im2col slab)
    NB, H, W, Cin = x_ref.shape
    HW = H * W
    GW = tpg * Cin                                   # lane width of one tap group (>=128)
    n_groups = (len(taps) + tpg - 1) // tpg

    # Zero only the 2-wide pad border; the interior is fully overwritten per image.
    zrow = jnp.zeros((PAD, W + 2 * PAD, Cin), xpad_ref.dtype)
    zcol = jnp.zeros((H, PAD, Cin), xpad_ref.dtype)
    xpad_ref[0:PAD, :, :] = zrow
    xpad_ref[H + PAD:H + 2 * PAD, :, :] = zrow
    xpad_ref[PAD:H + PAD, 0:PAD, :] = zcol
    xpad_ref[PAD:H + PAD, W + PAD:W + 2 * PAD, :] = zcol

    for nb in range(NB):
        # Place image nb into the padded frame.
        xpad_ref[PAD:H + PAD, PAD:W + PAD, :] = x_ref[nb]

        # Build the im2col slab with 128-lane-aligned, unmasked stores:
        # concatenate tpg taps along channels (-> GW lanes), reshape the group
        # once, store once.  19 taps -> 3 aligned stores (last group zero-padded).
        for g in range(n_groups):
            grp_taps = taps[g * tpg:(g + 1) * tpg]
            pieces = [xpad_ref[oh:oh + H, ow:ow + W, :] for (oh, ow) in grp_taps]
            pad_w = GW - len(grp_taps) * Cin
            if pad_w:
                pieces.append(jnp.zeros((H, W, pad_w), xpad_ref.dtype))
            grp = jnp.concatenate(pieces, axis=-1)                    # [H, W, GW]
            xcol_ref[nb * HW:(nb + 1) * HW, g * GW:(g + 1) * GW] = grp.reshape(HW, GW)

    # Single fused MXU pass emitting the lane-dense layout directly:
    # [Cout, K] x [NB*HW, K]^T -> [Cout, NB*HW]  (f32 accumulation).
    acc = jax.lax.dot_general(
        w_ref[...], xcol_ref[...],
        dimension_numbers=(((1,), (1,)), ((), ())),
        preferred_element_type=jnp.float32)
    acc = acc + b_ref[...]                                            # f32 bias add

    for nb in range(NB):                      # lane-aligned full-width stores (HW % 128 == 0)
        o_ref[nb] = acc[:, nb * HW:(nb + 1) * HW].astype(o_ref.dtype)


def _block_diag_taps(w, groups):
    """[Cout, Cin_g, kh, kw] grouped weight -> [kh*kw, Cin, Cout] block-diag."""
    Cout, Cin_g, kh, kw = w.shape
    Cout_g = Cout // groups
    Cin = Cin_g * groups
    full = jnp.zeros((kh * kw, Cin, Cout), jnp.float32)
    for g in range(groups):
        blk = w[g * Cout_g:(g + 1) * Cout_g]             # [Cout_g, Cin_g, kh, kw]
        blk = jnp.transpose(blk, (2, 3, 1, 0))           # [kh, kw, Cin_g, Cout_g]
        blk = blk.reshape(kh * kw, Cin_g, Cout_g)
        full = full.at[:, g * Cin_g:(g + 1) * Cin_g,
                       g * Cout_g:(g + 1) * Cout_g].set(blk)
    return full


def _pick_nb(n):
    """Images per grid step: amortize per-step overhead but keep >= 2 (pref >= 4)
    grid steps so both v7x TensorCores get work under parallel semantics."""
    for nb in (8, 4, 2, 1):
        if n % nb == 0 and n // nb >= 4:
            return nb
    for nb in (8, 4, 2, 1):
        if n % nb == 0 and n // nb >= 2:
            return nb
    return 1


@jax.jit
def mconv2_forward(x_nchw, w1, b1, w2, b2, w3, b3):
    """x_nchw: [N, Cin, H, W] -> [N, Cout, H, W]  (stride=1)."""
    N, Cin, H, W = x_nchw.shape
    Cout = w1.shape[0]
    HW = H * W
    taps = _tap_offsets()

    # Lane-group geometry for the im2col slab.
    if Cin >= 128:
        assert Cin % 128 == 0
        tpg = 1
    else:
        assert 128 % Cin == 0
        tpg = 128 // Cin
    n_groups = (NUM_TAPS + tpg - 1) // tpg
    k_pad = n_groups * tpg * Cin                      # 384 at Cin=16

    nb = _pick_nb(N)

    # Single input layout pass: NCHW -> NHWC + bf16 (halves activation bytes).
    x = jnp.transpose(x_nchw, (0, 2, 3, 1)).astype(jnp.bfloat16)

    # Stacked weights: [19, Cin, Cout] block-diag per group -> transposed
    # [Cout, 19*Cin], zero-padded along K to k_pad (matches xcol's padded lanes).
    w_taps = jnp.concatenate(
        [_block_diag_taps(w1, GROUPS),     # 9 taps (gwc1)
         _block_diag_taps(w2, GROUPS),     # 9 taps (gwc2, dilated)
         _block_diag_taps(w3, GROUPS)],    # 1 tap  (pwc)
        axis=0)                                               # [19, Cin, Cout]
    w_t = jnp.transpose(w_taps.reshape(NUM_TAPS * Cin, Cout))  # [Cout, 19*Cin]
    w_stacked = jnp.pad(w_t, ((0, 0), (0, k_pad - NUM_TAPS * Cin))).astype(jnp.bfloat16)
    bias = (b1 + b2 + b3).reshape(Cout, 1).astype(jnp.float32)

    cost = pl.CostEstimate(
        flops=2 * N * HW * NUM_TAPS * Cin * Cout,
        transcendentals=0,
        bytes_accessed=(N * HW * Cin * 2) + (Cout * k_pad * 2)
                       + (Cout * 4) + (N * Cout * HW * 2))

    out = pl.pallas_call(
        functools.partial(mconv2_kernel, taps=taps, tpg=tpg),
        out_shape=jax.ShapeDtypeStruct((N, Cout, HW), jnp.bfloat16),
        grid=(N // nb,),
        in_specs=[
            pl.BlockSpec((nb, H, W, Cin), lambda n: (n, 0, 0, 0)),
            pl.BlockSpec((Cout, k_pad), lambda n: (0, 0)),
            pl.BlockSpec((Cout, 1), lambda n: (0, 0)),
        ],
        out_specs=pl.BlockSpec((nb, Cout, HW), lambda n: (n, 0, 0)),
        scratch_shapes=[
            pltpu.VMEM((H + 2 * PAD, W + 2 * PAD, Cin), jnp.bfloat16),
            pltpu.VMEM((nb * HW, k_pad), jnp.bfloat16),
        ],
        compiler_params=pltpu.CompilerParams(
            dimension_semantics=("parallel",),
            vmem_limit_bytes=32 * 1024 * 1024),
        cost_estimate=cost,
    )(x, w_stacked, bias)

    # Free reshape back to NCHW: kernel already emits lane-dense [N, Cout, H*W].
    return out.reshape(N, Cout, H, W)


def _conv_ref(x, w, b, dilation, padding):
    out = jax.lax.conv_general_dilated(
        x, w, window_strides=(1, 1),
        padding=[(padding, padding), (padding, padding)],
        rhs_dilation=(dilation, dilation),
        dimension_numbers=('NCHW', 'OIHW', 'NCHW'),
        feature_group_count=GROUPS,
        precision=jax.lax.Precision.HIGHEST)
    return out + b[None, :, None, None]


if __name__ == "__main__":
    # Small shapes consistent with the module: groups=8 => channels % 8 == 0.
    N, Cin, Cout, H, W = 2, 16, 16, 16, 16

    key = jax.random.PRNGKey(0)
    k = jax.random.split(key, 7)
    scale = 0.1
    # PyTorch Conv2d param shapes: weight [Cout, Cin/groups, kH, kW], bias [Cout].
    w1 = scale * jax.random.normal(k[0], (Cout, Cin // GROUPS, 3, 3), jnp.float32)
    b1 = scale * jax.random.normal(k[1], (Cout,), jnp.float32)
    w2 = scale * jax.random.normal(k[2], (Cout, Cin // GROUPS, 3, 3), jnp.float32)
    b2 = scale * jax.random.normal(k[3], (Cout,), jnp.float32)
    w3 = scale * jax.random.normal(k[4], (Cout, Cin // GROUPS, 1, 1), jnp.float32)
    b3 = scale * jax.random.normal(k[5], (Cout,), jnp.float32)
    x = jax.random.normal(k[6], (N, Cin, H, W), jnp.float32)

    out = jax.block_until_ready(mconv2_forward(x, w1, b1, w2, b2, w3, b3))

    # Pure-JAX reference with the same bf16 rounding the kernel applies to
    # activations/weights; kernel additionally rounds the final result to bf16.
    rnd = lambda a: a.astype(jnp.bfloat16).astype(jnp.float32)
    xr, w1r, w2r, w3r = rnd(x), rnd(w1), rnd(w2), rnd(w3)
    ref = (_conv_ref(xr, w1r, b1, dilation=1, padding=1)
           + _conv_ref(xr, w2r, b2, dilation=2, padding=2)
           + _conv_ref(xr, w3r, b3, dilation=1, padding=0))
    ref = jax.block_until_ready(ref)

    assert out.shape == (N, Cout, H, W)
    outf = out.astype(jnp.float32)
    err = jnp.max(jnp.abs(outf - ref))
    assert jnp.allclose(outf, ref, atol=2e-2, rtol=2e-2), f"max abs err {err}"
    print("KERNEL_OK")
</pallas_src>

<mosaic_0001>
module attributes {stable_mosaic.version = 11 : i64} {
  func.func @mconv2_kernel(%arg0: i32, %arg1: memref<1x16x16x16xbf16, #tpu.memory_space<vmem>>, %arg2: memref<16x384xbf16, #tpu.memory_space<vmem>>, %arg3: memref<16x1xf32, #tpu.memory_space<vmem>>, %arg4: memref<1x16x256xbf16, #tpu.memory_space<vmem>>, %arg5: memref<20x20x16xbf16, #tpu.memory_space<vmem>>, %arg6: memref<256x384xbf16, #tpu.memory_space<vmem>>) attributes {dimension_semantics = [#tpu.dimension_semantics<parallel>], iteration_bounds = array<i64: 2>, scalar_prefetch = 0 : i64, scratch_operands = 2 : i64, tpu.core_type = #tpu.core_type<tc>, window_params = [{transform_indices = @transform_0, window_bounds = array<i64: 1, 16, 16, 16>}, {pipeline_mode = #tpu.pipeline_mode<synchronous>, transform_indices = @transform_1, window_bounds = array<i64: 16, 384>}, {pipeline_mode = #tpu.pipeline_mode<synchronous>, transform_indices = @transform_2, window_bounds = array<i64: 16, 1>}, {transform_indices = @transform_3, window_bounds = array<i64: 1, 16, 256>}]} {
    %cst = arith.constant 0.000000e+00 : bf16
    %0 = vector.broadcast %cst : bf16 to vector<2x20x16xbf16>
    %cst_0 = arith.constant 0.000000e+00 : bf16
    %1 = vector.broadcast %cst_0 : bf16 to vector<16x2x16xbf16>
    %c0 = arith.constant 0 : index
    %c0_1 = arith.constant 0 : index
    %c0_2 = arith.constant 0 : index
    %2 = vector.load %arg5[%c0, %c0_1, %c0_2] : memref<20x20x16xbf16, #tpu.memory_space<vmem>>, vector<2x20x16xbf16>
    tpu.vector_store %arg5[%c0, %c0_1, %c0_2], %0 {strides = array<i32>} : memref<20x20x16xbf16, #tpu.memory_space<vmem>>, vector<2x20x16xbf16>,
    %c18 = arith.constant 18 : index
    %c0_3 = arith.constant 0 : index
    %c0_4 = arith.constant 0 : index
    %3 = vector.load %arg5[%c18, %c0_3, %c0_4] : memref<20x20x16xbf16, #tpu.memory_space<vmem>>, vector<2x20x16xbf16>
    tpu.vector_store %arg5[%c18, %c0_3, %c0_4], %0 {strides = array<i32>} : memref<20x20x16xbf16, #tpu.memory_space<vmem>>, vector<2x20x16xbf16>,
    %c2 = arith.constant 2 : index
    %c0_5 = arith.constant 0 : index
    %c0_6 = arith.constant 0 : index
    %4 = vector.load %arg5[%c2, %c0_5, %c0_6] : memref<20x20x16xbf16, #tpu.memory_space<vmem>>, vector<16x2x16xbf16>
    tpu.vector_store %arg5[%c2, %c0_5, %c0_6], %1 {strides = array<i32>} : memref<20x20x16xbf16, #tpu.memory_space<vmem>>, vector<16x2x16xbf16>,
    %c2_7 = arith.constant 2 : index
    %c18_8 = arith.constant 18 : index
    %c0_9 = arith.constant 0 : index
    %5 = vector.load %arg5[%c2_7, %c18_8, %c0_9] : memref<20x20x16xbf16, #tpu.memory_space<vmem>>, vector<16x2x16xbf16>
    tpu.vector_store %arg5[%c2_7, %c18_8, %c0_9], %1 {strides = array<i32>} : memref<20x20x16xbf16, #tpu.memory_space<vmem>>, vector<16x2x16xbf16>,
    %c0_10 = arith.constant 0 : index
    %c0_11 = arith.constant 0 : index
    %c0_12 = arith.constant 0 : index
    %c0_13 = arith.constant 0 : index
    %6 = vector.load %arg1[%c0_10, %c0_11, %c0_12, %c0_13] : memref<1x16x16x16xbf16, #tpu.memory_space<vmem>>, vector<1x16x16x16xbf16>
    %7 = vector.shape_cast %6 : vector<1x16x16x16xbf16> to vector<16x16x16xbf16>
    %c2_14 = arith.constant 2 : index
    %c2_15 = arith.constant 2 : index
    %c0_16 = arith.constant 0 : index
    %8 = vector.load %arg5[%c2_14, %c2_15, %c0_16] : memref<20x20x16xbf16, #tpu.memory_space<vmem>>, vector<16x16x16xbf16>
    tpu.vector_store %arg5[%c2_14, %c2_15, %c0_16], %7 {strides = array<i32>} : memref<20x20x16xbf16, #tpu.memory_space<vmem>>, vector<16x16x16xbf16>,
    %c1 = arith.constant 1 : index
    %c1_17 = arith.constant 1 : index
    %c0_18 = arith.constant 0 : index
    %9 = vector.load %arg5[%c1, %c1_17, %c0_18] : memref<20x20x16xbf16, #tpu.memory_space<vmem>>, vector<16x16x16xbf16>
    %c1_19 = arith.constant 1 : index
    %c2_20 = arith.constant 2 : index
    %c0_21 = arith.constant 0 : index
    %10 = vector.load %arg5[%c1_19, %c2_20, %c0_21] : memref<20x20x16xbf16, #tpu.memory_space<vmem>>, vector<16x16x16xbf16>
    %c1_22 = arith.constant 1 : index
    %c3 = arith.constant 3 : index
    %c0_23 = arith.constant 0 : index
    %11 = vector.load %arg5[%c1_22, %c3, %c0_23] : memref<20x20x16xbf16, #tpu.memory_space<vmem>>, vector<16x16x16xbf16>
    %c2_24 = arith.constant 2 : index
    %c1_25 = arith.constant 1 : index
    %c0_26 = arith.constant 0 : index
    %12 = vector.load %arg5[%c2_24, %c1_25, %c0_26] : memref<20x20x16xbf16, #tpu.memory_space<vmem>>, vector<16x16x16xbf16>
    %c2_27 = arith.constant 2 : index
    %c2_28 = arith.constant 2 : index
    %c0_29 = arith.constant 0 : index
    %13 = vector.load %arg5[%c2_27, %c2_28, %c0_29] : memref<20x20x16xbf16, #tpu.memory_space<vmem>>, vector<16x16x16xbf16>
    %c2_30 = arith.constant 2 : index
    %c3_31 = arith.constant 3 : index
    %c0_32 = arith.constant 0 : index
    %14 = vector.load %arg5[%c2_30, %c3_31, %c0_32] : memref<20x20x16xbf16, #tpu.memory_space<vmem>>, vector<16x16x16xbf16>
    %c3_33 = arith.constant 3 : index
    %c1_34 = arith.constant 1 : index
    %c0_35 = arith.constant 0 : index
    %15 = vector.load %arg5[%c3_33, %c1_34, %c0_35] : memref<20x20x16xbf16, #tpu.memory_space<vmem>>, vector<16x16x16xbf16>
    %c3_36 = arith.constant 3 : index
    %c2_37 = arith.constant 2 : index
    %c0_38 = arith.constant 0 : index
    %16 = vector.load %arg5[%c3_36, %c2_37, %c0_38] : memref<20x20x16xbf16, #tpu.memory_space<vmem>>, vector<16x16x16xbf16>
    %17 = tpu.concatenate %9, %10, %11, %12, %13, %14, %15, %16 in 2 : vector<16x16x16xbf16>, vector<16x16x16xbf16>, vector<16x16x16xbf16>, vector<16x16x16xbf16>, vector<16x16x16xbf16>, vector<16x16x16xbf16>, vector<16x16x16xbf16>, vector<16x16x16xbf16> -> vector<16x16x128xbf16>
    %18 = vector.shape_cast %17 : vector<16x16x128xbf16> to vector<256x128xbf16>
    %c0_39 = arith.constant 0 : index
    %c0_40 = arith.constant 0 : index
    %19 = vector.load %arg6[%c0_39, %c0_40] : memref<256x384xbf16, #tpu.memory_space<vmem>>, vector<256x128xbf16>
    tpu.vector_store %arg6[%c0_39, %c0_40], %18 {strides = array<i32>} : memref<256x384xbf16, #tpu.memory_space<vmem>>, vector<256x128xbf16>,
    %c3_41 = arith.constant 3 : index
    %c3_42 = arith.constant 3 : index
    %c0_43 = arith.constant 0 : index
    %20 = vector.load %arg5[%c3_41, %c3_42, %c0_43] : memref<20x20x16xbf16, #tpu.memory_space<vmem>>, vector<16x16x16xbf16>
    %c0_44 = arith.constant 0 : index
    %c0_45 = arith.constant 0 : index
    %c0_46 = arith.constant 0 : index
    %21 = vector.load %arg5[%c0_44, %c0_45, %c0_46] : memref<20x20x16xbf16, #tpu.memory_space<vmem>>, vector<16x16x16xbf16>
    %c0_47 = arith.constant 0 : index
    %c2_48 = arith.constant 2 : index
    %c0_49 = arith.constant 0 : index
    %22 = vector.load %arg5[%c0_47, %c2_48, %c0_49] : memref<20x20x16xbf16, #tpu.memory_space<vmem>>, vector<16x16x16xbf16>
    %c0_50 = arith.constant 0 : index
    %c4 = arith.constant 4 : index
    %c0_51 = arith.constant 0 : index
    %23 = vector.load %arg5[%c0_50, %c4, %c0_51] : memref<20x20x16xbf16, #tpu.memory_space<vmem>>, vector<16x16x16xbf16>
    %c2_52 = arith.constant 2 : index
    %c0_53 = arith.constant 0 : index
    %c0_54 = arith.constant 0 : index
    %24 = vector.load %arg5[%c2_52, %c0_53, %c0_54] : memref<20x20x16xbf16, #tpu.memory_space<vmem>>, vector<16x16x16xbf16>
    %c2_55 = arith.constant 2 : index
    %c2_56 = arith.constant 2 : index
    %c0_57 = arith.constant 0 : index
    %25 = vector.load %arg5[%c2_55, %c2_56, %c0_57] : memref<20x20x16xbf16, #tpu.memory_space<vmem>>, vector<16x16x16xbf16>
    %c2_58 = arith.constant 2 : index
    %c4_59 = arith.constant 4 : index
    %c0_60 = arith.constant 0 : index
    %26 = vector.load %arg5[%c2_58, %c4_59, %c0_60] : memref<20x20x16xbf16, #tpu.memory_space<vmem>>, vector<16x16x16xbf16>
    %c4_61 = arith.constant 4 : index
    %c0_62 = arith.constant 0 : index
    %c0_63 = arith.constant 0 : index
    %27 = vector.load %arg5[%c4_61, %c0_62, %c0_63] : memref<20x20x16xbf16, #tpu.memory_space<vmem>>, vector<16x16x16xbf16>
    %28 = tpu.concatenate %20, %21, %22, %23, %24, %25, %26, %27 in 2 : vector<16x16x16xbf16>, vector<16x16x16xbf16>, vector<16x16x16xbf16>, vector<16x16x16xbf16>, vector<16x16x16xbf16>, vector<16x16x16xbf16>, vector<16x16x16xbf16>, vector<16x16x16xbf16> -> vector<16x16x128xbf16>
    %29 = vector.shape_cast %28 : vector<16x16x128xbf16> to vector<256x128xbf16>
    %c0_64 = arith.constant 0 : index
    %c128 = arith.constant 128 : index
    %30 = vector.load %arg6[%c0_64, %c128] : memref<256x384xbf16, #tpu.memory_space<vmem>>, vector<256x128xbf16>
    tpu.vector_store %arg6[%c0_64, %c128], %29 {strides = array<i32>} : memref<256x384xbf16, #tpu.memory_space<vmem>>, vector<256x128xbf16>,
    %c4_65 = arith.constant 4 : index
    %c2_66 = arith.constant 2 : index
    %c0_67 = arith.constant 0 : index
    %31 = vector.load %arg5[%c4_65, %c2_66, %c0_67] : memref<20x20x16xbf16, #tpu.memory_space<vmem>>, vector<16x16x16xbf16>
    %c4_68 = arith.constant 4 : index
    %c4_69 = arith.constant 4 : index
    %c0_70 = arith.constant 0 : index
    %32 = vector.load %arg5[%c4_68, %c4_69, %c0_70] : memref<20x20x16xbf16, #tpu.memory_space<vmem>>, vector<16x16x16xbf16>
    %c2_71 = arith.constant 2 : index
    %c2_72 = arith.constant 2 : index
    %c0_73 = arith.constant 0 : index
    %33 = vector.load %arg5[%c2_71, %c2_72, %c0_73] : memref<20x20x16xbf16, #tpu.memory_space<vmem>>, vector<16x16x16xbf16>
    %cst_74 = arith.constant 0.000000e+00 : bf16
    %34 = vector.broadcast %cst_74 : bf16 to vector<16x16x80xbf16>
    %35 = tpu.concatenate %31, %32, %33, %34 in 2 : vector<16x16x16xbf16>, vector<16x16x16xbf16>, vector<16x16x16xbf16>, vector<16x16x80xbf16> -> vector<16x16x128xbf16>
    %36 = vector.shape_cast %35 : vector<16x16x128xbf16> to vector<256x128xbf16>
    %c0_75 = arith.constant 0 : index
    %c256 = arith.constant 256 : index
    %37 = vector.load %arg6[%c0_75, %c256] : memref<256x384xbf16, #tpu.memory_space<vmem>>, vector<256x128xbf16>
    tpu.vector_store %arg6[%c0_75, %c256], %36 {strides = array<i32>} : memref<256x384xbf16, #tpu.memory_space<vmem>>, vector<256x128xbf16>,
    %c0_76 = arith.constant 0 : index
    %c0_77 = arith.constant 0 : index
    %38 = vector.load %arg2[%c0_76, %c0_77] : memref<16x384xbf16, #tpu.memory_space<vmem>>, vector<16x384xbf16>
    %c0_78 = arith.constant 0 : index
    %c0_79 = arith.constant 0 : index
    %39 = vector.load %arg6[%c0_78, %c0_79] : memref<256x384xbf16, #tpu.memory_space<vmem>>, vector<256x384xbf16>
    %cst_80 = arith.constant dense<0.000000e+00> : vector<16x256xf32>
    %40 = tpu.matmul %38, %39, %cst_80 {dimension_numbers = #tpu.dot_dimension_numbers<[1], [1], [0], [0], [0, 0, 1, 0], [], []>} : vector<16x384xbf16>, vector<256x384xbf16>, vector<16x256xf32> -> vector<16x256xf32>
    %c0_81 = arith.constant 0 : index
    %c0_82 = arith.constant 0 : index
    %41 = vector.load %arg3[%c0_81, %c0_82] : memref<16x1xf32, #tpu.memory_space<vmem>>, vector<16x1xf32>
    %42 = vector.broadcast %41 : vector<16x1xf32> to vector<16x256xf32>
    %43 = arith.addf %40, %42 : vector<16x256xf32>
    %44 = arith.truncf %43 : vector<16x256xf32> to vector<16x256xbf16>
    %c0_83 = arith.constant 0 : index
    %c0_84 = arith.constant 0 : index
    %c0_85 = arith.constant 0 : index
    %45 = vector.load %arg4[%c0_83, %c0_84, %c0_85] : memref<1x16x256xbf16, #tpu.memory_space<vmem>>, vector<1x16x256xbf16>
    %46 = vector.shape_cast %45 : vector<1x16x256xbf16> to vector<16x256xbf16>
    %47 = vector.shape_cast %44 : vector<16x256xbf16> to vector<1x16x256xbf16>
    tpu.vector_store %arg4[%c0_83, %c0_84, %c0_85], %47 {strides = array<i32>} : memref<1x16x256xbf16, #tpu.memory_space<vmem>>, vector<1x16x256xbf16>,
    return
  }
  func.func @transform_0(%arg0: i32) -> (i32, i32, i32, i32) {
    %c0_i32 = arith.constant 0 : i32
    %c0_i32_0 = arith.constant 0 : i32
    %c0_i32_1 = arith.constant 0 : i32
    %c0_i32_2 = arith.constant 0 : i32
    return %arg0, %c0_i32, %c0_i32_0, %c0_i32_1 : i32, i32, i32, i32
  }
  func.func @transform_1(%arg0: i32) -> (i32, i32) {
    %c0_i32 = arith.constant 0 : i32
    %c0_i32_0 = arith.constant 0 : i32
    %c0_i32_1 = arith.constant 0 : i32
    return %c0_i32, %c0_i32_0 : i32, i32
  }
  func.func @transform_2(%arg0: i32) -> (i32, i32) {
    %c0_i32 = arith.constant 0 : i32
    %c0_i32_0 = arith.constant 0 : i32
    %c0_i32_1 = arith.constant 0 : i32
    return %c0_i32, %c0_i32_0 : i32, i32
  }
  func.func @transform_3(%arg0: i32) -> (i32, i32, i32) {
    %c0_i32 = arith.constant 0 : i32
    %c0_i32_0 = arith.constant 0 : i32
    %c0_i32_1 = arith.constant 0 : i32
    return %arg0, %c0_i32, %c0_i32_0 : i32, i32, i32
  }
}

</mosaic_0001>

<llo_original>
// kernel: mconv2_forward.1
$region0: #{mconv2_forward.1}
  #allocation0 [shape = 'u32[]', space=smem, size = 0x4, offset = 0x4, fixed_abs, tag = 'smem constant byte address 0x4 - core index']
  #allocation1 [shape = 'u32[144,128]{1,0:T(1,128)}', space=vmem, size = 0x12000, scoped, tag = 'internal scratch']
  #allocation2 [shape = 'bf16[20,20,16]{2,1,0:T(8,128)(2,1)}', space=vmem, size = 0x1e000, scoped, tag = 'scratch operand']
  #allocation3 [shape = 'bf16[256,384]{1,0:T(8,128)(2,1)}', space=vmem, size = 0x30000, scoped, tag = 'scratch operand']
  %s0 = inlined_call_operand.vmem [shape: bf16[2,16,16,16], index: 0, kind: input, shape index: {}]
  %s1 = inlined_call_operand.vmem [shape: bf16[16,384], index: 1, kind: input, shape index: {}]
  %s2 = inlined_call_operand.vmem [shape: f32[16,1], index: 2, kind: input, shape index: {}]
  %s3 = inlined_call_operand.vmem [shape: bf16[2,16,256], index: 3, kind: output, shape index: {}]
  %s4 = sld [smem:[#allocation0]]
  $region45: #{mconv2_forward.1} parent=0
    _
  %s6 = ssub.s32 1, %s4
  %s7 = scalar_select 0, %s6, %s4
  loop: start=0, step=1, limit=4
  $region2: #{mconv2_forward.1} parent=0 // loop_pre_header
    _
  $region3: #{mconv2_forward.1} parent=0 // loop_header
    %s9 = sphi 0, %s13
    %p10 = scmp.ge.s32.totalorder %s9, 4
    %s19 = sphi 0, %s21
    %s22 = sphi 0, %s19
    %s23 = sphi 0, %s22
    %s39 = sphi 0, %s23
    %s43 = sphi 0, %s43
    %s45 = sphi 0, %s43
    %s46 = sphi 0, %s45
    %s60 = sphi 0, %s46
    %s64 = sphi 0, %s64
    %s66 = sphi 0, %s64
    %s67 = sphi 0, %s66
    %s81 = sphi 0, %s67
    %s87 = sphi 0, %s89
    %s90 = sphi 0, %s87
    %s91 = sphi 0, %s90
    %s107 = sphi 0, %s91
  $region4: #{mconv2_forward.1} parent=0 // loop_header_branch
    %12 = sbr.rel (%p10) target = $region8
  $region5: #{mconv2_forward.1} parent=0 // loop_body
    %s14 = ssub.s32 %s9, 1
    %s15 = ssub.s32 %s9, 2
    %s16 = sadd.s32 %s9, 1
    %s17 = ssub.s32 %s9, %s16
    %p18 = scmp.eq.s32.totalorder %s17, 0
    %s20 = sadd.s32 %s19, 1
    %s21 = scalar_select %p18, %s19, %s20
    %p24 = pneg %p18
    %p25 = scmp.eq.s32.totalorder %s9, 1
    %p26 = por %p24, %p25
    %p27 = scmp.ne.s32.totalorder %s19, %s22
    %p28 = scmp.eq.s32.totalorder %s9, 0
    %p29 = por %p27, %p28
    %p30 = scmp.ne.s32.totalorder %s19, %s22
    %p31 = scmp.eq.s32.totalorder %s14, 1
    %p32 = por %p30, %p31
    %p33 = scmp.ne.s32.totalorder %s22, %s23
    %p34 = scmp.eq.s32.totalorder %s14, 0
    %p35 = por %p33, %p34
    %p36 = scmp.ne.s32.totalorder %s22, %s23
    %p37 = scmp.eq.s32.totalorder %s15, 1
    %p38 = por %p36, %p37
    %p40 = scmp.ne.s32.totalorder %s23, %s39
    %p41 = scmp.eq.s32.totalorder %s15, 0
    %p42 = por %p40, %p41
    %s44 = sadd.s32 %s43, 1
    %p47 = scmp.eq.s32.totalorder %s9, 1
    %p48 = scmp.ne.s32.totalorder %s43, %s45
    %p49 = scmp.eq.s32.totalorder %s9, 0
    %p50 = por %p48, %p49
    %p51 = scmp.ne.s32.totalorder %s43, %s45
    %p52 = scmp.eq.s32.totalorder %s14, 1
    %p53 = por %p51, %p52
    %p54 = scmp.ne.s32.totalorder %s45, %s46
    %p55 = scmp.eq.s32.totalorder %s14, 0
    %p56 = por %p54, %p55
    %p57 = scmp.ne.s32.totalorder %s45, %s46
    %p58 = scmp.eq.s32.totalorder %s15, 1
    %p59 = por %p57, %p58
    %p61 = scmp.ne.s32.totalorder %s46, %s60
    %p62 = scmp.eq.s32.totalorder %s15, 0
    %p63 = por %p61, %p62
    %s65 = sadd.s32 %s64, 1
    %p68 = scmp.eq.s32.totalorder %s9, 1
    %p69 = scmp.ne.s32.totalorder %s64, %s66
    %p70 = scmp.eq.s32.totalorder %s9, 0
    %p71 = por %p69, %p70
    %p72 = scmp.ne.s32.totalorder %s64, %s66
    %p73 = scmp.eq.s32.totalorder %s14, 1
    %p74 = por %p72, %p73
    %p75 = scmp.ne.s32.totalorder %s66, %s67
    %p76 = scmp.eq.s32.totalorder %s14, 0
    %p77 = por %p75, %p76
    %p78 = scmp.ne.s32.totalorder %s66, %s67
    %p79 = scmp.eq.s32.totalorder %s15, 1
    %p80 = por %p78, %p79
    %p82 = scmp.ne.s32.totalorder %s67, %s81
    %p83 = scmp.eq.s32.totalorder %s15, 0
    %p84 = por %p82, %p83
    %s85 = ssub.s32 %s9, %s16
    %p86 = scmp.eq.s32.totalorder %s85, 0
    %s88 = sadd.s32 %s87, 1
    %s89 = scalar_select %p86, %s87, %s88
    %p92 = pneg %p86
    %p93 = scmp.eq.s32.totalorder %s9, 1
    %p94 = por %p92, %p93
    %p95 = scmp.ne.s32.totalorder %s87, %s90
    %p96 = scmp.eq.s32.totalorder %s9, 0
    %p97 = por %p95, %p96
    %p98 = scmp.ne.s32.totalorder %s87, %s90
    %p99 = scmp.eq.s32.totalorder %s14, 1
    %p100 = por %p98, %p99
    %p101 = scmp.ne.s32.totalorder %s90, %s91
    %p102 = scmp.eq.s32.totalorder %s14, 0
    %p103 = por %p101, %p102
    %p104 = scmp.ne.s32.totalorder %s90, %s91
    %p105 = scmp.eq.s32.totalorder %s15, 1
    %p106 = por %p104, %p105
    %p108 = scmp.ne.s32.totalorder %s91, %s107
    %p109 = scmp.eq.s32.totalorder %s15, 0
    %p110 = por %p108, %p109
    %p111 = scmp.le.s32.totalorder 1, %s9
    %p112 = scmp.lt.s32.totalorder %s9, 3
    %p113 = pnand %p111, %p112
    %p114 = pneg %p113
    // Predicated region
    $region9: #{mconv2_forward.1} parent=5 // pred_check
      _
    $region10: #{mconv2_forward.1} parent=5 // pred_check_branch
      %116 = sbr.rel (%p113) target = $region12
    $region11: #{mconv2_forward.1} parent=5 // pred_region
      %s117 = ssub.s32 %s9, 1
      // Predicated region
      $region13: #{mconv2_forward.1} parent=11 // pred_check
        %p118 = pneg %p56
      $region14: #{mconv2_forward.1} parent=11 // pred_check_branch
        %120 = sbr.rel (%p118) target = $region16
      $region15: #{mconv2_forward.1} parent=11 // pred_region
        _
      $region16: #{mconv2_forward.1} parent=11 // pred_fallthru
        _
      // Predicated region
      $region17: #{mconv2_forward.1} parent=11 // pred_check
        %p121 = pneg %p77
      $region18: #{mconv2_forward.1} parent=11 // pred_check_branch
        %123 = sbr.rel (%p121) target = $region20
      $region19: #{mconv2_forward.1} parent=11 // pred_region
        _
      $region20: #{mconv2_forward.1} parent=11 // pred_fallthru
        _
    $region12: #{mconv2_forward.1} parent=5 // pred_fallthru
      _
    %p124 = scmp.lt.s32.totalorder %s9, 2
    // Predicated region
    $region21: #{mconv2_forward.1} parent=5 // pred_check
      %p125 = pneg %p124
    $region22: #{mconv2_forward.1} parent=5 // pred_check_branch
      %127 = sbr.rel (%p125) target = $region24
    $region23: #{mconv2_forward.1} parent=5 // pred_region
      // Predicated region
      $region25: #{mconv2_forward.1} parent=23 // pred_check
        %p128 = pneg %p29
      $region26: #{mconv2_forward.1} parent=23 // pred_check_branch
        %130 = sbr.rel (%p128) target = $region28
      $region27: #{mconv2_forward.1} parent=23 // pred_region
        %p131 = scmp.lt.s32.totalorder %s9, 1
        %s132 = scalar_select %p131, %s9, 1
        %s133 = smul.addr %s132, 32
        %s134 = smul.addr %s133, 4
        %s135 = scalar_lea.vmem %s0, %s134
      $region28: #{mconv2_forward.1} parent=23 // pred_fallthru
        _
    $region24: #{mconv2_forward.1} parent=5 // pred_fallthru
      _
    %p136 = scmp.le.s32.totalorder 1, %s9
    %p137 = scmp.lt.s32.totalorder %s9, 3
    %p138 = pnand %p136, %p137
    %p139 = pneg %p138
    // Predicated region
    $region29: #{mconv2_forward.1} parent=5 // pred_check
      _
    $region30: #{mconv2_forward.1} parent=5 // pred_check_branch
      %141 = sbr.rel (%p138) target = $region32
    $region31: #{mconv2_forward.1} parent=5 // pred_region
      %s142 = ssub.s32 %s9, 1
      %p143 = scmp.lt.s32.totalorder %s14, 1
      %s144 = scalar_select %p143, %s14, 1
      %s145 = smul.addr %s144, 32
      %s146 = smul.addr %s145, 4
      %s147 = scalar_lea.vmem %s0, %s146
      %p148 = pneg %p35
      %p149 = pneg %p32
      %p150 = pneg %p56
      %p151 = pneg %p53
      %p152 = pneg %p77
      %p153 = pneg %p74
      %p154 = pneg %p103
      %p155 = pneg %p100
      %p156 = scmp.lt.s32.totalorder %s14, 1
      %s157 = scalar_select %p156, %s14, 1
      %s158 = smul.addr %s157, 4
      %s159 = smul.addr %s158, 4
      %s160 = scalar_lea.vmem %s3, %s159
      %p161 = scmp.lt.s32.totalorder %s14, 1
      %s162 = scalar_select %p161, %s14, 1
      %s163 = smul.addr %s162, 32
      %s164 = smul.addr %s163, 4
      %s165 = scalar_lea.vmem %s0, %s164
      %p166 = scmp.lt.s32.totalorder %s14, 1
      %s167 = scalar_select %p166, %s14, 1
      %s168 = smul.addr %s167, 4
      %s169 = smul.addr %s168, 4
      %s170 = scalar_lea.vmem %s3, %s169
      %vm172 = vcmask 125952
      %173 = vst.msk [vmem:[#allocation2] sm:$0xf] %vm172, 0
      %174 = vst.msk [vmem:[#allocation2 + $0x4] sm:$0xf] %vm172, 0
      %vm175 = vcmask 123904
      %176 = vst.msk [vmem:[#allocation2 + $0x8] sm:$0x3] %vm175, 0
      %177 = vst.msk [vmem:[#allocation2 + $0xc] sm:$0xf] %vm172, 0
      %178 = vst.msk [vmem:[#allocation2 + $0x10] sm:$0xf] %vm172, 0
      %179 = vst.msk [vmem:[#allocation2 + $0x14] sm:$0x3] %vm175, 0
      %s180 = scalar_lea.vmem [#allocation2], 216
      %181 = vst.msk [vmem:[%s180] sm:$0xf] %vm172, 0
      %182 = vst.msk [vmem:[%s180 + $0x4] sm:$0xf] %vm172, 0
      %183 = vst.msk [vmem:[%s180 + $0x8] sm:$0x3] %vm175, 0
      %184 = vst.msk [vmem:[%s180 + $0xc] sm:$0xf] %vm172, 0
      %185 = vst.msk [vmem:[%s180 + $0x10] sm:$0xf] %vm172, 0
      %186 = vst.msk [vmem:[%s180 + $0x14] sm:$0x3] %vm175, 0
      %s187 = scalar_lea.vmem [#allocation2], 24
      %vm188 = vcmask 122880
      %189 = vst.msk [vmem:[%s187] sm:$0x1] %vm188, 0
      %190 = vst.msk [vmem:[%s187 + $0xc] sm:$0x1] %vm188, 0
      %191 = vst.msk [vmem:[%s187 + $0x18] sm:$0x1] %vm188, 0
      %192 = vst.msk [vmem:[%s187 + $0x24] sm:$0x1] %vm188, 0
      %193 = vst.msk [vmem:[%s187 + $0x30] sm:$0x1] %vm188, 0
      %194 = vst.msk [vmem:[%s187 + $0x3c] sm:$0x1] %vm188, 0
      %195 = vst.msk [vmem:[%s187 + $0x48] sm:$0x1] %vm188, 0
      %196 = vst.msk [vmem:[%s187 + $0x54] sm:$0x1] %vm188, 0
      %197 = vst.msk [vmem:[%s187 + $0x60] sm:$0x1] %vm188, 0
      %198 = vst.msk [vmem:[%s187 + $0x6c] sm:$0x1] %vm188, 0
      %199 = vst.msk [vmem:[%s187 + $0x78] sm:$0x1] %vm188, 0
      %200 = vst.msk [vmem:[%s187 + $0x84] sm:$0x1] %vm188, 0
      %201 = vst.msk [vmem:[%s187 + $0x90] sm:$0x1] %vm188, 0
      %202 = vst.msk [vmem:[%s187 + $0x9c] sm:$0x1] %vm188, 0
      %203 = vst.msk [vmem:[%s187 + $0xa8] sm:$0x1] %vm188, 0
      %204 = vst.msk [vmem:[%s187 + $0xb4] sm:$0x1] %vm188, 0
      %vm205 = vcmask 123905
      %206 = vst.msk [vmem:[%s187 + $0x8] sm:$0x2] %vm205, 0
      %207 = vst.msk [vmem:[%s187 + $0x14] sm:$0x2] %vm205, 0
      %208 = vst.msk [vmem:[%s187 + $0x20] sm:$0x2] %vm205, 0
      %209 = vst.msk [vmem:[%s187 + $0x2c] sm:$0x2] %vm205, 0
      %210 = vst.msk [vmem:[%s187 + $0x38] sm:$0x2] %vm205, 0
      %211 = vst.msk [vmem:[%s187 + $0x44] sm:$0x2] %vm205, 0
      %212 = vst.msk [vmem:[%s187 + $0x50] sm:$0x2] %vm205, 0
      %213 = vst.msk [vmem:[%s187 + $0x5c] sm:$0x2] %vm205, 0
      %214 = vst.msk [vmem:[%s187 + $0x68] sm:$0x2] %vm205, 0
      %215 = vst.msk [vmem:[%s187 + $0x74] sm:$0x2] %vm205, 0
      %216 = vst.msk [vmem:[%s187 + $0x80] sm:$0x2] %vm205, 0
      %217 = vst.msk [vmem:[%s187 + $0x8c] sm:$0x2] %vm205, 0
      %218 = vst.msk [vmem:[%s187 + $0x98] sm:$0x2] %vm205, 0
      %219 = vst.msk [vmem:[%s187 + $0xa4] sm:$0x2] %vm205, 0
      %220 = vst.msk [vmem:[%s187 + $0xb0] sm:$0x2] %vm205, 0
      %221 = vst.msk [vmem:[%s187 + $0xbc] sm:$0x2] %vm205, 0
      %v222 = vld [vmem:[%s165] sm:$0xf]
      %v223 = vld [vmem:[%s165 + $0x4] sm:$0xf]
      %v224 = vld [vmem:[%s165 + $0x8] sm:$0xf]
      %v225 = vld [vmem:[%s165 + $0xc] sm:$0xf]
      %v226 = vld [vmem:[%s165 + $0x10] sm:$0xf]
      %v227 = vld [vmem:[%s165 + $0x14] sm:$0xf]
      %v228 = vld [vmem:[%s165 + $0x18] sm:$0xf]
      %v229 = vld [vmem:[%s165 + $0x1c] sm:$0xf]
      %v230 = vld [vmem:[%s165 + $0x20] sm:$0xf]
      %v231 = vld [vmem:[%s165 + $0x24] sm:$0xf]
      %v232 = vld [vmem:[%s165 + $0x28] sm:$0xf]
      %v233 = vld [vmem:[%s165 + $0x2c] sm:$0xf]
      %v234 = vld [vmem:[%s165 + $0x30] sm:$0xf]
      %v235 = vld [vmem:[%s165 + $0x34] sm:$0xf]
      %v236 = vld [vmem:[%s165 + $0x38] sm:$0xf]
      %v237 = vld [vmem:[%s165 + $0x3c] sm:$0xf]
      %v238 = vld [vmem:[%s165 + $0x40] sm:$0xf]
      %v239 = vld [vmem:[%s165 + $0x44] sm:$0xf]
      %v240 = vld [vmem:[%s165 + $0x48] sm:$0xf]
      %v241 = vld [vmem:[%s165 + $0x4c] sm:$0xf]
      %v242 = vld [vmem:[%s165 + $0x50] sm:$0xf]
      %v243 = vld [vmem:[%s165 + $0x54] sm:$0xf]
      %v244 = vld [vmem:[%s165 + $0x58] sm:$0xf]
      %v245 = vld [vmem:[%s165 + $0x5c] sm:$0xf]
      %v246 = vld [vmem:[%s165 + $0x60] sm:$0xf]
      %v247 = vld [vmem:[%s165 + $0x64] sm:$0xf]
      %v248 = vld [vmem:[%s165 + $0x68] sm:$0xf]
      %v249 = vld [vmem:[%s165 + $0x6c] sm:$0xf]
      %v250 = vld [vmem:[%s165 + $0x70] sm:$0xf]
      %v251 = vld [vmem:[%s165 + $0x74] sm:$0xf]
      %v252 = vld [vmem:[%s165 + $0x78] sm:$0xf]
      %v253 = vld [vmem:[%s165 + $0x7c] sm:$0xf]
      %vm286 = vcmask 1040384
      %vm287 = vcmask 1044484
      %vm288 = vmor %vm286, %vm287
      %v289 = vrot.slane %v222, 7
      %v290 = vrot.slane %v289, 4
      %v291 = vrot.slane %v223, 7
      %v292 = vsel %vm288, %v290, %v291
      %v293 = vrot.slane %v291, 4
      %v294 = vrot.slane %v224, 7
      %v295 = vrot.slane %v294, 4
      %v296 = vrot.slane %v225, 7
      %v297 = vsel %vm288, %v295, %v296
      %v298 = vrot.slane %v296, 4
      %v299 = vrot.slane %v226, 7
      %v300 = vrot.slane %v299, 4
      %v301 = vrot.slane %v227, 7
      %v302 = vsel %vm288, %v300, %v301
      %v303 = vrot.slane %v301, 4
      %v304 = vrot.slane %v228, 7
      %v305 = vrot.slane %v304, 4
      %v306 = vrot.slane %v229, 7
      %v307 = vsel %vm288, %v305, %v306
      %v308 = vrot.slane %v306, 4
      %v309 = vrot.slane %v230, 7
      %v310 = vrot.slane %v309, 4
      %v311 = vrot.slane %v231, 7
      %v312 = vsel %vm288, %v310, %v311
      %v313 = vrot.slane %v311, 4
      %v314 = vrot.slane %v232, 7
      %v315 = vrot.slane %v314, 4
      %v316 = vrot.slane %v233, 7
      %v317 = vsel %vm288, %v315, %v316
      %v318 = vrot.slane %v316, 4
      %v319 = vrot.slane %v234, 7
      %v320 = vrot.slane %v319, 4
      %v321 = vrot.slane %v235, 7
      %v322 = vsel %vm288, %v320, %v321
      %v323 = vrot.slane %v321, 4
      %v324 = vrot.slane %v236, 7
      %v325 = vrot.slane %v324, 4
      %v326 = vrot.slane %v237, 7
      %v327 = vsel %vm288, %v325, %v326
      %v328 = vrot.slane %v326, 4
      %v329 = vrot.slane %v238, 7
      %v330 = vrot.slane %v329, 4
      %v331 = vrot.slane %v239, 7
      %v332 = vsel %vm288, %v330, %v331
      %v333 = vrot.slane %v331, 4
      %v334 = vrot.slane %v240, 7
      %v335 = vrot.slane %v334, 4
      %v336 = vrot.slane %v241, 7
      %v337 = vsel %vm288, %v335, %v336
      %v338 = vrot.slane %v336, 4
      %v339 = vrot.slane %v242, 7
      %v340 = vrot.slane %v339, 4
      %v341 = vrot.slane %v243, 7
      %v342 = vsel %vm288, %v340, %v341
      %v343 = vrot.slane %v341, 4
      %v344 = vrot.slane %v244, 7
      %v345 = vrot.slane %v344, 4
      %v346 = vrot.slane %v245, 7
      %v347 = vsel %vm288, %v345, %v346
      %v348 = vrot.slane %v346, 4
      %v349 = vrot.slane %v246, 7
      %v350 = vrot.slane %v349, 4
      %v351 = vrot.slane %v247, 7
      %v352 = vsel %vm288, %v350, %v351
      %v353 = vrot.slane %v351, 4
      %v354 = vrot.slane %v248, 7
      %v355 = vrot.slane %v354, 4
      %v356 = vrot.slane %v249, 7
      %v357 = vsel %vm288, %v355, %v356
      %v358 = vrot.slane %v356, 4
      %v359 = vrot.slane %v250, 7
      %v360 = vrot.slane %v359, 4
      %v361 = vrot.slane %v251, 7
      %v362 = vsel %vm288, %v360, %v361
      %v363 = vrot.slane %v361, 4
      %v364 = vrot.slane %v252, 7
      %v365 = vrot.slane %v364, 4
      %v366 = vrot.slane %v253, 7
      %v367 = vsel %vm288, %v365, %v366
      %v368 = vrot.slane %v366, 4
      %vm417 = vcmask 125953
      %418 = vst.msk [vmem:[%s187] sm:$0xe] %vm417, %v289
      %419 = vst.msk [vmem:[%s187 + $0x4] sm:$0xf] %vm172, %v292
      %420 = vst.msk [vmem:[%s187 + $0x8] sm:$0x1] %vm188, %v293
      %421 = vst.msk [vmem:[%s187 + $0xc] sm:$0xe] %vm417, %v294
      %422 = vst.msk [vmem:[%s187 + $0x10] sm:$0xf] %vm172, %v297
      %423 = vst.msk [vmem:[%s187 + $0x14] sm:$0x1] %vm188, %v298
      %424 = vst.msk [vmem:[%s187 + $0x18] sm:$0xe] %vm417, %v299
      %425 = vst.msk [vmem:[%s187 + $0x1c] sm:$0xf] %vm172, %v302
      %426 = vst.msk [vmem:[%s187 + $0x20] sm:$0x1] %vm188, %v303
      %427 = vst.msk [vmem:[%s187 + $0x24] sm:$0xe] %vm417, %v304
      %428 = vst.msk [vmem:[%s187 + $0x28] sm:$0xf] %vm172, %v307
      %429 = vst.msk [vmem:[%s187 + $0x2c] sm:$0x1] %vm188, %v308
      %430 = vst.msk [vmem:[%s187 + $0x30] sm:$0xe] %vm417, %v309
      %431 = vst.msk [vmem:[%s187 + $0x34] sm:$0xf] %vm172, %v312
      %432 = vst.msk [vmem:[%s187 + $0x38] sm:$0x1] %vm188, %v313
      %433 = vst.msk [vmem:[%s187 + $0x3c] sm:$0xe] %vm417, %v314
      %434 = vst.msk [vmem:[%s187 + $0x40] sm:$0xf] %vm172, %v317
      %435 = vst.msk [vmem:[%s187 + $0x44] sm:$0x1] %vm188, %v318
      %436 = vst.msk [vmem:[%s187 + $0x48] sm:$0xe] %vm417, %v319
      %437 = vst.msk [vmem:[%s187 + $0x4c] sm:$0xf] %vm172, %v322
      %438 = vst.msk [vmem:[%s187 + $0x50] sm:$0x1] %vm188, %v323
      %439 = vst.msk [vmem:[%s187 + $0x54] sm:$0xe] %vm417, %v324
      %440 = vst.msk [vmem:[%s187 + $0x58] sm:$0xf] %vm172, %v327
      %441 = vst.msk [vmem:[%s187 + $0x5c] sm:$0x1] %vm188, %v328
      %442 = vst.msk [vmem:[%s187 + $0x60] sm:$0xe] %vm417, %v329
      %443 = vst.msk [vmem:[%s187 + $0x64] sm:$0xf] %vm172, %v332
      %444 = vst.msk [vmem:[%s187 + $0x68] sm:$0x1] %vm188, %v333
      %445 = vst.msk [vmem:[%s187 + $0x6c] sm:$0xe] %vm417, %v334
      %446 = vst.msk [vmem:[%s187 + $0x70] sm:$0xf] %vm172, %v337
      %447 = vst.msk [vmem:[%s187 + $0x74] sm:$0x1] %vm188, %v338
      %448 = vst.msk [vmem:[%s187 + $0x78] sm:$0xe] %vm417, %v339
      %449 = vst.msk [vmem:[%s187 + $0x7c] sm:$0xf] %vm172, %v342
      %450 = vst.msk [vmem:[%s187 + $0x80] sm:$0x1] %vm188, %v343
      %451 = vst.msk [vmem:[%s187 + $0x84] sm:$0xe] %vm417, %v344
      %452 = vst.msk [vmem:[%s187 + $0x88] sm:$0xf] %vm172, %v347
      %453 = vst.msk [vmem:[%s187 + $0x8c] sm:$0x1] %vm188, %v348
      %454 = vst.msk [vmem:[%s187 + $0x90] sm:$0xe] %vm417, %v349
      %455 = vst.msk [vmem:[%s187 + $0x94] sm:$0xf] %vm172, %v352
      %456 = vst.msk [vmem:[%s187 + $0x98] sm:$0x1] %vm188, %v353
      %457 = vst.msk [vmem:[%s187 + $0x9c] sm:$0xe] %vm417, %v354
      %458 = vst.msk [vmem:[%s187 + $0xa0] sm:$0xf] %vm172, %v357
      %459 = vst.msk [vmem:[%s187 + $0xa4] sm:$0x1] %vm188, %v358
      %460 = vst.msk [vmem:[%s187 + $0xa8] sm:$0xe] %vm417, %v359
      %461 = vst.msk [vmem:[%s187 + $0xac] sm:$0xf] %vm172, %v362
      %462 = vst.msk [vmem:[%s187 + $0xb0] sm:$0x1] %vm188, %v363
      %463 = vst.msk [vmem:[%s187 + $0xb4] sm:$0xe] %vm417, %v364
      %464 = vst.msk [vmem:[%s187 + $0xb8] sm:$0xf] %vm172, %v367
      %465 = vst.msk [vmem:[%s187 + $0xbc] sm:$0x1] %vm188, %v368
      %s466 = scalar_lea.vmem [#allocation2], 12
      %v467 = vld [vmem:[%s466] sm:$0xf]
      %v468 = vld [vmem:[%s466 + $0x4] sm:$0xf]
      %v469 = vld [vmem:[%s466 + $0x8] sm:$0x1]
      %v470 = vld [vmem:[%s466 + $0xc] sm:$0xf]
      %v471 = vld [vmem:[%s466 + $0x10] sm:$0xf]
      %v472 = vld [vmem:[%s466 + $0x14] sm:$0x1]
      %v473 = vld [vmem:[%s466 + $0x18] sm:$0xf]
      %v474 = vld [vmem:[%s466 + $0x1c] sm:$0xf]
      %v475 = vld [vmem:[%s466 + $0x20] sm:$0x1]
      %v476 = vld [vmem:[%s466 + $0x24] sm:$0xf]
      %v477 = vld [vmem:[%s466 + $0x28] sm:$0xf]
      %v478 = vld [vmem:[%s466 + $0x2c] sm:$0x1]
      %v479 = vld [vmem:[%s466 + $0x30] sm:$0xf]
      %v480 = vld [vmem:[%s466 + $0x34] sm:$0xf]
      %v481 = vld [vmem:[%s466 + $0x38] sm:$0x1]
      %v482 = vld [vmem:[%s466 + $0x3c] sm:$0xf]
      %v483 = vld [vmem:[%s466 + $0x40] sm:$0xf]
      %v484 = vld [vmem:[%s466 + $0x44] sm:$0x1]
      %v485 = vld [vmem:[%s466 + $0x48] sm:$0xf]
      %v486 = vld [vmem:[%s466 + $0x4c] sm:$0xf]
      %v487 = vld [vmem:[%s466 + $0x50] sm:$0x1]
      %v488 = vld [vmem:[%s466 + $0x54] sm:$0xf]
      %v489 = vld [vmem:[%s466 + $0x58] sm:$0xf]
      %v490 = vld [vmem:[%s466 + $0x5c] sm:$0x1]
      %v491 = vld [vmem:[%s466 + $0x60] sm:$0xf]
      %v492 = vld [vmem:[%s466 + $0x64] sm:$0xf]
      %v493 = vld [vmem:[%s466 + $0x68] sm:$0x1]
      %v494 = vld [vmem:[%s466 + $0x6c] sm:$0xf]
      %v495 = vld [vmem:[%s466 + $0x70] sm:$0xf]
      %v496 = vld [vmem:[%s466 + $0x74] sm:$0x1]
      %v497 = vld [vmem:[%s466 + $0x78] sm:$0xf]
      %v498 = vld [vmem:[%s466 + $0x7c] sm:$0xf]
      %v499 = vld [vmem:[%s466 + $0x80] sm:$0x1]
      %v500 = vld [vmem:[%s466 + $0x84] sm:$0xf]
      %v501 = vld [vmem:[%s466 + $0x88] sm:$0xf]
      %v502 = vld [vmem:[%s466 + $0x8c] sm:$0x1]
      %v503 = vld [vmem:[%s466 + $0x90] sm:$0xf]
      %v504 = vld [vmem:[%s466 + $0x94] sm:$0xf]
      %v505 = vld [vmem:[%s466 + $0x98] sm:$0x1]
      %v506 = vld [vmem:[%s466 + $0x9c] sm:$0xf]
      %v507 = vld [vmem:[%s466 + $0xa0] sm:$0xf]
      %v508 = vld [vmem:[%s466 + $0xa4] sm:$0x1]
      %v509 = vld [vmem:[%s466 + $0xa8] sm:$0xf]
      %v510 = vld [vmem:[%s466 + $0xac] sm:$0xf]
      %v511 = vld [vmem:[%s466 + $0xb0] sm:$0x1]
      %v512 = vld [vmem:[%s466 + $0xb4] sm:$0xf]
      %v513 = vld [vmem:[%s466 + $0xb8] sm:$0xf]
      %v514 = vld [vmem:[%s466 + $0xbc] sm:$0x1]
      %v515 = vld [vmem:[%s466] sm:$0xe]
      %v516 = vld [vmem:[%s466 + $0xc] sm:$0xe]
      %v517 = vld [vmem:[%s466 + $0x18] sm:$0xe]
      %v518 = vld [vmem:[%s466 + $0x24] sm:$0xe]
      %v519 = vld [vmem:[%s466 + $0x30] sm:$0xe]
      %v520 = vld [vmem:[%s466 + $0x3c] sm:$0xe]
      %v521 = vld [vmem:[%s466 + $0x48] sm:$0xe]
      %v522 = vld [vmem:[%s466 + $0x54] sm:$0xe]
      %v523 = vld [vmem:[%s466 + $0x60] sm:$0xe]
      %v524 = vld [vmem:[%s466 + $0x6c] sm:$0xe]
      %v525 = vld [vmem:[%s466 + $0x78] sm:$0xe]
      %v526 = vld [vmem:[%s466 + $0x84] sm:$0xe]
      %v527 = vld [vmem:[%s466 + $0x90] sm:$0xe]
      %v528 = vld [vmem:[%s466 + $0x9c] sm:$0xe]
      %v529 = vld [vmem:[%s466 + $0xa8] sm:$0xe]
      %v530 = vld [vmem:[%s466 + $0xb4] sm:$0xe]
      %v531 = vld [vmem:[%s466 + $0x8] sm:$0x3]
      %v532 = vld [vmem:[%s466 + $0x14] sm:$0x3]
      %v533 = vld [vmem:[%s466 + $0x20] sm:$0x3]
      %v534 = vld [vmem:[%s466 + $0x2c] sm:$0x3]
      %v535 = vld [vmem:[%s466 + $0x38] sm:$0x3]
      %v536 = vld [vmem:[%s466 + $0x44] sm:$0x3]
      %v537 = vld [vmem:[%s466 + $0x50] sm:$0x3]
      %v538 = vld [vmem:[%s466 + $0x5c] sm:$0x3]
      %v539 = vld [vmem:[%s466 + $0x68] sm:$0x3]
      %v540 = vld [vmem:[%s466 + $0x74] sm:$0x3]
      %v541 = vld [vmem:[%s466 + $0x80] sm:$0x3]
      %v542 = vld [vmem:[%s466 + $0x8c] sm:$0x3]
      %v543 = vld [vmem:[%s466 + $0x98] sm:$0x3]
      %v544 = vld [vmem:[%s466 + $0xa4] sm:$0x3]
      %v545 = vld [vmem:[%s466 + $0xb0] sm:$0x3]
      %v546 = vld [vmem:[%s466 + $0xbc] sm:$0x3]
      %v547 = vld [vmem:[%s187] sm:$0xf]
      %v548 = vld [vmem:[%s187 + $0x4] sm:$0xf]
      %v549 = vld [vmem:[%s187 + $0x8] sm:$0x1]
      %v550 = vld [vmem:[%s187 + $0xc] sm:$0xf]
      %v551 = vld [vmem:[%s187 + $0x10] sm:$0xf]
      %v552 = vld [vmem:[%s187 + $0x14] sm:$0x1]
      %v553 = vld [vmem:[%s187 + $0x18] sm:$0xf]
      %v554 = vld [vmem:[%s187 + $0x1c] sm:$0xf]
      %v555 = vld [vmem:[%s187 + $0x20] sm:$0x1]
      %v556 = vld [vmem:[%s187 + $0x24] sm:$0xf]
      %v557 = vld [vmem:[%s187 + $0x28] sm:$0xf]
      %v558 = vld [vmem:[%s187 + $0x2c] sm:$0x1]
      %v559 = vld [vmem:[%s187 + $0x30] sm:$0xf]
      %v560 = vld [vmem:[%s187 + $0x34] sm:$0xf]
      %v561 = vld [vmem:[%s187 + $0x38] sm:$0x1]
      %v562 = vld [vmem:[%s187 + $0x3c] sm:$0xf]
      %v563 = vld [vmem:[%s187 + $0x40] sm:$0xf]
      %v564 = vld [vmem:[%s187 + $0x44] sm:$0x1]
      %v565 = vld [vmem:[%s187 + $0x48] sm:$0xf]
      %v566 = vld [vmem:[%s187 + $0x4c] sm:$0xf]
      %v567 = vld [vmem:[%s187 + $0x50] sm:$0x1]
      %v568 = vld [vmem:[%s187 + $0x54] sm:$0xf]
      %v569 = vld [vmem:[%s187 + $0x58] sm:$0xf]
      %v570 = vld [vmem:[%s187 + $0x5c] sm:$0x1]
      %v571 = vld [vmem:[%s187 + $0x60] sm:$0xf]
      %v572 = vld [vmem:[%s187 + $0x64] sm:$0xf]
      %v573 = vld [vmem:[%s187 + $0x68] sm:$0x1]
      %v574 = vld [vmem:[%s187 + $0x6c] sm:$0xf]
      %v575 = vld [vmem:[%s187 + $0x70] sm:$0xf]
      %v576 = vld [vmem:[%s187 + $0x74] sm:$0x1]
      %v577 = vld [vmem:[%s187 + $0x78] sm:$0xf]
      %v578 = vld [vmem:[%s187 + $0x7c] sm:$0xf]
      %v579 = vld [vmem:[%s187 + $0x80] sm:$0x1]
      %v580 = vld [vmem:[%s187 + $0x84] sm:$0xf]
      %v581 = vld [vmem:[%s187 + $0x88] sm:$0xf]
      %v582 = vld [vmem:[%s187 + $0x8c] sm:$0x1]
      %v583 = vld [vmem:[%s187 + $0x90] sm:$0xf]
      %v584 = vld [vmem:[%s187 + $0x94] sm:$0xf]
      %v585 = vld [vmem:[%s187 + $0x98] sm:$0x1]
      %v586 = vld [vmem:[%s187 + $0x9c] sm:$0xf]
      %v587 = vld [vmem:[%s187 + $0xa0] sm:$0xf]
      %v588 = vld [vmem:[%s187 + $0xa4] sm:$0x1]
      %v589 = vld [vmem:[%s187 + $0xa8] sm:$0xf]
      %v590 = vld [vmem:[%s187 + $0xac] sm:$0xf]
      %v591 = vld [vmem:[%s187 + $0xb0] sm:$0x1]
      %v592 = vld [vmem:[%s187 + $0xb4] sm:$0xf]
      %v593 = vld [vmem:[%s187 + $0xb8] sm:$0xf]
      %v594 = vld [vmem:[%s187 + $0xbc] sm:$0x1]
      %v595 = vld [vmem:[%s187] sm:$0xe]
      %v596 = vld [vmem:[%s187 + $0xc] sm:$0xe]
      %v597 = vld [vmem:[%s187 + $0x18] sm:$0xe]
      %v598 = vld [vmem:[%s187 + $0x24] sm:$0xe]
      %v599 = vld [vmem:[%s187 + $0x30] sm:$0xe]
      %v600 = vld [vmem:[%s187 + $0x3c] sm:$0xe]
      %v601 = vld [vmem:[%s187 + $0x48] sm:$0xe]
      %v602 = vld [vmem:[%s187 + $0x54] sm:$0xe]
      %v603 = vld [vmem:[%s187 + $0x60] sm:$0xe]
      %v604 = vld [vmem:[%s187 + $0x6c] sm:$0xe]
      %v605 = vld [vmem:[%s187 + $0x78] sm:$0xe]
      %v606 = vld [vmem:[%s187 + $0x84] sm:$0xe]
      %v607 = vld [vmem:[%s187 + $0x90] sm:$0xe]
      %v608 = vld [vmem:[%s187 + $0x9c] sm:$0xe]
      %v609 = vld [vmem:[%s187 + $0xa8] sm:$0xe]
      %v610 = vld [vmem:[%s187 + $0xb4] sm:$0xe]
      %v611 = vld [vmem:[%s187 + $0x8] sm:$0x3]
      %v612 = vld [vmem:[%s187 + $0x14] sm:$0x3]
      %v613 = vld [vmem:[%s187 + $0x20] sm:$0x3]
      %v614 = vld [vmem:[%s187 + $0x2c] sm:$0x3]
      %v615 = vld [vmem:[%s187 + $0x38] sm:$0x3]
      %v616 = vld [vmem:[%s187 + $0x44] sm:$0x3]
      %v617 = vld [vmem:[%s187 + $0x50] sm:$0x3]
      %v618 = vld [vmem:[%s187 + $0x5c] sm:$0x3]
      %v619 = vld [vmem:[%s187 + $0x68] sm:$0x3]
      %v620 = vld [vmem:[%s187 + $0x74] sm:$0x3]
      %v621 = vld [vmem:[%s187 + $0x80] sm:$0x3]
      %v622 = vld [vmem:[%s187 + $0x8c] sm:$0x3]
      %v623 = vld [vmem:[%s187 + $0x98] sm:$0x3]
      %v624 = vld [vmem:[%s187 + $0xa4] sm:$0x3]
      %v625 = vld [vmem:[%s187 + $0xb0] sm:$0x3]
      %v626 = vld [vmem:[%s187 + $0xbc] sm:$0x3]
      %s627 = scalar_lea.vmem [#allocation2], 36
      %v628 = vld [vmem:[%s627] sm:$0xf]
      %v629 = vld [vmem:[%s627 + $0x4] sm:$0xf]
      %v630 = vld [vmem:[%s627 + $0x8] sm:$0x1]
      %v631 = vld [vmem:[%s627 + $0xc] sm:$0xf]
      %v632 = vld [vmem:[%s627 + $0x10] sm:$0xf]
      %v633 = vld [vmem:[%s627 + $0x14] sm:$0x1]
      %v634 = vld [vmem:[%s627 + $0x18] sm:$0xf]
      %v635 = vld [vmem:[%s627 + $0x1c] sm:$0xf]
      %v636 = vld [vmem:[%s627 + $0x20] sm:$0x1]
      %v637 = vld [vmem:[%s627 + $0x24] sm:$0xf]
      %v638 = vld [vmem:[%s627 + $0x28] sm:$0xf]
      %v639 = vld [vmem:[%s627 + $0x2c] sm:$0x1]
      %v640 = vld [vmem:[%s627 + $0x30] sm:$0xf]
      %v641 = vld [vmem:[%s627 + $0x34] sm:$0xf]
      %v642 = vld [vmem:[%s627 + $0x38] sm:$0x1]
      %v643 = vld [vmem:[%s627 + $0x3c] sm:$0xf]
      %v644 = vld [vmem:[%s627 + $0x40] sm:$0xf]
      %v645 = vld [vmem:[%s627 + $0x44] sm:$0x1]
      %v646 = vld [vmem:[%s627 + $0x48] sm:$0xf]
      %v647 = vld [vmem:[%s627 + $0x4c] sm:$0xf]
      %v648 = vld [vmem:[%s627 + $0x50] sm:$0x1]
      %v649 = vld [vmem:[%s627 + $0x54] sm:$0xf]
      %v650 = vld [vmem:[%s627 + $0x58] sm:$0xf]
      %v651 = vld [vmem:[%s627 + $0x5c] sm:$0x1]
      %v652 = vld [vmem:[%s627 + $0x60] sm:$0xf]
      %v653 = vld [vmem:[%s627 + $0x64] sm:$0xf]
      %v654 = vld [vmem:[%s627 + $0x68] sm:$0x1]
      %v655 = vld [vmem:[%s627 + $0x6c] sm:$0xf]
      %v656 = vld [vmem:[%s627 + $0x70] sm:$0xf]
      %v657 = vld [vmem:[%s627 + $0x74] sm:$0x1]
      %v658 = vld [vmem:[%s627 + $0x78] sm:$0xf]
      %v659 = vld [vmem:[%s627 + $0x7c] sm:$0xf]
      %v660 = vld [vmem:[%s627 + $0x80] sm:$0x1]
      %v661 = vld [vmem:[%s627 + $0x84] sm:$0xf]
      %v662 = vld [vmem:[%s627 + $0x88] sm:$0xf]
      %v663 = vld [vmem:[%s627 + $0x8c] sm:$0x1]
      %v664 = vld [vmem:[%s627 + $0x90] sm:$0xf]
      %v665 = vld [vmem:[%s627 + $0x94] sm:$0xf]
      %v666 = vld [vmem:[%s627 + $0x98] sm:$0x1]
      %v667 = vld [vmem:[%s627 + $0x9c] sm:$0xf]
      %v668 = vld [vmem:[%s627 + $0xa0] sm:$0xf]
      %v669 = vld [vmem:[%s627 + $0xa4] sm:$0x1]
      %v670 = vld [vmem:[%s627 + $0xa8] sm:$0xf]
      %v671 = vld [vmem:[%s627 + $0xac] sm:$0xf]
      %v672 = vld [vmem:[%s627 + $0xb0] sm:$0x1]
      %v673 = vld [vmem:[%s627 + $0xb4] sm:$0xf]
      %v674 = vld [vmem:[%s627 + $0xb8] sm:$0xf]
      %v675 = vld [vmem:[%s627 + $0xbc] sm:$0x1]
      %v676 = vld [vmem:[%s627] sm:$0xe]
      %v677 = vld [vmem:[%s627 + $0xc] sm:$0xe]
      %v678 = vld [vmem:[%s627 + $0x18] sm:$0xe]
      %v679 = vld [vmem:[%s627 + $0x24] sm:$0xe]
      %v680 = vld [vmem:[%s627 + $0x30] sm:$0xe]
      %v681 = vld [vmem:[%s627 + $0x3c] sm:$0xe]
      %v682 = vld [vmem:[%s627 + $0x48] sm:$0xe]
      %v683 = vld [vmem:[%s627 + $0x54] sm:$0xe]
      %v684 = vld [vmem:[%s627 + $0x60] sm:$0xe]
      %v685 = vld [vmem:[%s627 + $0x6c] sm:$0xe]
      %v686 = vld [vmem:[%s627 + $0x78] sm:$0xe]
      %v687 = vld [vmem:[%s627 + $0x84] sm:$0xe]
      %v688 = vld [vmem:[%s627 + $0x90] sm:$0xe]
      %v689 = vld [vmem:[%s627 + $0x9c] sm:$0xe]
      %v690 = vld [vmem:[%s627 + $0xa8] sm:$0xe]
      %v691 = vld [vmem:[%s627 + $0xb4] sm:$0xe]
      %v740 = vunpack.c.l.b16 %v467
      %v741 = vunpack.c.l.b16 %v468
      %v742 = vunpack.c.l.b16 %v469
      %v743 = vunpack.c.l.b16 %v470
      %v744 = vunpack.c.l.b16 %v471
      %v745 = vunpack.c.l.b16 %v472
      %v746 = vunpack.c.l.b16 %v473
      %v747 = vunpack.c.l.b16 %v474
      %v748 = vunpack.c.l.b16 %v475
      %v749 = vunpack.c.l.b16 %v476
      %v750 = vunpack.c.l.b16 %v477
      %v751 = vunpack.c.l.b16 %v478
      %v752 = vunpack.c.l.b16 %v479
      %v753 = vunpack.c.l.b16 %v480
      %v754 = vunpack.c.l.b16 %v481
      %v755 = vunpack.c.l.b16 %v482
      %v756 = vunpack.c.l.b16 %v483
      %v757 = vunpack.c.l.b16 %v484
      %v758 = vunpack.c.l.b16 %v485
      %v759 = vunpack.c.l.b16 %v486
      %v760 = vunpack.c.l.b16 %v487
      %v761 = vunpack.c.l.b16 %v488
      %v762 = vunpack.c.l.b16 %v489
      %v763 = vunpack.c.l.b16 %v490
      %v764 = vunpack.c.l.b16 %v491
      %v765 = vunpack.c.l.b16 %v492
      %v766 = vunpack.c.l.b16 %v493
      %v767 = vunpack.c.l.b16 %v494
      %v768 = vunpack.c.l.b16 %v495
      %v769 = vunpack.c.l.b16 %v496
      %v770 = vunpack.c.l.b16 %v497
      %v771 = vunpack.c.l.b16 %v498
      %v772 = vunpack.c.l.b16 %v499
      %v773 = vunpack.c.l.b16 %v500
      %v774 = vunpack.c.l.b16 %v501
      %v775 = vunpack.c.l.b16 %v502
      %v776 = vunpack.c.l.b16 %v503
      %v777 = vunpack.c.l.b16 %v504
      %v778 = vunpack.c.l.b16 %v505
      %v779 = vunpack.c.l.b16 %v506
      %v780 = vunpack.c.l.b16 %v507
      %v781 = vunpack.c.l.b16 %v508
      %v782 = vunpack.c.l.b16 %v509
      %v783 = vunpack.c.l.b16 %v510
      %v784 = vunpack.c.l.b16 %v511
      %v785 = vunpack.c.l.b16 %v512
      %v786 = vunpack.c.l.b16 %v513
      %v787 = vunpack.c.l.b16 %v514
      %v788 = vpack.c.b16 %v741, %v740
      %v789 = vpack.c.b16 %v742, %v742
      %v790 = vpack.c.b16 %v744, %v743
      %v791 = vpack.c.b16 %v745, %v745
      %v792 = vpack.c.b16 %v747, %v746
      %v793 = vpack.c.b16 %v748, %v748
      %v794 = vpack.c.b16 %v750, %v749
      %v795 = vpack.c.b16 %v751, %v751
      %v796 = vpack.c.b16 %v753, %v752
      %v797 = vpack.c.b16 %v754, %v754
      %v798 = vpack.c.b16 %v756, %v755
      %v799 = vpack.c.b16 %v757, %v757
      %v800 = vpack.c.b16 %v759, %v758
      %v801 = vpack.c.b16 %v760, %v760
      %v802 = vpack.c.b16 %v762, %v761
      %v803 = vpack.c.b16 %v763, %v763
      %v804 = vpack.c.b16 %v765, %v764
      %v805 = vpack.c.b16 %v766, %v766
      %v806 = vpack.c.b16 %v768, %v767
      %v807 = vpack.c.b16 %v769, %v769
      %v808 = vpack.c.b16 %v771, %v770
      %v809 = vpack.c.b16 %v772, %v772
      %v810 = vpack.c.b16 %v774, %v773
      %v811 = vpack.c.b16 %v775, %v775
      %v812 = vpack.c.b16 %v777, %v776
      %v813 = vpack.c.b16 %v778, %v778
      %v814 = vpack.c.b16 %v780, %v779
      %v815 = vpack.c.b16 %v781, %v781
      %v816 = vpack.c.b16 %v783, %v782
      %v817 = vpack.c.b16 %v784, %v784
      %v818 = vpack.c.b16 %v786, %v785
      %v819 = vpack.c.b16 %v787, %v787
      %v836 = vunpack.c.l.b16 %v515
      %v837 = vunpack.c.l.b16 %v516
      %v838 = vunpack.c.l.b16 %v517
      %v839 = vunpack.c.l.b16 %v518
      %v840 = vunpack.c.l.b16 %v519
      %v841 = vunpack.c.l.b16 %v520
      %v842 = vunpack.c.l.b16 %v521
      %v843 = vunpack.c.l.b16 %v522
      %v844 = vunpack.c.l.b16 %v523
      %v845 = vunpack.c.l.b16 %v524
      %v846 = vunpack.c.l.b16 %v525
      %v847 = vunpack.c.l.b16 %v526
      %v848 = vunpack.c.l.b16 %v527
      %v849 = vunpack.c.l.b16 %v528
      %v850 = vunpack.c.l.b16 %v529
      %v851 = vunpack.c.l.b16 %v530
      %v852 = vpack.c.b16 %v741, %v836
      %v853 = vpack.c.b16 %v744, %v837
      %v854 = vpack.c.b16 %v747, %v838
      %v855 = vpack.c.b16 %v750, %v839
      %v856 = vpack.c.b16 %v753, %v840
      %v857 = vpack.c.b16 %v756, %v841
      %v858 = vpack.c.b16 %v759, %v842
      %v859 = vpack.c.b16 %v762, %v843
      %v860 = vpack.c.b16 %v765, %v844
      %v861 = vpack.c.b16 %v768, %v845
      %v862 = vpack.c.b16 %v771, %v846
      %v863 = vpack.c.b16 %v774, %v847
      %v864 = vpack.c.b16 %v777, %v848
      %v865 = vpack.c.b16 %v780, %v849
      %v866 = vpack.c.b16 %v783, %v850
      %v867 = vpack.c.b16 %v786, %v851
      %vm868 = vsmask.f32 7424
      %v870 = vshrl.u32 %v852, 16
      %v872 = vshll.u32 %v852, 16
      %v874 = vrot.slane %v872, 1
      %v875 = vor.u32 %v870, %v874
      %v877 = vshll.u32 %v789, 16
      %v879 = vrot.slane %v877, 1
      %v880 = vsel %vm868, %v875, %v879
      %v881 = vshrl.u32 %v789, 16
      %v884 = vshrl.u32 %v853, 16
      %v886 = vshll.u32 %v853, 16
      %v888 = vrot.slane %v886, 1
      %v889 = vor.u32 %v884, %v888
      %v891 = vshll.u32 %v791, 16
      %v893 = vrot.slane %v891, 1
      %v894 = vsel %vm868, %v889, %v893
      %v895 = vshrl.u32 %v791, 16
      %v898 = vshrl.u32 %v854, 16
      %v900 = vshll.u32 %v854, 16
      %v902 = vrot.slane %v900, 1
      %v903 = vor.u32 %v898, %v902
      %v905 = vshll.u32 %v793, 16
      %v907 = vrot.slane %v905, 1
      %v908 = vsel %vm868, %v903, %v907
      %v909 = vshrl.u32 %v793, 16
      %v912 = vshrl.u32 %v855, 16
      %v914 = vshll.u32 %v855, 16
      %v916 = vrot.slane %v914, 1
      %v917 = vor.u32 %v912, %v916
      %v919 = vshll.u32 %v795, 16
      %v921 = vrot.slane %v919, 1
      %v922 = vsel %vm868, %v917, %v921
      %v923 = vshrl.u32 %v795, 16
      %v926 = vshrl.u32 %v856, 16
      %v928 = vshll.u32 %v856, 16
      %v930 = vrot.slane %v928, 1
      %v931 = vor.u32 %v926, %v930
      %v933 = vshll.u32 %v797, 16
      %v935 = vrot.slane %v933, 1
      %v936 = vsel %vm868, %v931, %v935
      %v937 = vshrl.u32 %v797, 16
      %v940 = vshrl.u32 %v857, 16
      %v942 = vshll.u32 %v857, 16
      %v944 = vrot.slane %v942, 1
      %v945 = vor.u32 %v940, %v944
      %v947 = vshll.u32 %v799, 16
      %v949 = vrot.slane %v947, 1
      %v950 = vsel %vm868, %v945, %v949
      %v951 = vshrl.u32 %v799, 16
      %v954 = vshrl.u32 %v858, 16
      %v956 = vshll.u32 %v858, 16
      %v958 = vrot.slane %v956, 1
      %v959 = vor.u32 %v954, %v958
      %v961 = vshll.u32 %v801, 16
      %v963 = vrot.slane %v961, 1
      %v964 = vsel %vm868, %v959, %v963
      %v965 = vshrl.u32 %v801, 16
      %v968 = vshrl.u32 %v859, 16
      %v970 = vshll.u32 %v859, 16
      %v972 = vrot.slane %v970, 1
      %v973 = vor.u32 %v968, %v972
      %v975 = vshll.u32 %v803, 16
      %v977 = vrot.slane %v975, 1
      %v978 = vsel %vm868, %v973, %v977
      %v979 = vshrl.u32 %v803, 16
      %v982 = vshrl.u32 %v860, 16
      %v984 = vshll.u32 %v860, 16
      %v986 = vrot.slane %v984, 1
      %v987 = vor.u32 %v982, %v986
      %v989 = vshll.u32 %v805, 16
      %v991 = vrot.slane %v989, 1
      %v992 = vsel %vm868, %v987, %v991
      %v993 = vshrl.u32 %v805, 16
      %v996 = vshrl.u32 %v861, 16
      %v998 = vshll.u32 %v861, 16
      %v1000 = vrot.slane %v998, 1
      %v1001 = vor.u32 %v996, %v1000
      %v1003 = vshll.u32 %v807, 16
      %v1005 = vrot.slane %v1003, 1
      %v1006 = vsel %vm868, %v1001, %v1005
      %v1007 = vshrl.u32 %v807, 16
      %v1010 = vshrl.u32 %v862, 16
      %v1012 = vshll.u32 %v862, 16
      %v1014 = vrot.slane %v1012, 1
      %v1015 = vor.u32 %v1010, %v1014
      %v1017 = vshll.u32 %v809, 16
      %v1019 = vrot.slane %v1017, 1
      %v1020 = vsel %vm868, %v1015, %v1019
      %v1021 = vshrl.u32 %v809, 16
      %v1024 = vshrl.u32 %v863, 16
      %v1026 = vshll.u32 %v863, 16
      %v1028 = vrot.slane %v1026, 1
      %v1029 = vor.u32 %v1024, %v1028
      %v1031 = vshll.u32 %v811, 16
      %v1033 = vrot.slane %v1031, 1
      %v1034 = vsel %vm868, %v1029, %v1033
      %v1035 = vshrl.u32 %v811, 16
      %v1038 = vshrl.u32 %v864, 16
      %v1040 = vshll.u32 %v864, 16
      %v1042 = vrot.slane %v1040, 1
      %v1043 = vor.u32 %v1038, %v1042
      %v1045 = vshll.u32 %v813, 16
      %v1047 = vrot.slane %v1045, 1
      %v1048 = vsel %vm868, %v1043, %v1047
      %v1049 = vshrl.u32 %v813, 16
      %v1052 = vshrl.u32 %v865, 16
      %v1054 = vshll.u32 %v865, 16
      %v1056 = vrot.slane %v1054, 1
      %v1057 = vor.u32 %v1052, %v1056
      %v1059 = vshll.u32 %v815, 16
      %v1061 = vrot.slane %v1059, 1
      %v1062 = vsel %vm868, %v1057, %v1061
      %v1063 = vshrl.u32 %v815, 16
      %v1066 = vshrl.u32 %v866, 16
      %v1068 = vshll.u32 %v866, 16
      %v1070 = vrot.slane %v1068, 1
      %v1071 = vor.u32 %v1066, %v1070
      %v1073 = vshll.u32 %v817, 16
      %v1075 = vrot.slane %v1073, 1
      %v1076 = vsel %vm868, %v1071, %v1075
      %v1077 = vshrl.u32 %v817, 16
      %v1080 = vshrl.u32 %v867, 16
      %v1082 = vshll.u32 %v867, 16
      %v1084 = vrot.slane %v1082, 1
      %v1085 = vor.u32 %v1080, %v1084
      %v1087 = vshll.u32 %v819, 16
      %v1089 = vrot.slane %v1087, 1
      %v1090 = vsel %vm868, %v1085, %v1089
      %v1091 = vshrl.u32 %v819, 16
      %1093 = vrot.lane.b32.xlu0 %v880, 16
      %v1094 = vpop.permute.xlu0 %1093
      %1095 = vrot.lane.b32.xlu0 %v881, 16
      %v1096 = vpop.permute.xlu0 %1095
      %1097 = vrot.lane.b32.xlu0 %v894, 16
      %v1098 = vpop.permute.xlu0 %1097
      %1099 = vrot.lane.b32.xlu0 %v895, 16
      %v1100 = vpop.permute.xlu0 %1099
      %1101 = vrot.lane.b32.xlu0 %v908, 16
      %v1102 = vpop.permute.xlu0 %1101
      %1103 = vrot.lane.b32.xlu0 %v909, 16
      %v1104 = vpop.permute.xlu0 %1103
      %1105 = vrot.lane.b32.xlu0 %v922, 16
      %v1106 = vpop.permute.xlu0 %1105
      %1107 = vrot.lane.b32.xlu0 %v923, 16
      %v1108 = vpop.permute.xlu0 %1107
      %1109 = vrot.lane.b32.xlu0 %v936, 16
      %v1110 = vpop.permute.xlu0 %1109
      %1111 = vrot.lane.b32.xlu0 %v937, 16
      %v1112 = vpop.permute.xlu0 %1111
      %1113 = vrot.lane.b32.xlu0 %v950, 16
      %v1114 = vpop.permute.xlu0 %1113
      %1115 = vrot.lane.b32.xlu0 %v951, 16
      %v1116 = vpop.permute.xlu0 %1115
      %1117 = vrot.lane.b32.xlu0 %v964, 16
      %v1118 = vpop.permute.xlu0 %1117
      %1119 = vrot.lane.b32.xlu0 %v965, 16
      %v1120 = vpop.permute.xlu0 %1119
      %1121 = vrot.lane.b32.xlu0 %v978, 16
      %v1122 = vpop.permute.xlu0 %1121
      %1123 = vrot.lane.b32.xlu0 %v979, 16
      %v1124 = vpop.permute.xlu0 %1123
      %1125 = vrot.lane.b32.xlu0 %v992, 16
      %v1126 = vpop.permute.xlu0 %1125
      %1127 = vrot.lane.b32.xlu0 %v993, 16
      %v1128 = vpop.permute.xlu0 %1127
      %1129 = vrot.lane.b32.xlu0 %v1006, 16
      %v1130 = vpop.permute.xlu0 %1129
      %1131 = vrot.lane.b32.xlu0 %v1007, 16
      %v1132 = vpop.permute.xlu0 %1131
      %1133 = vrot.lane.b32.xlu0 %v1020, 16
      %v1134 = vpop.permute.xlu0 %1133
      %1135 = vrot.lane.b32.xlu0 %v1021, 16
      %v1136 = vpop.permute.xlu0 %1135
      %1137 = vrot.lane.b32.xlu0 %v1034, 16
      %v1138 = vpop.permute.xlu0 %1137
      %1139 = vrot.lane.b32.xlu0 %v1035, 16
      %v1140 = vpop.permute.xlu0 %1139
      %1141 = vrot.lane.b32.xlu0 %v1048, 16
      %v1142 = vpop.permute.xlu0 %1141
      %1143 = vrot.lane.b32.xlu0 %v1049, 16
      %v1144 = vpop.permute.xlu0 %1143
      %1145 = vrot.lane.b32.xlu0 %v1062, 16
      %v1146 = vpop.permute.xlu0 %1145
      %1147 = vrot.lane.b32.xlu0 %v1063, 16
      %v1148 = vpop.permute.xlu0 %1147
      %1149 = vrot.lane.b32.xlu0 %v1076, 16
      %v1150 = vpop.permute.xlu0 %1149
      %1151 = vrot.lane.b32.xlu0 %v1077, 16
      %v1152 = vpop.permute.xlu0 %1151
      %1153 = vrot.lane.b32.xlu0 %v1090, 16
      %v1154 = vpop.permute.xlu0 %1153
      %1155 = vrot.lane.b32.xlu0 %v1091, 16
      %v1156 = vpop.permute.xlu0 %1155
      %v1173 = vunpack.c.l.b16 %v531
      %v1174 = vunpack.c.l.b16 %v532
      %v1175 = vunpack.c.l.b16 %v533
      %v1176 = vunpack.c.l.b16 %v534
      %v1177 = vunpack.c.l.b16 %v535
      %v1178 = vunpack.c.l.b16 %v536
      %v1179 = vunpack.c.l.b16 %v537
      %v1180 = vunpack.c.l.b16 %v538
      %v1181 = vunpack.c.l.b16 %v539
      %v1182 = vunpack.c.l.b16 %v540
      %v1183 = vunpack.c.l.b16 %v541
      %v1184 = vunpack.c.l.b16 %v542
      %v1185 = vunpack.c.l.b16 %v543
      %v1186 = vunpack.c.l.b16 %v544
      %v1187 = vunpack.c.l.b16 %v545
      %v1188 = vunpack.c.l.b16 %v546
      %v1189 = vpack.c.b16 %v1173, %v1173
      %v1190 = vpack.c.b16 %v1174, %v1174
      %v1191 = vpack.c.b16 %v1175, %v1175
      %v1192 = vpack.c.b16 %v1176, %v1176
      %v1193 = vpack.c.b16 %v1177, %v1177
      %v1194 = vpack.c.b16 %v1178, %v1178
      %v1195 = vpack.c.b16 %v1179, %v1179
      %v1196 = vpack.c.b16 %v1180, %v1180
      %v1197 = vpack.c.b16 %v1181, %v1181
      %v1198 = vpack.c.b16 %v1182, %v1182
      %v1199 = vpack.c.b16 %v1183, %v1183
      %v1200 = vpack.c.b16 %v1184, %v1184
      %v1201 = vpack.c.b16 %v1185, %v1185
      %v1202 = vpack.c.b16 %v1186, %v1186
      %v1203 = vpack.c.b16 %v1187, %v1187
      %v1204 = vpack.c.b16 %v1188, %v1188
      %vm1205 = vcmask 1046528
      %v1206 = vrot.slane %v852, 1
      %v1207 = vrot.slane %v1189, 1
      %v1208 = vsel %vm1205, %v1206, %v1207
      %v1209 = vrot.slane %v853, 1
      %v1210 = vrot.slane %v1190, 1
      %v1211 = vsel %vm1205, %v1209, %v1210
      %v1212 = vrot.slane %v854, 1
      %v1213 = vrot.slane %v1191, 1
      %v1214 = vsel %vm1205, %v1212, %v1213
      %v1215 = vrot.slane %v855, 1
      %v1216 = vrot.slane %v1192, 1
      %v1217 = vsel %vm1205, %v1215, %v1216
      %v1218 = vrot.slane %v856, 1
      %v1219 = vrot.slane %v1193, 1
      %v1220 = vsel %vm1205, %v1218, %v1219
      %v1221 = vrot.slane %v857, 1
      %v1222 = vrot.slane %v1194, 1
      %v1223 = vsel %vm1205, %v1221, %v1222
      %v1224 = vrot.slane %v858, 1
      %v1225 = vrot.slane %v1195, 1
      %v1226 = vsel %vm1205, %v1224, %v1225
      %v1227 = vrot.slane %v859, 1
      %v1228 = vrot.slane %v1196, 1
      %v1229 = vsel %vm1205, %v1227, %v1228
      %v1230 = vrot.slane %v860, 1
      %v1231 = vrot.slane %v1197, 1
      %v1232 = vsel %vm1205, %v1230, %v1231
      %v1233 = vrot.slane %v861, 1
      %v1234 = vrot.slane %v1198, 1
      %v1235 = vsel %vm1205, %v1233, %v1234
      %v1236 = vrot.slane %v862, 1
      %v1237 = vrot.slane %v1199, 1
      %v1238 = vsel %vm1205, %v1236, %v1237
      %v1239 = vrot.slane %v863, 1
      %v1240 = vrot.slane %v1200, 1
      %v1241 = vsel %vm1205, %v1239, %v1240
      %v1242 = vrot.slane %v864, 1
      %v1243 = vrot.slane %v1201, 1
      %v1244 = vsel %vm1205, %v1242, %v1243
      %v1245 = vrot.slane %v865, 1
      %v1246 = vrot.slane %v1202, 1
      %v1247 = vsel %vm1205, %v1245, %v1246
      %v1248 = vrot.slane %v866, 1
      %v1249 = vrot.slane %v1203, 1
      %v1250 = vsel %vm1205, %v1248, %v1249
      %v1251 = vrot.slane %v867, 1
      %v1252 = vrot.slane %v1204, 1
      %v1253 = vsel %vm1205, %v1251, %v1252
      %1254 = vrot.lane.b32.xlu0 %v1208, 32
      %v1255 = vpop.permute.xlu0 %1254
      %1256 = vrot.lane.b32.xlu0 %v1207, 32
      %v1257 = vpop.permute.xlu0 %1256
      %1258 = vrot.lane.b32.xlu0 %v1211, 32
      %v1259 = vpop.permute.xlu0 %1258
      %1260 = vrot.lane.b32.xlu0 %v1210, 32
      %v1261 = vpop.permute.xlu0 %1260
      %1262 = vrot.lane.b32.xlu0 %v1214, 32
      %v1263 = vpop.permute.xlu0 %1262
      %1264 = vrot.lane.b32.xlu0 %v1213, 32
      %v1265 = vpop.permute.xlu0 %1264
      %1266 = vrot.lane.b32.xlu0 %v1217, 32
      %v1267 = vpop.permute.xlu0 %1266
      %1268 = vrot.lane.b32.xlu0 %v1216, 32
      %v1269 = vpop.permute.xlu0 %1268
      %1270 = vrot.lane.b32.xlu0 %v1220, 32
      %v1271 = vpop.permute.xlu0 %1270
      %1272 = vrot.lane.b32.xlu0 %v1219, 32
      %v1273 = vpop.permute.xlu0 %1272
      %1274 = vrot.lane.b32.xlu0 %v1223, 32
      %v1275 = vpop.permute.xlu0 %1274
      %1276 = vrot.lane.b32.xlu0 %v1222, 32
      %v1277 = vpop.permute.xlu0 %1276
      %1278 = vrot.lane.b32.xlu0 %v1226, 32
      %v1279 = vpop.permute.xlu0 %1278
      %1280 = vrot.lane.b32.xlu0 %v1225, 32
      %v1281 = vpop.permute.xlu0 %1280
      %1282 = vrot.lane.b32.xlu0 %v1229, 32
      %v1283 = vpop.permute.xlu0 %1282
      %1284 = vrot.lane.b32.xlu0 %v1228, 32
      %v1285 = vpop.permute.xlu0 %1284
      %1286 = vrot.lane.b32.xlu0 %v1232, 32
      %v1287 = vpop.permute.xlu0 %1286
      %1288 = vrot.lane.b32.xlu0 %v1231, 32
      %v1289 = vpop.permute.xlu0 %1288
      %1290 = vrot.lane.b32.xlu0 %v1235, 32
      %v1291 = vpop.permute.xlu0 %1290
      %1292 = vrot.lane.b32.xlu0 %v1234, 32
      %v1293 = vpop.permute.xlu0 %1292
      %1294 = vrot.lane.b32.xlu0 %v1238, 32
      %v1295 = vpop.permute.xlu0 %1294
      %1296 = vrot.lane.b32.xlu0 %v1237, 32
      %v1297 = vpop.permute.xlu0 %1296
      %1298 = vrot.lane.b32.xlu0 %v1241, 32
      %v1299 = vpop.permute.xlu0 %1298
      %1300 = vrot.lane.b32.xlu0 %v1240, 32
      %v1301 = vpop.permute.xlu0 %1300
      %1302 = vrot.lane.b32.xlu0 %v1244, 32
      %v1303 = vpop.permute.xlu0 %1302
      %1304 = vrot.lane.b32.xlu0 %v1243, 32
      %v1305 = vpop.permute.xlu0 %1304
      %1306 = vrot.lane.b32.xlu0 %v1247, 32
      %v1307 = vpop.permute.xlu0 %1306
      %1308 = vrot.lane.b32.xlu0 %v1246, 32
      %v1309 = vpop.permute.xlu0 %1308
      %1310 = vrot.lane.b32.xlu0 %v1250, 32
      %v1311 = vpop.permute.xlu0 %1310
      %1312 = vrot.lane.b32.xlu0 %v1249, 32
      %v1313 = vpop.permute.xlu0 %1312
      %1314 = vrot.lane.b32.xlu0 %v1253, 32
      %v1315 = vpop.permute.xlu0 %1314
      %1316 = vrot.lane.b32.xlu0 %v1252, 32
      %v1317 = vpop.permute.xlu0 %1316
      %v1366 = vunpack.c.l.b16 %v547
      %v1367 = vunpack.c.l.b16 %v548
      %v1368 = vunpack.c.l.b16 %v549
      %v1369 = vunpack.c.l.b16 %v550
      %v1370 = vunpack.c.l.b16 %v551
      %v1371 = vunpack.c.l.b16 %v552
      %v1372 = vunpack.c.l.b16 %v553
      %v1373 = vunpack.c.l.b16 %v554
      %v1374 = vunpack.c.l.b16 %v555
      %v1375 = vunpack.c.l.b16 %v556
      %v1376 = vunpack.c.l.b16 %v557
      %v1377 = vunpack.c.l.b16 %v558
      %v1378 = vunpack.c.l.b16 %v559
      %v1379 = vunpack.c.l.b16 %v560
      %v1380 = vunpack.c.l.b16 %v561
      %v1381 = vunpack.c.l.b16 %v562
      %v1382 = vunpack.c.l.b16 %v563
      %v1383 = vunpack.c.l.b16 %v564
      %v1384 = vunpack.c.l.b16 %v565
      %v1385 = vunpack.c.l.b16 %v566
      %v1386 = vunpack.c.l.b16 %v567
      %v1387 = vunpack.c.l.b16 %v568
      %v1388 = vunpack.c.l.b16 %v569
      %v1389 = vunpack.c.l.b16 %v570
      %v1390 = vunpack.c.l.b16 %v571
      %v1391 = vunpack.c.l.b16 %v572
      %v1392 = vunpack.c.l.b16 %v573
      %v1393 = vunpack.c.l.b16 %v574
      %v1394 = vunpack.c.l.b16 %v575
      %v1395 = vunpack.c.l.b16 %v576
      %v1396 = vunpack.c.l.b16 %v577
      %v1397 = vunpack.c.l.b16 %v578
      %v1398 = vunpack.c.l.b16 %v579
      %v1399 = vunpack.c.l.b16 %v580
      %v1400 = vunpack.c.l.b16 %v581
      %v1401 = vunpack.c.l.b16 %v582
      %v1402 = vunpack.c.l.b16 %v583
      %v1403 = vunpack.c.l.b16 %v584
      %v1404 = vunpack.c.l.b16 %v585
      %v1405 = vunpack.c.l.b16 %v586
      %v1406 = vunpack.c.l.b16 %v587
      %v1407 = vunpack.c.l.b16 %v588
      %v1408 = vunpack.c.l.b16 %v589
      %v1409 = vunpack.c.l.b16 %v590
      %v1410 = vunpack.c.l.b16 %v591
      %v1411 = vunpack.c.l.b16 %v592
      %v1412 = vunpack.c.l.b16 %v593
      %v1413 = vunpack.c.l.b16 %v594
      %v1414 = vpack.c.b16 %v1367, %v1366
      %v1415 = vpack.c.b16 %v1368, %v1368
      %v1416 = vpack.c.b16 %v1370, %v1369
      %v1417 = vpack.c.b16 %v1371, %v1371
      %v1418 = vpack.c.b16 %v1373, %v1372
      %v1419 = vpack.c.b16 %v1374, %v1374
      %v1420 = vpack.c.b16 %v1376, %v1375
      %v1421 = vpack.c.b16 %v1377, %v1377
      %v1422 = vpack.c.b16 %v1379, %v1378
      %v1423 = vpack.c.b16 %v1380, %v1380
      %v1424 = vpack.c.b16 %v1382, %v1381
      %v1425 = vpack.c.b16 %v1383, %v1383
      %v1426 = vpack.c.b16 %v1385, %v1384
      %v1427 = vpack.c.b16 %v1386, %v1386
      %v1428 = vpack.c.b16 %v1388, %v1387
      %v1429 = vpack.c.b16 %v1389, %v1389
      %v1430 = vpack.c.b16 %v1391, %v1390
      %v1431 = vpack.c.b16 %v1392, %v1392
      %v1432 = vpack.c.b16 %v1394, %v1393
      %v1433 = vpack.c.b16 %v1395, %v1395
      %v1434 = vpack.c.b16 %v1397, %v1396
      %v1435 = vpack.c.b16 %v1398, %v1398
      %v1436 = vpack.c.b16 %v1400, %v1399
      %v1437 = vpack.c.b16 %v1401, %v1401
      %v1438 = vpack.c.b16 %v1403, %v1402
      %v1439 = vpack.c.b16 %v1404, %v1404
      %v1440 = vpack.c.b16 %v1406, %v1405
      %v1441 = vpack.c.b16 %v1407, %v1407
      %v1442 = vpack.c.b16 %v1409, %v1408
      %v1443 = vpack.c.b16 %v1410, %v1410
      %v1444 = vpack.c.b16 %v1412, %v1411
      %v1445 = vpack.c.b16 %v1413, %v1413
      %1446 = vrot.lane.b32.xlu0 %v1414, 48
      %v1447 = vpop.permute.xlu0 %1446
      %1448 = vrot.lane.b32.xlu0 %v1415, 48
      %v1449 = vpop.permute.xlu0 %1448
      %1450 = vrot.lane.b32.xlu0 %v1416, 48
      %v1451 = vpop.permute.xlu0 %1450
      %1452 = vrot.lane.b32.xlu0 %v1417, 48
      %v1453 = vpop.permute.xlu0 %1452
      %1454 = vrot.lane.b32.xlu0 %v1418, 48
      %v1455 = vpop.permute.xlu0 %1454
      %1456 = vrot.lane.b32.xlu0 %v1419, 48
      %v1457 = vpop.permute.xlu0 %1456
      %1458 = vrot.lane.b32.xlu0 %v1420, 48
      %v1459 = vpop.permute.xlu0 %1458
      %1460 = vrot.lane.b32.xlu0 %v1421, 48
      %v1461 = vpop.permute.xlu0 %1460
      %1462 = vrot.lane.b32.xlu0 %v1422, 48
      %v1463 = vpop.permute.xlu0 %1462
      %1464 = vrot.lane.b32.xlu0 %v1423, 48
      %v1465 = vpop.permute.xlu0 %1464
      %1466 = vrot.lane.b32.xlu0 %v1424, 48
      %v1467 = vpop.permute.xlu0 %1466
      %1468 = vrot.lane.b32.xlu0 %v1425, 48
      %v1469 = vpop.permute.xlu0 %1468
      %1470 = vrot.lane.b32.xlu0 %v1426, 48
      %v1471 = vpop.permute.xlu0 %1470
      %1472 = vrot.lane.b32.xlu0 %v1427, 48
      %v1473 = vpop.permute.xlu0 %1472
      %1474 = vrot.lane.b32.xlu0 %v1428, 48
      %v1475 = vpop.permute.xlu0 %1474
      %1476 = vrot.lane.b32.xlu0 %v1429, 48
      %v1477 = vpop.permute.xlu0 %1476
      %1478 = vrot.lane.b32.xlu0 %v1430, 48
      %v1479 = vpop.permute.xlu0 %1478
      %1480 = vrot.lane.b32.xlu0 %v1431, 48
      %v1481 = vpop.permute.xlu0 %1480
      %1482 = vrot.lane.b32.xlu0 %v1432, 48
      %v1483 = vpop.permute.xlu0 %1482
      %1484 = vrot.lane.b32.xlu0 %v1433, 48
      %v1485 = vpop.permute.xlu0 %1484
      %1486 = vrot.lane.b32.xlu0 %v1434, 48
      %v1487 = vpop.permute.xlu0 %1486
      %1488 = vrot.lane.b32.xlu0 %v1435, 48
      %v1489 = vpop.permute.xlu0 %1488
      %1490 = vrot.lane.b32.xlu0 %v1436, 48
      %v1491 = vpop.permute.xlu0 %1490
      %1492 = vrot.lane.b32.xlu0 %v1437, 48
      %v1493 = vpop.permute.xlu0 %1492
      %1494 = vrot.lane.b32.xlu0 %v1438, 48
      %v1495 = vpop.permute.xlu0 %1494
      %1496 = vrot.lane.b32.xlu0 %v1439, 48
      %v1497 = vpop.permute.xlu0 %1496
      %1498 = vrot.lane.b32.xlu0 %v1440, 48
      %v1499 = vpop.permute.xlu0 %1498
      %1500 = vrot.lane.b32.xlu0 %v1441, 48
      %v1501 = vpop.permute.xlu0 %1500
      %1502 = vrot.lane.b32.xlu0 %v1442, 48
      %v1503 = vpop.permute.xlu0 %1502
      %1504 = vrot.lane.b32.xlu0 %v1443, 48
      %v1505 = vpop.permute.xlu0 %1504
      %1506 = vrot.lane.b32.xlu0 %v1444, 48
      %v1507 = vpop.permute.xlu0 %1506
      %1508 = vrot.lane.b32.xlu0 %v1445, 48
      %v1509 = vpop.permute.xlu0 %1508
      %v1526 = vunpack.c.l.b16 %v595
      %v1527 = vunpack.c.l.b16 %v596
      %v1528 = vunpack.c.l.b16 %v597
      %v1529 = vunpack.c.l.b16 %v598
      %v1530 = vunpack.c.l.b16 %v599
      %v1531 = vunpack.c.l.b16 %v600
      %v1532 = vunpack.c.l.b16 %v601
      %v1533 = vunpack.c.l.b16 %v602
      %v1534 = vunpack.c.l.b16 %v603
      %v1535 = vunpack.c.l.b16 %v604
      %v1536 = vunpack.c.l.b16 %v605
      %v1537 = vunpack.c.l.b16 %v606
      %v1538 = vunpack.c.l.b16 %v607
      %v1539 = vunpack.c.l.b16 %v608
      %v1540 = vunpack.c.l.b16 %v609
      %v1541 = vunpack.c.l.b16 %v610
      %v1542 = vpack.c.b16 %v1367, %v1526
      %v1543 = vpack.c.b16 %v1370, %v1527
      %v1544 = vpack.c.b16 %v1373, %v1528
      %v1545 = vpack.c.b16 %v1376, %v1529
      %v1546 = vpack.c.b16 %v1379, %v1530
      %v1547 = vpack.c.b16 %v1382, %v1531
      %v1548 = vpack.c.b16 %v1385, %v1532
      %v1549 = vpack.c.b16 %v1388, %v1533
      %v1550 = vpack.c.b16 %v1391, %v1534
      %v1551 = vpack.c.b16 %v1394, %v1535
      %v1552 = vpack.c.b16 %v1397, %v1536
      %v1553 = vpack.c.b16 %v1400, %v1537
      %v1554 = vpack.c.b16 %v1403, %v1538
      %v1555 = vpack.c.b16 %v1406, %v1539
      %v1556 = vpack.c.b16 %v1409, %v1540
      %v1557 = vpack.c.b16 %v1412, %v1541
      %v1559 = vshrl.u32 %v1542, 16
      %v1561 = vshll.u32 %v1542, 16
      %v1563 = vrot.slane %v1561, 1
      %v1564 = vor.u32 %v1559, %v1563
      %v1566 = vshll.u32 %v1415, 16
      %v1568 = vrot.slane %v1566, 1
      %v1569 = vsel %vm868, %v1564, %v1568
      %v1570 = vshrl.u32 %v1415, 16
      %v1573 = vshrl.u32 %v1543, 16
      %v1575 = vshll.u32 %v1543, 16
      %v1577 = vrot.slane %v1575, 1
      %v1578 = vor.u32 %v1573, %v1577
      %v1580 = vshll.u32 %v1417, 16
      %v1582 = vrot.slane %v1580, 1
      %v1583 = vsel %vm868, %v1578, %v1582
      %v1584 = vshrl.u32 %v1417, 16
      %v1587 = vshrl.u32 %v1544, 16
      %v1589 = vshll.u32 %v1544, 16
      %v1591 = vrot.slane %v1589, 1
      %v1592 = vor.u32 %v1587, %v1591
      %v1594 = vshll.u32 %v1419, 16
      %v1596 = vrot.slane %v1594, 1
      %v1597 = vsel %vm868, %v1592, %v1596
      %v1598 = vshrl.u32 %v1419, 16
      %v1601 = vshrl.u32 %v1545, 16
      %v1603 = vshll.u32 %v1545, 16
      %v1605 = vrot.slane %v1603, 1
      %v1606 = vor.u32 %v1601, %v1605
      %v1608 = vshll.u32 %v1421, 16
      %v1610 = vrot.slane %v1608, 1
      %v1611 = vsel %vm868, %v1606, %v1610
      %v1612 = vshrl.u32 %v1421, 16
      %v1615 = vshrl.u32 %v1546, 16
      %v1617 = vshll.u32 %v1546, 16
      %v1619 = vrot.slane %v1617, 1
      %v1620 = vor.u32 %v1615, %v1619
      %v1622 = vshll.u32 %v1423, 16
      %v1624 = vrot.slane %v1622, 1
      %v1625 = vsel %vm868, %v1620, %v1624
      %v1626 = vshrl.u32 %v1423, 16
      %v1629 = vshrl.u32 %v1547, 16
      %v1631 = vshll.u32 %v1547, 16
      %v1633 = vrot.slane %v1631, 1
      %v1634 = vor.u32 %v1629, %v1633
      %v1636 = vshll.u32 %v1425, 16
      %v1638 = vrot.slane %v1636, 1
      %v1639 = vsel %vm868, %v1634, %v1638
      %v1640 = vshrl.u32 %v1425, 16
      %v1643 = vshrl.u32 %v1548, 16
      %v1645 = vshll.u32 %v1548, 16
      %v1647 = vrot.slane %v1645, 1
      %v1648 = vor.u32 %v1643, %v1647
      %v1650 = vshll.u32 %v1427, 16
      %v1652 = vrot.slane %v1650, 1
      %v1653 = vsel %vm868, %v1648, %v1652
      %v1654 = vshrl.u32 %v1427, 16
      %v1657 = vshrl.u32 %v1549, 16
      %v1659 = vshll.u32 %v1549, 16
      %v1661 = vrot.slane %v1659, 1
      %v1662 = vor.u32 %v1657, %v1661
      %v1664 = vshll.u32 %v1429, 16
      %v1666 = vrot.slane %v1664, 1
      %v1667 = vsel %vm868, %v1662, %v1666
      %v1668 = vshrl.u32 %v1429, 16
      %v1671 = vshrl.u32 %v1550, 16
      %v1673 = vshll.u32 %v1550, 16
      %v1675 = vrot.slane %v1673, 1
      %v1676 = vor.u32 %v1671, %v1675
      %v1678 = vshll.u32 %v1431, 16
      %v1680 = vrot.slane %v1678, 1
      %v1681 = vsel %vm868, %v1676, %v1680
      %v1682 = vshrl.u32 %v1431, 16
      %v1685 = vshrl.u32 %v1551, 16
      %v1687 = vshll.u32 %v1551, 16
      %v1689 = vrot.slane %v1687, 1
      %v1690 = vor.u32 %v1685, %v1689
      %v1692 = vshll.u32 %v1433, 16
      %v1694 = vrot.slane %v1692, 1
      %v1695 = vsel %vm868, %v1690, %v1694
      %v1696 = vshrl.u32 %v1433, 16
      %v1699 = vshrl.u32 %v1552, 16
      %v1701 = vshll.u32 %v1552, 16
      %v1703 = vrot.slane %v1701, 1
      %v1704 = vor.u32 %v1699, %v1703
      %v1706 = vshll.u32 %v1435, 16
      %v1708 = vrot.slane %v1706, 1
      %v1709 = vsel %vm868, %v1704, %v1708
      %v1710 = vshrl.u32 %v1435, 16
      %v1713 = vshrl.u32 %v1553, 16
      %v1715 = vshll.u32 %v1553, 16
      %v1717 = vrot.slane %v1715, 1
      %v1718 = vor.u32 %v1713, %v1717
      %v1720 = vshll.u32 %v1437, 16
      %v1722 = vrot.slane %v1720, 1
      %v1723 = vsel %vm868, %v1718, %v1722
      %v1724 = vshrl.u32 %v1437, 16
      %v1727 = vshrl.u32 %v1554, 16
      %v1729 = vshll.u32 %v1554, 16
      %v1731 = vrot.slane %v1729, 1
      %v1732 = vor.u32 %v1727, %v1731
      %v1734 = vshll.u32 %v1439, 16
      %v1736 = vrot.slane %v1734, 1
      %v1737 = vsel %vm868, %v1732, %v1736
      %v1738 = vshrl.u32 %v1439, 16
      %v1741 = vshrl.u32 %v1555, 16
      %v1743 = vshll.u32 %v1555, 16
      %v1745 = vrot.slane %v1743, 1
      %v1746 = vor.u32 %v1741, %v1745
      %v1748 = vshll.u32 %v1441, 16
      %v1750 = vrot.slane %v1748, 1
      %v1751 = vsel %vm868, %v1746, %v1750
      %v1752 = vshrl.u32 %v1441, 16
      %v1755 = vshrl.u32 %v1556, 16
      %v1757 = vshll.u32 %v1556, 16
      %v1759 = vrot.slane %v1757, 1
      %v1760 = vor.u32 %v1755, %v1759
      %v1762 = vshll.u32 %v1443, 16
      %v1764 = vrot.slane %v1762, 1
      %v1765 = vsel %vm868, %v1760, %v1764
      %v1766 = vshrl.u32 %v1443, 16
      %v1769 = vshrl.u32 %v1557, 16
      %v1771 = vshll.u32 %v1557, 16
      %v1773 = vrot.slane %v1771, 1
      %v1774 = vor.u32 %v1769, %v1773
      %v1776 = vshll.u32 %v1445, 16
      %v1778 = vrot.slane %v1776, 1
      %v1779 = vsel %vm868, %v1774, %v1778
      %v1780 = vshrl.u32 %v1445, 16
      %1782 = vrot.lane.b32.xlu0 %v1569, 64
      %v1783 = vpop.permute.xlu0 %1782
      %1784 = vrot.lane.b32.xlu0 %v1570, 64
      %v1785 = vpop.permute.xlu0 %1784
      %1786 = vrot.lane.b32.xlu0 %v1583, 64
      %v1787 = vpop.permute.xlu0 %1786
      %1788 = vrot.lane.b32.xlu0 %v1584, 64
      %v1789 = vpop.permute.xlu0 %1788
      %1790 = vrot.lane.b32.xlu0 %v1597, 64
      %v1791 = vpop.permute.xlu0 %1790
      %1792 = vrot.lane.b32.xlu0 %v1598, 64
      %v1793 = vpop.permute.xlu0 %1792
      %1794 = vrot.lane.b32.xlu0 %v1611, 64
      %v1795 = vpop.permute.xlu0 %1794
      %1796 = vrot.lane.b32.xlu0 %v1612, 64
      %v1797 = vpop.permute.xlu0 %1796
      %1798 = vrot.lane.b32.xlu0 %v1625, 64
      %v1799 = vpop.permute.xlu0 %1798
      %1800 = vrot.lane.b32.xlu0 %v1626, 64
      %v1801 = vpop.permute.xlu0 %1800
      %1802 = vrot.lane.b32.xlu0 %v1639, 64
      %v1803 = vpop.permute.xlu0 %1802
      %1804 = vrot.lane.b32.xlu0 %v1640, 64
      %v1805 = vpop.permute.xlu0 %1804
      %1806 = vrot.lane.b32.xlu0 %v1653, 64
      %v1807 = vpop.permute.xlu0 %1806
      %1808 = vrot.lane.b32.xlu0 %v1654, 64
      %v1809 = vpop.permute.xlu0 %1808
      %1810 = vrot.lane.b32.xlu0 %v1667, 64
      %v1811 = vpop.permute.xlu0 %1810
      %1812 = vrot.lane.b32.xlu0 %v1668, 64
      %v1813 = vpop.permute.xlu0 %1812
      %1814 = vrot.lane.b32.xlu0 %v1681, 64
      %v1815 = vpop.permute.xlu0 %1814
      %1816 = vrot.lane.b32.xlu0 %v1682, 64
      %v1817 = vpop.permute.xlu0 %1816
      %1818 = vrot.lane.b32.xlu0 %v1695, 64
      %v1819 = vpop.permute.xlu0 %1818
      %1820 = vrot.lane.b32.xlu0 %v1696, 64
      %v1821 = vpop.permute.xlu0 %1820
      %1822 = vrot.lane.b32.xlu0 %v1709, 64
      %v1823 = vpop.permute.xlu0 %1822
      %1824 = vrot.lane.b32.xlu0 %v1710, 64
      %v1825 = vpop.permute.xlu0 %1824
      %1826 = vrot.lane.b32.xlu0 %v1723, 64
      %v1827 = vpop.permute.xlu0 %1826
      %1828 = vrot.lane.b32.xlu0 %v1724, 64
      %v1829 = vpop.permute.xlu0 %1828
      %1830 = vrot.lane.b32.xlu0 %v1737, 64
      %v1831 = vpop.permute.xlu0 %1830
      %1832 = vrot.lane.b32.xlu0 %v1738, 64
      %v1833 = vpop.permute.xlu0 %1832
      %1834 = vrot.lane.b32.xlu0 %v1751, 64
      %v1835 = vpop.permute.xlu0 %1834
      %1836 = vrot.lane.b32.xlu0 %v1752, 64
      %v1837 = vpop.permute.xlu0 %1836
      %1838 = vrot.lane.b32.xlu0 %v1765, 64
      %v1839 = vpop.permute.xlu0 %1838
      %1840 = vrot.lane.b32.xlu0 %v1766, 64
      %v1841 = vpop.permute.xlu0 %1840
      %1842 = vrot.lane.b32.xlu0 %v1779, 64
      %v1843 = vpop.permute.xlu0 %1842
      %1844 = vrot.lane.b32.xlu0 %v1780, 64
      %v1845 = vpop.permute.xlu0 %1844
      %v1862 = vunpack.c.l.b16 %v611
      %v1863 = vunpack.c.l.b16 %v612
      %v1864 = vunpack.c.l.b16 %v613
      %v1865 = vunpack.c.l.b16 %v614
      %v1866 = vunpack.c.l.b16 %v615
      %v1867 = vunpack.c.l.b16 %v616
      %v1868 = vunpack.c.l.b16 %v617
      %v1869 = vunpack.c.l.b16 %v618
      %v1870 = vunpack.c.l.b16 %v619
      %v1871 = vunpack.c.l.b16 %v620
      %v1872 = vunpack.c.l.b16 %v621
      %v1873 = vunpack.c.l.b16 %v622
      %v1874 = vunpack.c.l.b16 %v623
      %v1875 = vunpack.c.l.b16 %v624
      %v1876 = vunpack.c.l.b16 %v625
      %v1877 = vunpack.c.l.b16 %v626
      %v1878 = vpack.c.b16 %v1862, %v1862
      %v1879 = vpack.c.b16 %v1863, %v1863
      %v1880 = vpack.c.b16 %v1864, %v1864
      %v1881 = vpack.c.b16 %v1865, %v1865
      %v1882 = vpack.c.b16 %v1866, %v1866
      %v1883 = vpack.c.b16 %v1867, %v1867
      %v1884 = vpack.c.b16 %v1868, %v1868
      %v1885 = vpack.c.b16 %v1869, %v1869
      %v1886 = vpack.c.b16 %v1870, %v1870
      %v1887 = vpack.c.b16 %v1871, %v1871
      %v1888 = vpack.c.b16 %v1872, %v1872
      %v1889 = vpack.c.b16 %v1873, %v1873
      %v1890 = vpack.c.b16 %v1874, %v1874
      %v1891 = vpack.c.b16 %v1875, %v1875
      %v1892 = vpack.c.b16 %v1876, %v1876
      %v1893 = vpack.c.b16 %v1877, %v1877
      %v1894 = vrot.slane %v1542, 1
      %v1895 = vrot.slane %v1878, 1
      %v1896 = vsel %vm1205, %v1894, %v1895
      %v1897 = vrot.slane %v1543, 1
      %v1898 = vrot.slane %v1879, 1
      %v1899 = vsel %vm1205, %v1897, %v1898
      %v1900 = vrot.slane %v1544, 1
      %v1901 = vrot.slane %v1880, 1
      %v1902 = vsel %vm1205, %v1900, %v1901
      %v1903 = vrot.slane %v1545, 1
      %v1904 = vrot.slane %v1881, 1
      %v1905 = vsel %vm1205, %v1903, %v1904
      %v1906 = vrot.slane %v1546, 1
      %v1907 = vrot.slane %v1882, 1
      %v1908 = vsel %vm1205, %v1906, %v1907
      %v1909 = vrot.slane %v1547, 1
      %v1910 = vrot.slane %v1883, 1
      %v1911 = vsel %vm1205, %v1909, %v1910
      %v1912 = vrot.slane %v1548, 1
      %v1913 = vrot.slane %v1884, 1
      %v1914 = vsel %vm1205, %v1912, %v1913
      %v1915 = vrot.slane %v1549, 1
      %v1916 = vrot.slane %v1885, 1
      %v1917 = vsel %vm1205, %v1915, %v1916
      %v1918 = vrot.slane %v1550, 1
      %v1919 = vrot.slane %v1886, 1
      %v1920 = vsel %vm1205, %v1918, %v1919
      %v1921 = vrot.slane %v1551, 1
      %v1922 = vrot.slane %v1887, 1
      %v1923 = vsel %vm1205, %v1921, %v1922
      %v1924 = vrot.slane %v1552, 1
      %v1925 = vrot.slane %v1888, 1
      %v1926 = vsel %vm1205, %v1924, %v1925
      %v1927 = vrot.slane %v1553, 1
      %v1928 = vrot.slane %v1889, 1
      %v1929 = vsel %vm1205, %v1927, %v1928
      %v1930 = vrot.slane %v1554, 1
      %v1931 = vrot.slane %v1890, 1
      %v1932 = vsel %vm1205, %v1930, %v1931
      %v1933 = vrot.slane %v1555, 1
      %v1934 = vrot.slane %v1891, 1
      %v1935 = vsel %vm1205, %v1933, %v1934
      %v1936 = vrot.slane %v1556, 1
      %v1937 = vrot.slane %v1892, 1
      %v1938 = vsel %vm1205, %v1936, %v1937
      %v1939 = vrot.slane %v1557, 1
      %v1940 = vrot.slane %v1893, 1
      %v1941 = vsel %vm1205, %v1939, %v1940
      %1942 = vrot.lane.b32.xlu0 %v1896, 80
      %v1943 = vpop.permute.xlu0 %1942
      %1944 = vrot.lane.b32.xlu0 %v1895, 80
      %v1945 = vpop.permute.xlu0 %1944
      %1946 = vrot.lane.b32.xlu0 %v1899, 80
      %v1947 = vpop.permute.xlu0 %1946
      %1948 = vrot.lane.b32.xlu0 %v1898, 80
      %v1949 = vpop.permute.xlu0 %1948
      %1950 = vrot.lane.b32.xlu0 %v1902, 80
      %v1951 = vpop.permute.xlu0 %1950
      %1952 = vrot.lane.b32.xlu0 %v1901, 80
      %v1953 = vpop.permute.xlu0 %1952
      %1954 = vrot.lane.b32.xlu0 %v1905, 80
      %v1955 = vpop.permute.xlu0 %1954
      %1956 = vrot.lane.b32.xlu0 %v1904, 80
      %v1957 = vpop.permute.xlu0 %1956
      %1958 = vrot.lane.b32.xlu0 %v1908, 80
      %v1959 = vpop.permute.xlu0 %1958
      %1960 = vrot.lane.b32.xlu0 %v1907, 80
      %v1961 = vpop.permute.xlu0 %1960
      %1962 = vrot.lane.b32.xlu0 %v1911, 80
      %v1963 = vpop.permute.xlu0 %1962
      %1964 = vrot.lane.b32.xlu0 %v1910, 80
      %v1965 = vpop.permute.xlu0 %1964
      %1966 = vrot.lane.b32.xlu0 %v1914, 80
      %v1967 = vpop.permute.xlu0 %1966
      %1968 = vrot.lane.b32.xlu0 %v1913, 80
      %v1969 = vpop.permute.xlu0 %1968
      %1970 = vrot.lane.b32.xlu0 %v1917, 80
      %v1971 = vpop.permute.xlu0 %1970
      %1972 = vrot.lane.b32.xlu0 %v1916, 80
      %v1973 = vpop.permute.xlu0 %1972
      %1974 = vrot.lane.b32.xlu0 %v1920, 80
      %v1975 = vpop.permute.xlu0 %1974
      %1976 = vrot.lane.b32.xlu0 %v1919, 80
      %v1977 = vpop.permute.xlu0 %1976
      %1978 = vrot.lane.b32.xlu0 %v1923, 80
      %v1979 = vpop.permute.xlu0 %1978
      %1980 = vrot.lane.b32.xlu0 %v1922, 80
      %v1981 = vpop.permute.xlu0 %1980
      %1982 = vrot.lane.b32.xlu0 %v1926, 80
      %v1983 = vpop.permute.xlu0 %1982
      %1984 = vrot.lane.b32.xlu0 %v1925, 80
      %v1985 = vpop.permute.xlu0 %1984
      %1986 = vrot.lane.b32.xlu0 %v1929, 80
      %v1987 = vpop.permute.xlu0 %1986
      %1988 = vrot.lane.b32.xlu0 %v1928, 80
      %v1989 = vpop.permute.xlu0 %1988
      %1990 = vrot.lane.b32.xlu0 %v1932, 80
      %v1991 = vpop.permute.xlu0 %1990
      %1992 = vrot.lane.b32.xlu0 %v1931, 80
      %v1993 = vpop.permute.xlu0 %1992
      %1994 = vrot.lane.b32.xlu0 %v1935, 80
      %v1995 = vpop.permute.xlu0 %1994
      %1996 = vrot.lane.b32.xlu0 %v1934, 80
      %v1997 = vpop.permute.xlu0 %1996
      %1998 = vrot.lane.b32.xlu0 %v1938, 80
      %v1999 = vpop.permute.xlu0 %1998
      %2000 = vrot.lane.b32.xlu0 %v1937, 80
      %v2001 = vpop.permute.xlu0 %2000
      %2002 = vrot.lane.b32.xlu0 %v1941, 80
      %v2003 = vpop.permute.xlu0 %2002
      %2004 = vrot.lane.b32.xlu0 %v1940, 80
      %v2005 = vpop.permute.xlu0 %2004
      %v2054 = vunpack.c.l.b16 %v628
      %v2055 = vunpack.c.l.b16 %v629
      %v2056 = vunpack.c.l.b16 %v630
      %v2057 = vunpack.c.l.b16 %v631
      %v2058 = vunpack.c.l.b16 %v632
      %v2059 = vunpack.c.l.b16 %v633
      %v2060 = vunpack.c.l.b16 %v634
      %v2061 = vunpack.c.l.b16 %v635
      %v2062 = vunpack.c.l.b16 %v636
      %v2063 = vunpack.c.l.b16 %v637
      %v2064 = vunpack.c.l.b16 %v638
      %v2065 = vunpack.c.l.b16 %v639
      %v2066 = vunpack.c.l.b16 %v640
      %v2067 = vunpack.c.l.b16 %v641
      %v2068 = vunpack.c.l.b16 %v642
      %v2069 = vunpack.c.l.b16 %v643
      %v2070 = vunpack.c.l.b16 %v644
      %v2071 = vunpack.c.l.b16 %v645
      %v2072 = vunpack.c.l.b16 %v646
      %v2073 = vunpack.c.l.b16 %v647
      %v2074 = vunpack.c.l.b16 %v648
      %v2075 = vunpack.c.l.b16 %v649
      %v2076 = vunpack.c.l.b16 %v650
      %v2077 = vunpack.c.l.b16 %v651
      %v2078 = vunpack.c.l.b16 %v652
      %v2079 = vunpack.c.l.b16 %v653
      %v2080 = vunpack.c.l.b16 %v654
      %v2081 = vunpack.c.l.b16 %v655
      %v2082 = vunpack.c.l.b16 %v656
      %v2083 = vunpack.c.l.b16 %v657
      %v2084 = vunpack.c.l.b16 %v658
      %v2085 = vunpack.c.l.b16 %v659
      %v2086 = vunpack.c.l.b16 %v660
      %v2087 = vunpack.c.l.b16 %v661
      %v2088 = vunpack.c.l.b16 %v662
      %v2089 = vunpack.c.l.b16 %v663
      %v2090 = vunpack.c.l.b16 %v664
      %v2091 = vunpack.c.l.b16 %v665
      %v2092 = vunpack.c.l.b16 %v666
      %v2093 = vunpack.c.l.b16 %v667
      %v2094 = vunpack.c.l.b16 %v668
      %v2095 = vunpack.c.l.b16 %v669
      %v2096 = vunpack.c.l.b16 %v670
      %v2097 = vunpack.c.l.b16 %v671
      %v2098 = vunpack.c.l.b16 %v672
      %v2099 = vunpack.c.l.b16 %v673
      %v2100 = vunpack.c.l.b16 %v674
      %v2101 = vunpack.c.l.b16 %v675
      %v2102 = vpack.c.b16 %v2055, %v2054
      %v2103 = vpack.c.b16 %v2056, %v2056
      %v2104 = vpack.c.b16 %v2058, %v2057
      %v2105 = vpack.c.b16 %v2059, %v2059
      %v2106 = vpack.c.b16 %v2061, %v2060
      %v2107 = vpack.c.b16 %v2062, %v2062
      %v2108 = vpack.c.b16 %v2064, %v2063
      %v2109 = vpack.c.b16 %v2065, %v2065
      %v2110 = vpack.c.b16 %v2067, %v2066
      %v2111 = vpack.c.b16 %v2068, %v2068
      %v2112 = vpack.c.b16 %v2070, %v2069
      %v2113 = vpack.c.b16 %v2071, %v2071
      %v2114 = vpack.c.b16 %v2073, %v2072
      %v2115 = vpack.c.b16 %v2074, %v2074
      %v2116 = vpack.c.b16 %v2076, %v2075
      %v2117 = vpack.c.b16 %v2077, %v2077
      %v2118 = vpack.c.b16 %v2079, %v2078
      %v2119 = vpack.c.b16 %v2080, %v2080
      %v2120 = vpack.c.b16 %v2082, %v2081
      %v2121 = vpack.c.b16 %v2083, %v2083
      %v2122 = vpack.c.b16 %v2085, %v2084
      %v2123 = vpack.c.b16 %v2086, %v2086
      %v2124 = vpack.c.b16 %v2088, %v2087
      %v2125 = vpack.c.b16 %v2089, %v2089
      %v2126 = vpack.c.b16 %v2091, %v2090
      %v2127 = vpack.c.b16 %v2092, %v2092
      %v2128 = vpack.c.b16 %v2094, %v2093
      %v2129 = vpack.c.b16 %v2095, %v2095
      %v2130 = vpack.c.b16 %v2097, %v2096
      %v2131 = vpack.c.b16 %v2098, %v2098
      %v2132 = vpack.c.b16 %v2100, %v2099
      %v2133 = vpack.c.b16 %v2101, %v2101
      %2134 = vrot.lane.b32.xlu0 %v2102, 96
      %v2135 = vpop.permute.xlu0 %2134
      %2136 = vrot.lane.b32.xlu0 %v2103, 96
      %v2137 = vpop.permute.xlu0 %2136
      %2138 = vrot.lane.b32.xlu0 %v2104, 96
      %v2139 = vpop.permute.xlu0 %2138
      %2140 = vrot.lane.b32.xlu0 %v2105, 96
      %v2141 = vpop.permute.xlu0 %2140
      %2142 = vrot.lane.b32.xlu0 %v2106, 96
      %v2143 = vpop.permute.xlu0 %2142
      %2144 = vrot.lane.b32.xlu0 %v2107, 96
      %v2145 = vpop.permute.xlu0 %2144
      %2146 = vrot.lane.b32.xlu0 %v2108, 96
      %v2147 = vpop.permute.xlu0 %2146
      %2148 = vrot.lane.b32.xlu0 %v2109, 96
      %v2149 = vpop.permute.xlu0 %2148
      %2150 = vrot.lane.b32.xlu0 %v2110, 96
      %v2151 = vpop.permute.xlu0 %2150
      %2152 = vrot.lane.b32.xlu0 %v2111, 96
      %v2153 = vpop.permute.xlu0 %2152
      %2154 = vrot.lane.b32.xlu0 %v2112, 96
      %v2155 = vpop.permute.xlu0 %2154
      %2156 = vrot.lane.b32.xlu0 %v2113, 96
      %v2157 = vpop.permute.xlu0 %2156
      %2158 = vrot.lane.b32.xlu0 %v2114, 96
      %v2159 = vpop.permute.xlu0 %2158
      %2160 = vrot.lane.b32.xlu0 %v2115, 96
      %v2161 = vpop.permute.xlu0 %2160
      %2162 = vrot.lane.b32.xlu0 %v2116, 96
      %v2163 = vpop.permute.xlu0 %2162
      %2164 = vrot.lane.b32.xlu0 %v2117, 96
      %v2165 = vpop.permute.xlu0 %2164
      %2166 = vrot.lane.b32.xlu0 %v2118, 96
      %v2167 = vpop.permute.xlu0 %2166
      %2168 = vrot.lane.b32.xlu0 %v2119, 96
      %v2169 = vpop.permute.xlu0 %2168
      %2170 = vrot.lane.b32.xlu0 %v2120, 96
      %v2171 = vpop.permute.xlu0 %2170
      %2172 = vrot.lane.b32.xlu0 %v2121, 96
      %v2173 = vpop.permute.xlu0 %2172
      %2174 = vrot.lane.b32.xlu0 %v2122, 96
      %v2175 = vpop.permute.xlu0 %2174
      %2176 = vrot.lane.b32.xlu0 %v2123, 96
      %v2177 = vpop.permute.xlu0 %2176
      %2178 = vrot.lane.b32.xlu0 %v2124, 96
      %v2179 = vpop.permute.xlu0 %2178
      %2180 = vrot.lane.b32.xlu0 %v2125, 96
      %v2181 = vpop.permute.xlu0 %2180
      %2182 = vrot.lane.b32.xlu0 %v2126, 96
      %v2183 = vpop.permute.xlu0 %2182
      %2184 = vrot.lane.b32.xlu0 %v2127, 96
      %v2185 = vpop.permute.xlu0 %2184
      %2186 = vrot.lane.b32.xlu0 %v2128, 96
      %v2187 = vpop.permute.xlu0 %2186
      %2188 = vrot.lane.b32.xlu0 %v2129, 96
      %v2189 = vpop.permute.xlu0 %2188
      %2190 = vrot.lane.b32.xlu0 %v2130, 96
      %v2191 = vpop.permute.xlu0 %2190
      %2192 = vrot.lane.b32.xlu0 %v2131, 96
      %v2193 = vpop.permute.xlu0 %2192
      %2194 = vrot.lane.b32.xlu0 %v2132, 96
      %v2195 = vpop.permute.xlu0 %2194
      %2196 = vrot.lane.b32.xlu0 %v2133, 96
      %v2197 = vpop.permute.xlu0 %2196
      %v2214 = vunpack.c.l.b16 %v676
      %v2215 = vunpack.c.l.b16 %v677
      %v2216 = vunpack.c.l.b16 %v678
      %v2217 = vunpack.c.l.b16 %v679
      %v2218 = vunpack.c.l.b16 %v680
      %v2219 = vunpack.c.l.b16 %v681
      %v2220 = vunpack.c.l.b16 %v682
      %v2221 = vunpack.c.l.b16 %v683
      %v2222 = vunpack.c.l.b16 %v684
      %v2223 = vunpack.c.l.b16 %v685
      %v2224 = vunpack.c.l.b16 %v686
      %v2225 = vunpack.c.l.b16 %v687
      %v2226 = vunpack.c.l.b16 %v688
      %v2227 = vunpack.c.l.b16 %v689
      %v2228 = vunpack.c.l.b16 %v690
      %v2229 = vunpack.c.l.b16 %v691
      %v2230 = vpack.c.b16 %v2055, %v2214
      %v2231 = vpack.c.b16 %v2058, %v2215
      %v2232 = vpack.c.b16 %v2061, %v2216
      %v2233 = vpack.c.b16 %v2064, %v2217
      %v2234 = vpack.c.b16 %v2067, %v2218
      %v2235 = vpack.c.b16 %v2070, %v2219
      %v2236 = vpack.c.b16 %v2073, %v2220
      %v2237 = vpack.c.b16 %v2076, %v2221
      %v2238 = vpack.c.b16 %v2079, %v2222
      %v2239 = vpack.c.b16 %v2082, %v2223
      %v2240 = vpack.c.b16 %v2085, %v2224
      %v2241 = vpack.c.b16 %v2088, %v2225
      %v2242 = vpack.c.b16 %v2091, %v2226
      %v2243 = vpack.c.b16 %v2094, %v2227
      %v2244 = vpack.c.b16 %v2097, %v2228
      %v2245 = vpack.c.b16 %v2100, %v2229
      %v2247 = vshrl.u32 %v2230, 16
      %v2249 = vshll.u32 %v2230, 16
      %v2251 = vrot.slane %v2249, 1
      %v2252 = vor.u32 %v2247, %v2251
      %v2254 = vshll.u32 %v2103, 16
      %v2256 = vrot.slane %v2254, 1
      %v2257 = vsel %vm868, %v2252, %v2256
      %v2258 = vshrl.u32 %v2103, 16
      %v2261 = vshrl.u32 %v2231, 16
      %v2263 = vshll.u32 %v2231, 16
      %v2265 = vrot.slane %v2263, 1
      %v2266 = vor.u32 %v2261, %v2265
      %v2268 = vshll.u32 %v2105, 16
      %v2270 = vrot.slane %v2268, 1
      %v2271 = vsel %vm868, %v2266, %v2270
      %v2272 = vshrl.u32 %v2105, 16
      %v2275 = vshrl.u32 %v2232, 16
      %v2277 = vshll.u32 %v2232, 16
      %v2279 = vrot.slane %v2277, 1
      %v2280 = vor.u32 %v2275, %v2279
      %v2282 = vshll.u32 %v2107, 16
      %v2284 = vrot.slane %v2282, 1
      %v2285 = vsel %vm868, %v2280, %v2284
      %v2286 = vshrl.u32 %v2107, 16
      %v2289 = vshrl.u32 %v2233, 16
      %v2291 = vshll.u32 %v2233, 16
      %v2293 = vrot.slane %v2291, 1
      %v2294 = vor.u32 %v2289, %v2293
      %v2296 = vshll.u32 %v2109, 16
      %v2298 = vrot.slane %v2296, 1
      %v2299 = vsel %vm868, %v2294, %v2298
      %v2300 = vshrl.u32 %v2109, 16
      %v2303 = vshrl.u32 %v2234, 16
      %v2305 = vshll.u32 %v2234, 16
      %v2307 = vrot.slane %v2305, 1
      %v2308 = vor.u32 %v2303, %v2307
      %v2310 = vshll.u32 %v2111, 16
      %v2312 = vrot.slane %v2310, 1
      %v2313 = vsel %vm868, %v2308, %v2312
      %v2314 = vshrl.u32 %v2111, 16
      %v2317 = vshrl.u32 %v2235, 16
      %v2319 = vshll.u32 %v2235, 16
      %v2321 = vrot.slane %v2319, 1
      %v2322 = vor.u32 %v2317, %v2321
      %v2324 = vshll.u32 %v2113, 16
      %v2326 = vrot.slane %v2324, 1
      %v2327 = vsel %vm868, %v2322, %v2326
      %v2328 = vshrl.u32 %v2113, 16
      %v2331 = vshrl.u32 %v2236, 16
      %v2333 = vshll.u32 %v2236, 16
      %v2335 = vrot.slane %v2333, 1
      %v2336 = vor.u32 %v2331, %v2335
      %v2338 = vshll.u32 %v2115, 16
      %v2340 = vrot.slane %v2338, 1
      %v2341 = vsel %vm868, %v2336, %v2340
      %v2342 = vshrl.u32 %v2115, 16
      %v2345 = vshrl.u32 %v2237, 16
      %v2347 = vshll.u32 %v2237, 16
      %v2349 = vrot.slane %v2347, 1
      %v2350 = vor.u32 %v2345, %v2349
      %v2352 = vshll.u32 %v2117, 16
      %v2354 = vrot.slane %v2352, 1
      %v2355 = vsel %vm868, %v2350, %v2354
      %v2356 = vshrl.u32 %v2117, 16
      %v2359 = vshrl.u32 %v2238, 16
      %v2361 = vshll.u32 %v2238, 16
      %v2363 = vrot.slane %v2361, 1
      %v2364 = vor.u32 %v2359, %v2363
      %v2366 = vshll.u32 %v2119, 16
      %v2368 = vrot.slane %v2366, 1
      %v2369 = vsel %vm868, %v2364, %v2368
      %v2370 = vshrl.u32 %v2119, 16
      %v2373 = vshrl.u32 %v2239, 16
      %v2375 = vshll.u32 %v2239, 16
      %v2377 = vrot.slane %v2375, 1
      %v2378 = vor.u32 %v2373, %v2377
      %v2380 = vshll.u32 %v2121, 16
      %v2382 = vrot.slane %v2380, 1
      %v2383 = vsel %vm868, %v2378, %v2382
      %v2384 = vshrl.u32 %v2121, 16
      %v2387 = vshrl.u32 %v2240, 16
      %v2389 = vshll.u32 %v2240, 16
      %v2391 = vrot.slane %v2389, 1
      %v2392 = vor.u32 %v2387, %v2391
      %v2394 = vshll.u32 %v2123, 16
      %v2396 = vrot.slane %v2394, 1
      %v2397 = vsel %vm868, %v2392, %v2396
      %v2398 = vshrl.u32 %v2123, 16
      %v2401 = vshrl.u32 %v2241, 16
      %v2403 = vshll.u32 %v2241, 16
      %v2405 = vrot.slane %v2403, 1
      %v2406 = vor.u32 %v2401, %v2405
      %v2408 = vshll.u32 %v2125, 16
      %v2410 = vrot.slane %v2408, 1
      %v2411 = vsel %vm868, %v2406, %v2410
      %v2412 = vshrl.u32 %v2125, 16
      %v2415 = vshrl.u32 %v2242, 16
      %v2417 = vshll.u32 %v2242, 16
      %v2419 = vrot.slane %v2417, 1
      %v2420 = vor.u32 %v2415, %v2419
      %v2422 = vshll.u32 %v2127, 16
      %v2424 = vrot.slane %v2422, 1
      %v2425 = vsel %vm868, %v2420, %v2424
      %v2426 = vshrl.u32 %v2127, 16
      %v2429 = vshrl.u32 %v2243, 16
      %v2431 = vshll.u32 %v2243, 16
      %v2433 = vrot.slane %v2431, 1
      %v2434 = vor.u32 %v2429, %v2433
      %v2436 = vshll.u32 %v2129, 16
      %v2438 = vrot.slane %v2436, 1
      %v2439 = vsel %vm868, %v2434, %v2438
      %v2440 = vshrl.u32 %v2129, 16
      %v2443 = vshrl.u32 %v2244, 16
      %v2445 = vshll.u32 %v2244, 16
      %v2447 = vrot.slane %v2445, 1
      %v2448 = vor.u32 %v2443, %v2447
      %v2450 = vshll.u32 %v2131, 16
      %v2452 = vrot.slane %v2450, 1
      %v2453 = vsel %vm868, %v2448, %v2452
      %v2454 = vshrl.u32 %v2131, 16
      %v2457 = vshrl.u32 %v2245, 16
      %v2459 = vshll.u32 %v2245, 16
      %v2461 = vrot.slane %v2459, 1
      %v2462 = vor.u32 %v2457, %v2461
      %v2464 = vshll.u32 %v2133, 16
      %v2466 = vrot.slane %v2464, 1
      %v2467 = vsel %vm868, %v2462, %v2466
      %v2468 = vshrl.u32 %v2133, 16
      %2470 = vrot.lane.b32.xlu0 %v2257, 112
      %v2471 = vpop.permute.xlu0 %2470
      %2472 = vrot.lane.b32.xlu0 %v2258, 112
      %v2473 = vpop.permute.xlu0 %2472
      %2474 = vrot.lane.b32.xlu0 %v2271, 112
      %v2475 = vpop.permute.xlu0 %2474
      %2476 = vrot.lane.b32.xlu0 %v2272, 112
      %v2477 = vpop.permute.xlu0 %2476
      %2478 = vrot.lane.b32.xlu0 %v2285, 112
      %v2479 = vpop.permute.xlu0 %2478
      %2480 = vrot.lane.b32.xlu0 %v2286, 112
      %v2481 = vpop.permute.xlu0 %2480
      %2482 = vrot.lane.b32.xlu0 %v2299, 112
      %v2483 = vpop.permute.xlu0 %2482
      %2484 = vrot.lane.b32.xlu0 %v2300, 112
      %v2485 = vpop.permute.xlu0 %2484
      %2486 = vrot.lane.b32.xlu0 %v2313, 112
      %v2487 = vpop.permute.xlu0 %2486
      %2488 = vrot.lane.b32.xlu0 %v2314, 112
      %v2489 = vpop.permute.xlu0 %2488
      %2490 = vrot.lane.b32.xlu0 %v2327, 112
      %v2491 = vpop.permute.xlu0 %2490
      %2492 = vrot.lane.b32.xlu0 %v2328, 112
      %v2493 = vpop.permute.xlu0 %2492
      %2494 = vrot.lane.b32.xlu0 %v2341, 112
      %v2495 = vpop.permute.xlu0 %2494
      %2496 = vrot.lane.b32.xlu0 %v2342, 112
      %v2497 = vpop.permute.xlu0 %2496
      %2498 = vrot.lane.b32.xlu0 %v2355, 112
      %v2499 = vpop.permute.xlu0 %2498
      %2500 = vrot.lane.b32.xlu0 %v2356, 112
      %v2501 = vpop.permute.xlu0 %2500
      %2502 = vrot.lane.b32.xlu0 %v2369, 112
      %v2503 = vpop.permute.xlu0 %2502
      %2504 = vrot.lane.b32.xlu0 %v2370, 112
      %v2505 = vpop.permute.xlu0 %2504
      %2506 = vrot.lane.b32.xlu0 %v2383, 112
      %v2507 = vpop.permute.xlu0 %2506
      %2508 = vrot.lane.b32.xlu0 %v2384, 112
      %v2509 = vpop.permute.xlu0 %2508
      %2510 = vrot.lane.b32.xlu0 %v2397, 112
      %v2511 = vpop.permute.xlu0 %2510
      %2512 = vrot.lane.b32.xlu0 %v2398, 112
      %v2513 = vpop.permute.xlu0 %2512
      %2514 = vrot.lane.b32.xlu0 %v2411, 112
      %v2515 = vpop.permute.xlu0 %2514
      %2516 = vrot.lane.b32.xlu0 %v2412, 112
      %v2517 = vpop.permute.xlu0 %2516
      %2518 = vrot.lane.b32.xlu0 %v2425, 112
      %v2519 = vpop.permute.xlu0 %2518
      %2520 = vrot.lane.b32.xlu0 %v2426, 112
      %v2521 = vpop.permute.xlu0 %2520
      %2522 = vrot.lane.b32.xlu0 %v2439, 112
      %v2523 = vpop.permute.xlu0 %2522
      %2524 = vrot.lane.b32.xlu0 %v2440, 112
      %v2525 = vpop.permute.xlu0 %2524
      %2526 = vrot.lane.b32.xlu0 %v2453, 112
      %v2527 = vpop.permute.xlu0 %2526
      %2528 = vrot.lane.b32.xlu0 %v2454, 112
      %v2529 = vpop.permute.xlu0 %2528
      %2530 = vrot.lane.b32.xlu0 %v2467, 112
      %v2531 = vpop.permute.xlu0 %2530
      %2532 = vrot.lane.b32.xlu0 %v2468, 112
      %v2533 = vpop.permute.xlu0 %2532
      %vm2534 = vcmask 130048
      %v2537 = vsel %vm2534, %v788, %v1094
      %v2539 = vsel %vm2534, %v789, %v1096
      %v2542 = vsel %vm2534, %v790, %v1098
      %v2544 = vsel %vm2534, %v791, %v1100
      %v2547 = vsel %vm2534, %v792, %v1102
      %v2549 = vsel %vm2534, %v793, %v1104
      %v2552 = vsel %vm2534, %v794, %v1106
      %v2554 = vsel %vm2534, %v795, %v1108
      %v2557 = vsel %vm2534, %v796, %v1110
      %v2559 = vsel %vm2534, %v797, %v1112
      %v2562 = vsel %vm2534, %v798, %v1114
      %v2564 = vsel %vm2534, %v799, %v1116
      %v2567 = vsel %vm2534, %v800, %v1118
      %v2569 = vsel %vm2534, %v801, %v1120
      %v2572 = vsel %vm2534, %v802, %v1122
      %v2574 = vsel %vm2534, %v803, %v1124
      %v2577 = vsel %vm2534, %v804, %v1126
      %v2579 = vsel %vm2534, %v805, %v1128
      %v2582 = vsel %vm2534, %v806, %v1130
      %v2584 = vsel %vm2534, %v807, %v1132
      %v2587 = vsel %vm2534, %v808, %v1134
      %v2589 = vsel %vm2534, %v809, %v1136
      %v2592 = vsel %vm2534, %v810, %v1138
      %v2594 = vsel %vm2534, %v811, %v1140
      %v2597 = vsel %vm2534, %v812, %v1142
      %v2599 = vsel %vm2534, %v813, %v1144
      %v2602 = vsel %vm2534, %v814, %v1146
      %v2604 = vsel %vm2534, %v815, %v1148
      %v2607 = vsel %vm2534, %v816, %v1150
      %v2609 = vsel %vm2534, %v817, %v1152
      %v2612 = vsel %vm2534, %v818, %v1154
      %v2614 = vsel %vm2534, %v819, %v1156
      %vm2615 = vcmask 261120
      %v2617 = vsel %vm2615, %v2537, %v1255
      %v2619 = vsel %vm2615, %v2539, %v1257
      %v2621 = vsel %vm2615, %v2542, %v1259
      %v2623 = vsel %vm2615, %v2544, %v1261
      %v2625 = vsel %vm2615, %v2547, %v1263
      %v2627 = vsel %vm2615, %v2549, %v1265
      %v2629 = vsel %vm2615, %v2552, %v1267
      %v2631 = vsel %vm2615, %v2554, %v1269
      %v2633 = vsel %vm2615, %v2557, %v1271
      %v2635 = vsel %vm2615, %v2559, %v1273
      %v2637 = vsel %vm2615, %v2562, %v1275
      %v2639 = vsel %vm2615, %v2564, %v1277
      %v2641 = vsel %vm2615, %v2567, %v1279
      %v2643 = vsel %vm2615, %v2569, %v1281
      %v2645 = vsel %vm2615, %v2572, %v1283
      %v2647 = vsel %vm2615, %v2574, %v1285
      %v2649 = vsel %vm2615, %v2577, %v1287
      %v2651 = vsel %vm2615, %v2579, %v1289
      %v2653 = vsel %vm2615, %v2582, %v1291
      %v2655 = vsel %vm2615, %v2584, %v1293
      %v2657 = vsel %vm2615, %v2587, %v1295
      %v2659 = vsel %vm2615, %v2589, %v1297
      %v2661 = vsel %vm2615, %v2592, %v1299
      %v2663 = vsel %vm2615, %v2594, %v1301
      %v2665 = vsel %vm2615, %v2597, %v1303
      %v2667 = vsel %vm2615, %v2599, %v1305
      %v2669 = vsel %vm2615, %v2602, %v1307
      %v2671 = vsel %vm2615, %v2604, %v1309
      %v2673 = vsel %vm2615, %v2607, %v1311
      %v2675 = vsel %vm2615, %v2609, %v1313
      %v2677 = vsel %vm2615, %v2612, %v1315
      %v2679 = vsel %vm2615, %v2614, %v1317
      %vm2680 = vcmask 392192
      %v2682 = vsel %vm2680, %v2617, %v1447
      %v2684 = vsel %vm2680, %v2619, %v1449
      %v2686 = vsel %vm2680, %v2621, %v1451
      %v2688 = vsel %vm2680, %v2623, %v1453
      %v2690 = vsel %vm2680, %v2625, %v1455
      %v2692 = vsel %vm2680, %v2627, %v1457
      %v2694 = vsel %vm2680, %v2629, %v1459
      %v2696 = vsel %vm2680, %v2631, %v1461
      %v2698 = vsel %vm2680, %v2633, %v1463
      %v2700 = vsel %vm2680, %v2635, %v1465
      %v2702 = vsel %vm2680, %v2637, %v1467
      %v2704 = vsel %vm2680, %v2639, %v1469
      %v2706 = vsel %vm2680, %v2641, %v1471
      %v2708 = vsel %vm2680, %v2643, %v1473
      %v2710 = vsel %vm2680, %v2645, %v1475
      %v2712 = vsel %vm2680, %v2647, %v1477
      %v2714 = vsel %vm2680, %v2649, %v1479
      %v2716 = vsel %vm2680, %v2651, %v1481
      %v2718 = vsel %vm2680, %v2653, %v1483
      %v2720 = vsel %vm2680, %v2655, %v1485
      %v2722 = vsel %vm2680, %v2657, %v1487
      %v2724 = vsel %vm2680, %v2659, %v1489
      %v2726 = vsel %vm2680, %v2661, %v1491
      %v2728 = vsel %vm2680, %v2663, %v1493
      %v2730 = vsel %vm2680, %v2665, %v1495
      %v2732 = vsel %vm2680, %v2667, %v1497
      %v2734 = vsel %vm2680, %v2669, %v1499
      %v2736 = vsel %vm2680, %v2671, %v1501
      %v2738 = vsel %vm2680, %v2673, %v1503
      %v2740 = vsel %vm2680, %v2675, %v1505
      %v2742 = vsel %vm2680, %v2677, %v1507
      %v2744 = vsel %vm2680, %v2679, %v1509
      %vm2745 = vcmask 523264
      %v2747 = vsel %vm2745, %v2682, %v1783
      %v2749 = vsel %vm2745, %v2684, %v1785
      %v2751 = vsel %vm2745, %v2686, %v1787
      %v2753 = vsel %vm2745, %v2688, %v1789
      %v2755 = vsel %vm2745, %v2690, %v1791
      %v2757 = vsel %vm2745, %v2692, %v1793
      %v2759 = vsel %vm2745, %v2694, %v1795
      %v2761 = vsel %vm2745, %v2696, %v1797
      %v2763 = vsel %vm2745, %v2698, %v1799
      %v2765 = vsel %vm2745, %v2700, %v1801
      %v2767 = vsel %vm2745, %v2702, %v1803
      %v2769 = vsel %vm2745, %v2704, %v1805
      %v2771 = vsel %vm2745, %v2706, %v1807
      %v2773 = vsel %vm2745, %v2708, %v1809
      %v2775 = vsel %vm2745, %v2710, %v1811
      %v2777 = vsel %vm2745, %v2712, %v1813
      %v2779 = vsel %vm2745, %v2714, %v1815
      %v2781 = vsel %vm2745, %v2716, %v1817
      %v2783 = vsel %vm2745, %v2718, %v1819
      %v2785 = vsel %vm2745, %v2720, %v1821
      %v2787 = vsel %vm2745, %v2722, %v1823
      %v2789 = vsel %vm2745, %v2724, %v1825
      %v2791 = vsel %vm2745, %v2726, %v1827
      %v2793 = vsel %vm2745, %v2728, %v1829
      %v2795 = vsel %vm2745, %v2730, %v1831
      %v2797 = vsel %vm2745, %v2732, %v1833
      %v2799 = vsel %vm2745, %v2734, %v1835
      %v2801 = vsel %vm2745, %v2736, %v1837
      %v2803 = vsel %vm2745, %v2738, %v1839
      %v2805 = vsel %vm2745, %v2740, %v1841
      %v2807 = vsel %vm2745, %v2742, %v1843
      %v2809 = vsel %vm2745, %v2744, %v1845
      %vm2810 = vcmask 654336
      %v2812 = vsel %vm2810, %v2747, %v1943
      %v2814 = vsel %vm2810, %v2749, %v1945
      %v2816 = vsel %vm2810, %v2751, %v1947
      %v2818 = vsel %vm2810, %v2753, %v1949
      %v2820 = vsel %vm2810, %v2755, %v1951
      %v2822 = vsel %vm2810, %v2757, %v1953
      %v2824 = vsel %vm2810, %v2759, %v1955
      %v2826 = vsel %vm2810, %v2761, %v1957
      %v2828 = vsel %vm2810, %v2763, %v1959
      %v2830 = vsel %vm2810, %v2765, %v1961
      %v2832 = vsel %vm2810, %v2767, %v1963
      %v2834 = vsel %vm2810, %v2769, %v1965
      %v2836 = vsel %vm2810, %v2771, %v1967
      %v2838 = vsel %vm2810, %v2773, %v1969
      %v2840 = vsel %vm2810, %v2775, %v1971
      %v2842 = vsel %vm2810, %v2777, %v1973
      %v2844 = vsel %vm2810, %v2779, %v1975
      %v2846 = vsel %vm2810, %v2781, %v1977
      %v2848 = vsel %vm2810, %v2783, %v1979
      %v2850 = vsel %vm2810, %v2785, %v1981
      %v2852 = vsel %vm2810, %v2787, %v1983
      %v2854 = vsel %vm2810, %v2789, %v1985
      %v2856 = vsel %vm2810, %v2791, %v1987
      %v2858 = vsel %vm2810, %v2793, %v1989
      %v2860 = vsel %vm2810, %v2795, %v1991
      %v2862 = vsel %vm2810, %v2797, %v1993
      %v2864 = vsel %vm2810, %v2799, %v1995
      %v2866 = vsel %vm2810, %v2801, %v1997
      %v2868 = vsel %vm2810, %v2803, %v1999
      %v2870 = vsel %vm2810, %v2805, %v2001
      %v2872 = vsel %vm2810, %v2807, %v2003
      %v2874 = vsel %vm2810, %v2809, %v2005
      %vm2875 = vcmask 785408
      %v2877 = vsel %vm2875, %v2812, %v2135
      %v2879 = vsel %vm2875, %v2814, %v2137
      %v2881 = vsel %vm2875, %v2816, %v2139
      %v2883 = vsel %vm2875, %v2818, %v2141
      %v2885 = vsel %vm2875, %v2820, %v2143
      %v2887 = vsel %vm2875, %v2822, %v2145
      %v2889 = vsel %vm2875, %v2824, %v2147
      %v2891 = vsel %vm2875, %v2826, %v2149
      %v2893 = vsel %vm2875, %v2828, %v2151
      %v2895 = vsel %vm2875, %v2830, %v2153
      %v2897 = vsel %vm2875, %v2832, %v2155
      %v2899 = vsel %vm2875, %v2834, %v2157
      %v2901 = vsel %vm2875, %v2836, %v2159
      %v2903 = vsel %vm2875, %v2838, %v2161
      %v2905 = vsel %vm2875, %v2840, %v2163
      %v2907 = vsel %vm2875, %v2842, %v2165
      %v2909 = vsel %vm2875, %v2844, %v2167
      %v2911 = vsel %vm2875, %v2846, %v2169
      %v2913 = vsel %vm2875, %v2848, %v2171
      %v2915 = vsel %vm2875, %v2850, %v2173
      %v2917 = vsel %vm2875, %v2852, %v2175
      %v2919 = vsel %vm2875, %v2854, %v2177
      %v2921 = vsel %vm2875, %v2856, %v2179
      %v2923 = vsel %vm2875, %v2858, %v2181
      %v2925 = vsel %vm2875, %v2860, %v2183
      %v2927 = vsel %vm2875, %v2862, %v2185
      %v2929 = vsel %vm2875, %v2864, %v2187
      %v2931 = vsel %vm2875, %v2866, %v2189
      %v2933 = vsel %vm2875, %v2868, %v2191
      %v2935 = vsel %vm2875, %v2870, %v2193
      %v2937 = vsel %vm2875, %v2872, %v2195
      %v2939 = vsel %vm2875, %v2874, %v2197
      %vm2940 = vcmask 916480
      %v2942 = vsel %vm2940, %v2877, %v2471
      %v2944 = vsel %vm2940, %v2879, %v2473
      %v2946 = vsel %vm2940, %v2881, %v2475
      %v2948 = vsel %vm2940, %v2883, %v2477
      %v2950 = vsel %vm2940, %v2885, %v2479
      %v2952 = vsel %vm2940, %v2887, %v2481
      %v2954 = vsel %vm2940, %v2889, %v2483
      %v2956 = vsel %vm2940, %v2891, %v2485
      %v2958 = vsel %vm2940, %v2893, %v2487
      %v2960 = vsel %vm2940, %v2895, %v2489
      %v2962 = vsel %vm2940, %v2897, %v2491
      %v2964 = vsel %vm2940, %v2899, %v2493
      %v2966 = vsel %vm2940, %v2901, %v2495
      %v2968 = vsel %vm2940, %v2903, %v2497
      %v2970 = vsel %vm2940, %v2905, %v2499
      %v2972 = vsel %vm2940, %v2907, %v2501
      %v2974 = vsel %vm2940, %v2909, %v2503
      %v2976 = vsel %vm2940, %v2911, %v2505
      %v2978 = vsel %vm2940, %v2913, %v2507
      %v2980 = vsel %vm2940, %v2915, %v2509
      %v2982 = vsel %vm2940, %v2917, %v2511
      %v2984 = vsel %vm2940, %v2919, %v2513
      %v2986 = vsel %vm2940, %v2921, %v2515
      %v2988 = vsel %vm2940, %v2923, %v2517
      %v2990 = vsel %vm2940, %v2925, %v2519
      %v2992 = vsel %vm2940, %v2927, %v2521
      %v2994 = vsel %vm2940, %v2929, %v2523
      %v2996 = vsel %vm2940, %v2931, %v2525
      %v2998 = vsel %vm2940, %v2933, %v2527
      %v3000 = vsel %vm2940, %v2935, %v2529
      %v3002 = vsel %vm2940, %v2937, %v2531
      %v3004 = vsel %vm2940, %v2939, %v2533
      %v3005 = vshrl.u32 %v2942, 16
      %v3007 = vshll.u32 %v2942, 16
      %v3009 = vrot.slane %v3007, 1
      %v3010 = vor.u32 %v3005, %v3009
      %v3011 = vshll.u32 %v2944, 16
      %v3013 = vrot.slane %v3011, 1
      %v3014 = vsel %vm868, %v3010, %v3013
      %v3015 = vshrl.u32 %v2946, 16
      %v3017 = vshll.u32 %v2946, 16
      %v3019 = vrot.slane %v3017, 1
      %v3020 = vor.u32 %v3015, %v3019
      %v3021 = vshll.u32 %v2948, 16
      %v3023 = vrot.slane %v3021, 1
      %v3024 = vsel %vm868, %v3020, %v3023
      %v3025 = vshrl.u32 %v2950, 16
      %v3027 = vshll.u32 %v2950, 16
      %v3029 = vrot.slane %v3027, 1
      %v3030 = vor.u32 %v3025, %v3029
      %v3031 = vshll.u32 %v2952, 16
      %v3033 = vrot.slane %v3031, 1
      %v3034 = vsel %vm868, %v3030, %v3033
      %v3035 = vshrl.u32 %v2954, 16
      %v3037 = vshll.u32 %v2954, 16
      %v3039 = vrot.slane %v3037, 1
      %v3040 = vor.u32 %v3035, %v3039
      %v3041 = vshll.u32 %v2956, 16
      %v3043 = vrot.slane %v3041, 1
      %v3044 = vsel %vm868, %v3040, %v3043
      %v3045 = vshrl.u32 %v2958, 16
      %v3047 = vshll.u32 %v2958, 16
      %v3049 = vrot.slane %v3047, 1
      %v3050 = vor.u32 %v3045, %v3049
      %v3051 = vshll.u32 %v2960, 16
      %v3053 = vrot.slane %v3051, 1
      %v3054 = vsel %vm868, %v3050, %v3053
      %v3055 = vshrl.u32 %v2962, 16
      %v3057 = vshll.u32 %v2962, 16
      %v3059 = vrot.slane %v3057, 1
      %v3060 = vor.u32 %v3055, %v3059
      %v3061 = vshll.u32 %v2964, 16
      %v3063 = vrot.slane %v3061, 1
      %v3064 = vsel %vm868, %v3060, %v3063
      %v3065 = vshrl.u32 %v2966, 16
      %v3067 = vshll.u32 %v2966, 16
      %v3069 = vrot.slane %v3067, 1
      %v3070 = vor.u32 %v3065, %v3069
      %v3071 = vshll.u32 %v2968, 16
      %v3073 = vrot.slane %v3071, 1
      %v3074 = vsel %vm868, %v3070, %v3073
      %v3075 = vshrl.u32 %v2970, 16
      %v3077 = vshll.u32 %v2970, 16
      %v3079 = vrot.slane %v3077, 1
      %v3080 = vor.u32 %v3075, %v3079
      %v3081 = vshll.u32 %v2972, 16
      %v3083 = vrot.slane %v3081, 1
      %v3084 = vsel %vm868, %v3080, %v3083
      %v3085 = vshrl.u32 %v2974, 16
      %v3087 = vshll.u32 %v2974, 16
      %v3089 = vrot.slane %v3087, 1
      %v3090 = vor.u32 %v3085, %v3089
      %v3091 = vshll.u32 %v2976, 16
      %v3093 = vrot.slane %v3091, 1
      %v3094 = vsel %vm868, %v3090, %v3093
      %v3095 = vshrl.u32 %v2978, 16
      %v3097 = vshll.u32 %v2978, 16
      %v3099 = vrot.slane %v3097, 1
      %v3100 = vor.u32 %v3095, %v3099
      %v3101 = vshll.u32 %v2980, 16
      %v3103 = vrot.slane %v3101, 1
      %v3104 = vsel %vm868, %v3100, %v3103
      %v3105 = vshrl.u32 %v2982, 16
      %v3107 = vshll.u32 %v2982, 16
      %v3109 = vrot.slane %v3107, 1
      %v3110 = vor.u32 %v3105, %v3109
      %v3111 = vshll.u32 %v2984, 16
      %v3113 = vrot.slane %v3111, 1
      %v3114 = vsel %vm868, %v3110, %v3113
      %v3115 = vshrl.u32 %v2986, 16
      %v3117 = vshll.u32 %v2986, 16
      %v3119 = vrot.slane %v3117, 1
      %v3120 = vor.u32 %v3115, %v3119
      %v3121 = vshll.u32 %v2988, 16
      %v3123 = vrot.slane %v3121, 1
      %v3124 = vsel %vm868, %v3120, %v3123
      %v3125 = vshrl.u32 %v2990, 16
      %v3127 = vshll.u32 %v2990, 16
      %v3129 = vrot.slane %v3127, 1
      %v3130 = vor.u32 %v3125, %v3129
      %v3131 = vshll.u32 %v2992, 16
      %v3133 = vrot.slane %v3131, 1
      %v3134 = vsel %vm868, %v3130, %v3133
      %v3135 = vshrl.u32 %v2994, 16
      %v3137 = vshll.u32 %v2994, 16
      %v3139 = vrot.slane %v3137, 1
      %v3140 = vor.u32 %v3135, %v3139
      %v3141 = vshll.u32 %v2996, 16
      %v3143 = vrot.slane %v3141, 1
      %v3144 = vsel %vm868, %v3140, %v3143
      %v3145 = vshrl.u32 %v2998, 16
      %v3147 = vshll.u32 %v2998, 16
      %v3149 = vrot.slane %v3147, 1
      %v3150 = vor.u32 %v3145, %v3149
      %v3151 = vshll.u32 %v3000, 16
      %v3153 = vrot.slane %v3151, 1
      %v3154 = vsel %vm868, %v3150, %v3153
      %v3155 = vshrl.u32 %v3002, 16
      %v3157 = vshll.u32 %v3002, 16
      %v3159 = vrot.slane %v3157, 1
      %v3160 = vor.u32 %v3155, %v3159
      %v3161 = vshll.u32 %v3004, 16
      %v3163 = vrot.slane %v3161, 1
      %v3164 = vsel %vm868, %v3160, %v3163
      %v3165 = vunpack.c.l.b16 %v3014
      %v3166 = vunpack.c.h.b16 %v3014
      %v3167 = vunpack.c.l.b16 %v3024
      %v3168 = vunpack.c.h.b16 %v3024
      %v3169 = vunpack.c.l.b16 %v3034
      %v3170 = vunpack.c.h.b16 %v3034
      %v3171 = vunpack.c.l.b16 %v3044
      %v3172 = vunpack.c.h.b16 %v3044
      %v3173 = vunpack.c.l.b16 %v3054
      %v3174 = vunpack.c.h.b16 %v3054
      %v3175 = vunpack.c.l.b16 %v3064
      %v3176 = vunpack.c.h.b16 %v3064
      %v3177 = vunpack.c.l.b16 %v3074
      %v3178 = vunpack.c.h.b16 %v3074
      %v3179 = vunpack.c.l.b16 %v3084
      %v3180 = vunpack.c.h.b16 %v3084
      %v3181 = vunpack.c.l.b16 %v3094
      %v3182 = vunpack.c.h.b16 %v3094
      %v3183 = vunpack.c.l.b16 %v3104
      %v3184 = vunpack.c.h.b16 %v3104
      %v3185 = vunpack.c.l.b16 %v3114
      %v3186 = vunpack.c.h.b16 %v3114
      %v3187 = vunpack.c.l.b16 %v3124
      %v3188 = vunpack.c.h.b16 %v3124
      %v3189 = vunpack.c.l.b16 %v3134
      %v3190 = vunpack.c.h.b16 %v3134
      %v3191 = vunpack.c.l.b16 %v3144
      %v3192 = vunpack.c.h.b16 %v3144
      %v3193 = vunpack.c.l.b16 %v3154
      %v3194 = vunpack.c.h.b16 %v3154
      %v3195 = vunpack.c.l.b16 %v3164
      %v3196 = vunpack.c.h.b16 %v3164
      %v3197 = vpack.c.b16 %v3165, %v3165
      %v3198 = vpack.c.b16 %v3166, %v3166
      %v3199 = vpack.c.b16 %v3167, %v3167
      %v3200 = vpack.c.b16 %v3168, %v3168
      %v3201 = vpack.c.b16 %v3169, %v3169
      %v3202 = vpack.c.b16 %v3170, %v3170
      %v3203 = vpack.c.b16 %v3171, %v3171
      %v3204 = vpack.c.b16 %v3172, %v3172
      %v3205 = vpack.c.b16 %v3173, %v3173
      %v3206 = vpack.c.b16 %v3174, %v3174
      %v3207 = vpack.c.b16 %v3175, %v3175
      %v3208 = vpack.c.b16 %v3176, %v3176
      %v3209 = vpack.c.b16 %v3177, %v3177
      %v3210 = vpack.c.b16 %v3178, %v3178
      %v3211 = vpack.c.b16 %v3179, %v3179
      %v3212 = vpack.c.b16 %v3180, %v3180
      %v3213 = vpack.c.b16 %v3181, %v3181
      %v3214 = vpack.c.b16 %v3182, %v3182
      %v3215 = vpack.c.b16 %v3183, %v3183
      %v3216 = vpack.c.b16 %v3184, %v3184
      %v3217 = vpack.c.b16 %v3185, %v3185
      %v3218 = vpack.c.b16 %v3186, %v3186
      %v3219 = vpack.c.b16 %v3187, %v3187
      %v3220 = vpack.c.b16 %v3188, %v3188
      %v3221 = vpack.c.b16 %v3189, %v3189
      %v3222 = vpack.c.b16 %v3190, %v3190
      %v3223 = vpack.c.b16 %v3191, %v3191
      %v3224 = vpack.c.b16 %v3192, %v3192
      %v3225 = vpack.c.b16 %v3193, %v3193
      %v3226 = vpack.c.b16 %v3194, %v3194
      %v3227 = vpack.c.b16 %v3195, %v3195
      %v3228 = vpack.c.b16 %v3196, %v3196
      %3261 = vst [vmem:[#allocation3] sm:$0xf] %v3197
      %3262 = vst [vmem:[#allocation3 + $0xc] sm:$0xf] %v3198
      %3263 = vst [vmem:[#allocation3 + $0x18] sm:$0xf] %v3199
      %3264 = vst [vmem:[#allocation3 + $0x24] sm:$0xf] %v3200
      %3265 = vst [vmem:[#allocation3 + $0x30] sm:$0xf] %v3201
      %3266 = vst [vmem:[#allocation3 + $0x3c] sm:$0xf] %v3202
      %3267 = vst [vmem:[#allocation3 + $0x48] sm:$0xf] %v3203
      %3268 = vst [vmem:[#allocation3 + $0x54] sm:$0xf] %v3204
      %3269 = vst [vmem:[#allocation3 + $0x60] sm:$0xf] %v3205
      %3270 = vst [vmem:[#allocation3 + $0x6c] sm:$0xf] %v3206
      %3271 = vst [vmem:[#allocation3 + $0x78] sm:$0xf] %v3207
      %3272 = vst [vmem:[#allocation3 + $0x84] sm:$0xf] %v3208
      %3273 = vst [vmem:[#allocation3 + $0x90] sm:$0xf] %v3209
      %3274 = vst [vmem:[#allocation3 + $0x9c] sm:$0xf] %v3210
      %3275 = vst [vmem:[#allocation3 + $0xa8] sm:$0xf] %v3211
      %3276 = vst [vmem:[#allocation3 + $0xb4] sm:$0xf] %v3212
      %3277 = vst [vmem:[#allocation3 + $0xc0] sm:$0xf] %v3213
      %3278 = vst [vmem:[#allocation3 + $0xcc] sm:$0xf] %v3214
      %3279 = vst [vmem:[#allocation3 + $0xd8] sm:$0xf] %v3215
      %3280 = vst [vmem:[#allocation3 + $0xe4] sm:$0xf] %v3216
      %3281 = vst [vmem:[#allocation3 + $0xf0] sm:$0xf] %v3217
      %3282 = vst [vmem:[#allocation3 + $0xfc] sm:$0xf] %v3218
      %3283 = vst [vmem:[#allocation3 + $0x108] sm:$0xf] %v3219
      %3284 = vst [vmem:[#allocation3 + $0x114] sm:$0xf] %v3220
      %3285 = vst [vmem:[#allocation3 + $0x120] sm:$0xf] %v3221
      %3286 = vst [vmem:[#allocation3 + $0x12c] sm:$0xf] %v3222
      %3287 = vst [vmem:[#allocation3 + $0x138] sm:$0xf] %v3223
      %3288 = vst [vmem:[#allocation3 + $0x144] sm:$0xf] %v3224
      %3289 = vst [vmem:[#allocation3 + $0x150] sm:$0xf] %v3225
      %3290 = vst [vmem:[#allocation3 + $0x15c] sm:$0xf] %v3226
      %3291 = vst [vmem:[#allocation3 + $0x168] sm:$0xf] %v3227
      %3292 = vst [vmem:[#allocation3 + $0x174] sm:$0xf] %v3228
      %v3293 = vld [vmem:[%s627] sm:$0xe]
      %v3294 = vld [vmem:[%s627 + $0x4] sm:$0xf]
      %v3295 = vld [vmem:[%s627 + $0x8] sm:$0x3]
      %v3296 = vld [vmem:[%s627 + $0xc] sm:$0xe]
      %v3297 = vld [vmem:[%s627 + $0x10] sm:$0xf]
      %v3298 = vld [vmem:[%s627 + $0x14] sm:$0x3]
      %v3299 = vld [vmem:[%s627 + $0x18] sm:$0xe]
      %v3300 = vld [vmem:[%s627 + $0x1c] sm:$0xf]
      %v3301 = vld [vmem:[%s627 + $0x20] sm:$0x3]
      %v3302 = vld [vmem:[%s627 + $0x24] sm:$0xe]
      %v3303 = vld [vmem:[%s627 + $0x28] sm:$0xf]
      %v3304 = vld [vmem:[%s627 + $0x2c] sm:$0x3]
      %v3305 = vld [vmem:[%s627 + $0x30] sm:$0xe]
      %v3306 = vld [vmem:[%s627 + $0x34] sm:$0xf]
      %v3307 = vld [vmem:[%s627 + $0x38] sm:$0x3]
      %v3308 = vld [vmem:[%s627 + $0x3c] sm:$0xe]
      %v3309 = vld [vmem:[%s627 + $0x40] sm:$0xf]
      %v3310 = vld [vmem:[%s627 + $0x44] sm:$0x3]
      %v3311 = vld [vmem:[%s627 + $0x48] sm:$0xe]
      %v3312 = vld [vmem:[%s627 + $0x4c] sm:$0xf]
      %v3313 = vld [vmem:[%s627 + $0x50] sm:$0x3]
      %v3314 = vld [vmem:[%s627 + $0x54] sm:$0xe]
      %v3315 = vld [vmem:[%s627 + $0x58] sm:$0xf]
      %v3316 = vld [vmem:[%s627 + $0x5c] sm:$0x3]
      %v3317 = vld [vmem:[%s627 + $0x60] sm:$0xe]
      %v3318 = vld [vmem:[%s627 + $0x64] sm:$0xf]
      %v3319 = vld [vmem:[%s627 + $0x68] sm:$0x3]
      %v3320 = vld [vmem:[%s627 + $0x6c] sm:$0xe]
      %v3321 = vld [vmem:[%s627 + $0x70] sm:$0xf]
      %v3322 = vld [vmem:[%s627 + $0x74] sm:$0x3]
      %v3323 = vld [vmem:[%s627 + $0x78] sm:$0xe]
      %v3324 = vld [vmem:[%s627 + $0x7c] sm:$0xf]
      %v3325 = vld [vmem:[%s627 + $0x80] sm:$0x3]
      %v3326 = vld [vmem:[%s627 + $0x84] sm:$0xe]
      %v3327 = vld [vmem:[%s627 + $0x88] sm:$0xf]
      %v3328 = vld [vmem:[%s627 + $0x8c] sm:$0x3]
      %v3329 = vld [vmem:[%s627 + $0x90] sm:$0xe]
      %v3330 = vld [vmem:[%s627 + $0x94] sm:$0xf]
      %v3331 = vld [vmem:[%s627 + $0x98] sm:$0x3]
      %v3332 = vld [vmem:[%s627 + $0x9c] sm:$0xe]
      %v3333 = vld [vmem:[%s627 + $0xa0] sm:$0xf]
      %v3334 = vld [vmem:[%s627 + $0xa4] sm:$0x3]
      %v3335 = vld [vmem:[%s627 + $0xa8] sm:$0xe]
      %v3336 = vld [vmem:[%s627 + $0xac] sm:$0xf]
      %v3337 = vld [vmem:[%s627 + $0xb0] sm:$0x3]
      %v3338 = vld [vmem:[%s627 + $0xb4] sm:$0xe]
      %v3339 = vld [vmem:[%s627 + $0xb8] sm:$0xf]
      %v3340 = vld [vmem:[%s627 + $0xbc] sm:$0x3]
      %v3341 = vld [vmem:[#allocation2] sm:$0xf]
      %v3342 = vld [vmem:[#allocation2 + $0x4] sm:$0xf]
      %v3343 = vld [vmem:[#allocation2 + $0xc] sm:$0xf]
      %v3344 = vld [vmem:[#allocation2 + $0x10] sm:$0xf]
      %v3345 = vld [vmem:[#allocation2 + $0x18] sm:$0xf]
      %v3346 = vld [vmem:[#allocation2 + $0x1c] sm:$0xf]
      %v3347 = vld [vmem:[#allocation2 + $0x24] sm:$0xf]
      %v3348 = vld [vmem:[#allocation2 + $0x28] sm:$0xf]
      %v3349 = vld [vmem:[#allocation2 + $0x30] sm:$0xf]
      %v3350 = vld [vmem:[#allocation2 + $0x34] sm:$0xf]
      %v3351 = vld [vmem:[#allocation2 + $0x3c] sm:$0xf]
      %v3352 = vld [vmem:[#allocation2 + $0x40] sm:$0xf]
      %v3353 = vld [vmem:[#allocation2 + $0x48] sm:$0xf]
      %v3354 = vld [vmem:[#allocation2 + $0x4c] sm:$0xf]
      %v3355 = vld [vmem:[#allocation2 + $0x54] sm:$0xf]
      %v3356 = vld [vmem:[#allocation2 + $0x58] sm:$0xf]
      %v3357 = vld [vmem:[#allocation2 + $0x60] sm:$0xf]
      %v3358 = vld [vmem:[#allocation2 + $0x64] sm:$0xf]
      %v3359 = vld [vmem:[#allocation2 + $0x6c] sm:$0xf]
      %v3360 = vld [vmem:[#allocation2 + $0x70] sm:$0xf]
      %v3361 = vld [vmem:[#allocation2 + $0x78] sm:$0xf]
      %v3362 = vld [vmem:[#allocation2 + $0x7c] sm:$0xf]
      %v3363 = vld [vmem:[#allocation2 + $0x84] sm:$0xf]
      %v3364 = vld [vmem:[#allocation2 + $0x88] sm:$0xf]
      %v3365 = vld [vmem:[#allocation2 + $0x90] sm:$0xf]
      %v3366 = vld [vmem:[#allocation2 + $0x94] sm:$0xf]
      %v3367 = vld [vmem:[#allocation2 + $0x9c] sm:$0xf]
      %v3368 = vld [vmem:[#allocation2 + $0xa0] sm:$0xf]
      %v3369 = vld [vmem:[#allocation2 + $0xa8] sm:$0xf]
      %v3370 = vld [vmem:[#allocation2 + $0xac] sm:$0xf]
      %v3371 = vld [vmem:[#allocation2 + $0xb4] sm:$0xf]
      %v3372 = vld [vmem:[#allocation2 + $0xb8] sm:$0xf]
      %v3373 = vld [vmem:[#allocation2] sm:$0xe]
      %v3374 = vld [vmem:[#allocation2 + $0x8] sm:$0x1]
      %v3375 = vld [vmem:[#allocation2 + $0xc] sm:$0xe]
      %v3376 = vld [vmem:[#allocation2 + $0x14] sm:$0x1]
      %v3377 = vld [vmem:[#allocation2 + $0x18] sm:$0xe]
      %v3378 = vld [vmem:[#allocation2 + $0x20] sm:$0x1]
      %v3379 = vld [vmem:[#allocation2 + $0x24] sm:$0xe]
      %v3380 = vld [vmem:[#allocation2 + $0x2c] sm:$0x1]
      %v3381 = vld [vmem:[#allocation2 + $0x30] sm:$0xe]
      %v3382 = vld [vmem:[#allocation2 + $0x38] sm:$0x1]
      %v3383 = vld [vmem:[#allocation2 + $0x3c] sm:$0xe]
      %v3384 = vld [vmem:[#allocation2 + $0x44] sm:$0x1]
      %v3385 = vld [vmem:[#allocation2 + $0x48] sm:$0xe]
      %v3386 = vld [vmem:[#allocation2 + $0x50] sm:$0x1]
      %v3387 = vld [vmem:[#allocation2 + $0x54] sm:$0xe]
      %v3388 = vld [vmem:[#allocation2 + $0x5c] sm:$0x1]
      %v3389 = vld [vmem:[#allocation2 + $0x60] sm:$0xe]
      %v3390 = vld [vmem:[#allocation2 + $0x68] sm:$0x1]
      %v3391 = vld [vmem:[#allocation2 + $0x6c] sm:$0xe]
      %v3392 = vld [vmem:[#allocation2 + $0x74] sm:$0x1]
      %v3393 = vld [vmem:[#allocation2 + $0x78] sm:$0xe]
      %v3394 = vld [vmem:[#allocation2 + $0x80] sm:$0x1]
      %v3395 = vld [vmem:[#allocation2 + $0x84] sm:$0xe]
      %v3396 = vld [vmem:[#allocation2 + $0x8c] sm:$0x1]
      %v3397 = vld [vmem:[#allocation2 + $0x90] sm:$0xe]
      %v3398 = vld [vmem:[#allocation2 + $0x98] sm:$0x1]
      %v3399 = vld [vmem:[#allocation2 + $0x9c] sm:$0xe]
      %v3400 = vld [vmem:[#allocation2 + $0xa4] sm:$0x1]
      %v3401 = vld [vmem:[#allocation2 + $0xa8] sm:$0xe]
      %v3402 = vld [vmem:[#allocation2 + $0xb0] sm:$0x1]
      %v3403 = vld [vmem:[#allocation2 + $0xb4] sm:$0xe]
      %v3404 = vld [vmem:[#allocation2 + $0xbc] sm:$0x1]
      %v3405 = vld [vmem:[#allocation2] sm:$0xc]
      %v3406 = vld [vmem:[#allocation2 + $0x8] sm:$0x3]
      %v3407 = vld [vmem:[#allocation2 + $0xc] sm:$0xc]
      %v3408 = vld [vmem:[#allocation2 + $0x14] sm:$0x3]
      %v3409 = vld [vmem:[#allocation2 + $0x18] sm:$0xc]
      %v3410 = vld [vmem:[#allocation2 + $0x20] sm:$0x3]
      %v3411 = vld [vmem:[#allocation2 + $0x24] sm:$0xc]
      %v3412 = vld [vmem:[#allocation2 + $0x2c] sm:$0x3]
      %v3413 = vld [vmem:[#allocation2 + $0x30] sm:$0xc]
      %v3414 = vld [vmem:[#allocation2 + $0x38] sm:$0x3]
      %v3415 = vld [vmem:[#allocation2 + $0x3c] sm:$0xc]
      %v3416 = vld [vmem:[#allocation2 + $0x44] sm:$0x3]
      %v3417 = vld [vmem:[#allocation2 + $0x48] sm:$0xc]
      %v3418 = vld [vmem:[#allocation2 + $0x50] sm:$0x3]
      %v3419 = vld [vmem:[#allocation2 + $0x54] sm:$0xc]
      %v3420 = vld [vmem:[#allocation2 + $0x5c] sm:$0x3]
      %v3421 = vld [vmem:[#allocation2 + $0x60] sm:$0xc]
      %v3422 = vld [vmem:[#allocation2 + $0x68] sm:$0x3]
      %v3423 = vld [vmem:[#allocation2 + $0x6c] sm:$0xc]
      %v3424 = vld [vmem:[#allocation2 + $0x74] sm:$0x3]
      %v3425 = vld [vmem:[#allocation2 + $0x78] sm:$0xc]
      %v3426 = vld [vmem:[#allocation2 + $0x80] sm:$0x3]
      %v3427 = vld [vmem:[#allocation2 + $0x84] sm:$0xc]
      %v3428 = vld [vmem:[#allocation2 + $0x8c] sm:$0x3]
      %v3429 = vld [vmem:[#allocation2 + $0x90] sm:$0xc]
      %v3430 = vld [vmem:[#allocation2 + $0x98] sm:$0x3]
      %v3431 = vld [vmem:[#allocation2 + $0x9c] sm:$0xc]
      %v3432 = vld [vmem:[#allocation2 + $0xa4] sm:$0x3]
      %v3433 = vld [vmem:[#allocation2 + $0xa8] sm:$0xc]
      %v3434 = vld [vmem:[#allocation2 + $0xb0] sm:$0x3]
      %v3435 = vld [vmem:[#allocation2 + $0xb4] sm:$0xc]
      %v3436 = vld [vmem:[#allocation2 + $0xbc] sm:$0x3]
      %v3437 = vld [vmem:[%s187] sm:$0xf]
      %v3438 = vld [vmem:[%s187 + $0x4] sm:$0xf]
      %v3439 = vld [vmem:[%s187 + $0xc] sm:$0xf]
      %v3440 = vld [vmem:[%s187 + $0x10] sm:$0xf]
      %v3441 = vld [vmem:[%s187 + $0x18] sm:$0xf]
      %v3442 = vld [vmem:[%s187 + $0x1c] sm:$0xf]
      %v3443 = vld [vmem:[%s187 + $0x24] sm:$0xf]
      %v3444 = vld [vmem:[%s187 + $0x28] sm:$0xf]
      %v3445 = vld [vmem:[%s187 + $0x30] sm:$0xf]
      %v3446 = vld [vmem:[%s187 + $0x34] sm:$0xf]
      %v3447 = vld [vmem:[%s187 + $0x3c] sm:$0xf]
      %v3448 = vld [vmem:[%s187 + $0x40] sm:$0xf]
      %v3449 = vld [vmem:[%s187 + $0x48] sm:$0xf]
      %v3450 = vld [vmem:[%s187 + $0x4c] sm:$0xf]
      %v3451 = vld [vmem:[%s187 + $0x54] sm:$0xf]
      %v3452 = vld [vmem:[%s187 + $0x58] sm:$0xf]
      %v3453 = vld [vmem:[%s187 + $0x60] sm:$0xf]
      %v3454 = vld [vmem:[%s187 + $0x64] sm:$0xf]
      %v3455 = vld [vmem:[%s187 + $0x6c] sm:$0xf]
      %v3456 = vld [vmem:[%s187 + $0x70] sm:$0xf]
      %v3457 = vld [vmem:[%s187 + $0x78] sm:$0xf]
      %v3458 = vld [vmem:[%s187 + $0x7c] sm:$0xf]
      %v3459 = vld [vmem:[%s187 + $0x84] sm:$0xf]
      %v3460 = vld [vmem:[%s187 + $0x88] sm:$0xf]
      %v3461 = vld [vmem:[%s187 + $0x90] sm:$0xf]
      %v3462 = vld [vmem:[%s187 + $0x94] sm:$0xf]
      %v3463 = vld [vmem:[%s187 + $0x9c] sm:$0xf]
      %v3464 = vld [vmem:[%s187 + $0xa0] sm:$0xf]
      %v3465 = vld [vmem:[%s187 + $0xa8] sm:$0xf]
      %v3466 = vld [vmem:[%s187 + $0xac] sm:$0xf]
      %v3467 = vld [vmem:[%s187 + $0xb4] sm:$0xf]
      %v3468 = vld [vmem:[%s187 + $0xb8] sm:$0xf]
      %v3469 = vld [vmem:[%s187] sm:$0xe]
      %v3470 = vld [vmem:[%s187 + $0x8] sm:$0x1]
      %v3471 = vld [vmem:[%s187 + $0xc] sm:$0xe]
      %v3472 = vld [vmem:[%s187 + $0x14] sm:$0x1]
      %v3473 = vld [vmem:[%s187 + $0x18] sm:$0xe]
      %v3474 = vld [vmem:[%s187 + $0x20] sm:$0x1]
      %v3475 = vld [vmem:[%s187 + $0x24] sm:$0xe]
      %v3476 = vld [vmem:[%s187 + $0x2c] sm:$0x1]
      %v3477 = vld [vmem:[%s187 + $0x30] sm:$0xe]
      %v3478 = vld [vmem:[%s187 + $0x38] sm:$0x1]
      %v3479 = vld [vmem:[%s187 + $0x3c] sm:$0xe]
      %v3480 = vld [vmem:[%s187 + $0x44] sm:$0x1]
      %v3481 = vld [vmem:[%s187 + $0x48] sm:$0xe]
      %v3482 = vld [vmem:[%s187 + $0x50] sm:$0x1]
      %v3483 = vld [vmem:[%s187 + $0x54] sm:$0xe]
      %v3484 = vld [vmem:[%s187 + $0x5c] sm:$0x1]
      %v3485 = vld [vmem:[%s187 + $0x60] sm:$0xe]
      %v3486 = vld [vmem:[%s187 + $0x68] sm:$0x1]
      %v3487 = vld [vmem:[%s187 + $0x6c] sm:$0xe]
      %v3488 = vld [vmem:[%s187 + $0x74] sm:$0x1]
      %v3489 = vld [vmem:[%s187 + $0x78] sm:$0xe]
      %v3490 = vld [vmem:[%s187 + $0x80] sm:$0x1]
      %v3491 = vld [vmem:[%s187 + $0x84] sm:$0xe]
      %v3492 = vld [vmem:[%s187 + $0x8c] sm:$0x1]
      %v3493 = vld [vmem:[%s187 + $0x90] sm:$0xe]
      %v3494 = vld [vmem:[%s187 + $0x98] sm:$0x1]
      %v3495 = vld [vmem:[%s187 + $0x9c] sm:$0xe]
      %v3496 = vld [vmem:[%s187 + $0xa4] sm:$0x1]
      %v3497 = vld [vmem:[%s187 + $0xa8] sm:$0xe]
      %v3498 = vld [vmem:[%s187 + $0xb0] sm:$0x1]
      %v3499 = vld [vmem:[%s187 + $0xb4] sm:$0xe]
      %v3500 = vld [vmem:[%s187 + $0xbc] sm:$0x1]
      %v3501 = vld [vmem:[%s187] sm:$0xc]
      %v3502 = vld [vmem:[%s187 + $0x8] sm:$0x3]
      %v3503 = vld [vmem:[%s187 + $0xc] sm:$0xc]
      %v3504 = vld [vmem:[%s187 + $0x14] sm:$0x3]
      %v3505 = vld [vmem:[%s187 + $0x18] sm:$0xc]
      %v3506 = vld [vmem:[%s187 + $0x20] sm:$0x3]
      %v3507 = vld [vmem:[%s187 + $0x24] sm:$0xc]
      %v3508 = vld [vmem:[%s187 + $0x2c] sm:$0x3]
      %v3509 = vld [vmem:[%s187 + $0x30] sm:$0xc]
      %v3510 = vld [vmem:[%s187 + $0x38] sm:$0x3]
      %v3511 = vld [vmem:[%s187 + $0x3c] sm:$0xc]
      %v3512 = vld [vmem:[%s187 + $0x44] sm:$0x3]
      %v3513 = vld [vmem:[%s187 + $0x48] sm:$0xc]
      %v3514 = vld [vmem:[%s187 + $0x50] sm:$0x3]
      %v3515 = vld [vmem:[%s187 + $0x54] sm:$0xc]
      %v3516 = vld [vmem:[%s187 + $0x5c] sm:$0x3]
      %v3517 = vld [vmem:[%s187 + $0x60] sm:$0xc]
      %v3518 = vld [vmem:[%s187 + $0x68] sm:$0x3]
      %v3519 = vld [vmem:[%s187 + $0x6c] sm:$0xc]
      %v3520 = vld [vmem:[%s187 + $0x74] sm:$0x3]
      %v3521 = vld [vmem:[%s187 + $0x78] sm:$0xc]
      %v3522 = vld [vmem:[%s187 + $0x80] sm:$0x3]
      %v3523 = vld [vmem:[%s187 + $0x84] sm:$0xc]
      %v3524 = vld [vmem:[%s187 + $0x8c] sm:$0x3]
      %v3525 = vld [vmem:[%s187 + $0x90] sm:$0xc]
      %v3526 = vld [vmem:[%s187 + $0x98] sm:$0x3]
      %v3527 = vld [vmem:[%s187 + $0x9c] sm:$0xc]
      %v3528 = vld [vmem:[%s187 + $0xa4] sm:$0x3]
      %v3529 = vld [vmem:[%s187 + $0xa8] sm:$0xc]
      %v3530 = vld [vmem:[%s187 + $0xb0] sm:$0x3]
      %v3531 = vld [vmem:[%s187 + $0xb4] sm:$0xc]
      %v3532 = vld [vmem:[%s187 + $0xbc] sm:$0x3]
      %s3533 = scalar_lea.vmem [#allocation2], 48
      %v3534 = vld [vmem:[%s3533] sm:$0xf]
      %v3535 = vld [vmem:[%s3533 + $0x4] sm:$0xf]
      %v3536 = vld [vmem:[%s3533 + $0xc] sm:$0xf]
      %v3537 = vld [vmem:[%s3533 + $0x10] sm:$0xf]
      %v3538 = vld [vmem:[%s3533 + $0x18] sm:$0xf]
      %v3539 = vld [vmem:[%s3533 + $0x1c] sm:$0xf]
      %v3540 = vld [vmem:[%s3533 + $0x24] sm:$0xf]
      %v3541 = vld [vmem:[%s3533 + $0x28] sm:$0xf]
      %v3542 = vld [vmem:[%s3533 + $0x30] sm:$0xf]
      %v3543 = vld [vmem:[%s3533 + $0x34] sm:$0xf]
      %v3544 = vld [vmem:[%s3533 + $0x3c] sm:$0xf]
      %v3545 = vld [vmem:[%s3533 + $0x40] sm:$0xf]
      %v3546 = vld [vmem:[%s3533 + $0x48] sm:$0xf]
      %v3547 = vld [vmem:[%s3533 + $0x4c] sm:$0xf]
      %v3548 = vld [vmem:[%s3533 + $0x54] sm:$0xf]
      %v3549 = vld [vmem:[%s3533 + $0x58] sm:$0xf]
      %v3550 = vld [vmem:[%s3533 + $0x60] sm:$0xf]
      %v3551 = vld [vmem:[%s3533 + $0x64] sm:$0xf]
      %v3552 = vld [vmem:[%s3533 + $0x6c] sm:$0xf]
      %v3553 = vld [vmem:[%s3533 + $0x70] sm:$0xf]
      %v3554 = vld [vmem:[%s3533 + $0x78] sm:$0xf]
      %v3555 = vld [vmem:[%s3533 + $0x7c] sm:$0xf]
      %v3556 = vld [vmem:[%s3533 + $0x84] sm:$0xf]
      %v3557 = vld [vmem:[%s3533 + $0x88] sm:$0xf]
      %v3558 = vld [vmem:[%s3533 + $0x90] sm:$0xf]
      %v3559 = vld [vmem:[%s3533 + $0x94] sm:$0xf]
      %v3560 = vld [vmem:[%s3533 + $0x9c] sm:$0xf]
      %v3561 = vld [vmem:[%s3533 + $0xa0] sm:$0xf]
      %v3562 = vld [vmem:[%s3533 + $0xa8] sm:$0xf]
      %v3563 = vld [vmem:[%s3533 + $0xac] sm:$0xf]
      %v3564 = vld [vmem:[%s3533 + $0xb4] sm:$0xf]
      %v3565 = vld [vmem:[%s3533 + $0xb8] sm:$0xf]
      %v3614 = vunpack.c.l.b16 %v3293
      %v3615 = vunpack.c.l.b16 %v3294
      %v3616 = vunpack.c.l.b16 %v3295
      %v3617 = vunpack.c.l.b16 %v3296
      %v3618 = vunpack.c.l.b16 %v3297
      %v3619 = vunpack.c.l.b16 %v3298
      %v3620 = vunpack.c.l.b16 %v3299
      %v3621 = vunpack.c.l.b16 %v3300
      %v3622 = vunpack.c.l.b16 %v3301
      %v3623 = vunpack.c.l.b16 %v3302
      %v3624 = vunpack.c.l.b16 %v3303
      %v3625 = vunpack.c.l.b16 %v3304
      %v3626 = vunpack.c.l.b16 %v3305
      %v3627 = vunpack.c.l.b16 %v3306
      %v3628 = vunpack.c.l.b16 %v3307
      %v3629 = vunpack.c.l.b16 %v3308
      %v3630 = vunpack.c.l.b16 %v3309
      %v3631 = vunpack.c.l.b16 %v3310
      %v3632 = vunpack.c.l.b16 %v3311
      %v3633 = vunpack.c.l.b16 %v3312
      %v3634 = vunpack.c.l.b16 %v3313
      %v3635 = vunpack.c.l.b16 %v3314
      %v3636 = vunpack.c.l.b16 %v3315
      %v3637 = vunpack.c.l.b16 %v3316
      %v3638 = vunpack.c.l.b16 %v3317
      %v3639 = vunpack.c.l.b16 %v3318
      %v3640 = vunpack.c.l.b16 %v3319
      %v3641 = vunpack.c.l.b16 %v3320
      %v3642 = vunpack.c.l.b16 %v3321
      %v3643 = vunpack.c.l.b16 %v3322
      %v3644 = vunpack.c.l.b16 %v3323
      %v3645 = vunpack.c.l.b16 %v3324
      %v3646 = vunpack.c.l.b16 %v3325
      %v3647 = vunpack.c.l.b16 %v3326
      %v3648 = vunpack.c.l.b16 %v3327
      %v3649 = vunpack.c.l.b16 %v3328
      %v3650 = vunpack.c.l.b16 %v3329
      %v3651 = vunpack.c.l.b16 %v3330
      %v3652 = vunpack.c.l.b16 %v3331
      %v3653 = vunpack.c.l.b16 %v3332
      %v3654 = vunpack.c.l.b16 %v3333
      %v3655 = vunpack.c.l.b16 %v3334
      %v3656 = vunpack.c.l.b16 %v3335
      %v3657 = vunpack.c.l.b16 %v3336
      %v3658 = vunpack.c.l.b16 %v3337
      %v3659 = vunpack.c.l.b16 %v3338
      %v3660 = vunpack.c.l.b16 %v3339
      %v3661 = vunpack.c.l.b16 %v3340
      %v3662 = vpack.c.b16 %v3615, %v3614
      %v3663 = vpack.c.b16 %v3616, %v3616
      %v3664 = vpack.c.b16 %v3618, %v3617
      %v3665 = vpack.c.b16 %v3619, %v3619
      %v3666 = vpack.c.b16 %v3621, %v3620
      %v3667 = vpack.c.b16 %v3622, %v3622
      %v3668 = vpack.c.b16 %v3624, %v3623
      %v3669 = vpack.c.b16 %v3625, %v3625
      %v3670 = vpack.c.b16 %v3627, %v3626
      %v3671 = vpack.c.b16 %v3628, %v3628
      %v3672 = vpack.c.b16 %v3630, %v3629
      %v3673 = vpack.c.b16 %v3631, %v3631
      %v3674 = vpack.c.b16 %v3633, %v3632
      %v3675 = vpack.c.b16 %v3634, %v3634
      %v3676 = vpack.c.b16 %v3636, %v3635
      %v3677 = vpack.c.b16 %v3637, %v3637
      %v3678 = vpack.c.b16 %v3639, %v3638
      %v3679 = vpack.c.b16 %v3640, %v3640
      %v3680 = vpack.c.b16 %v3642, %v3641
      %v3681 = vpack.c.b16 %v3643, %v3643
      %v3682 = vpack.c.b16 %v3645, %v3644
      %v3683 = vpack.c.b16 %v3646, %v3646
      %v3684 = vpack.c.b16 %v3648, %v3647
      %v3685 = vpack.c.b16 %v3649, %v3649
      %v3686 = vpack.c.b16 %v3651, %v3650
      %v3687 = vpack.c.b16 %v3652, %v3652
      %v3688 = vpack.c.b16 %v3654, %v3653
      %v3689 = vpack.c.b16 %v3655, %v3655
      %v3690 = vpack.c.b16 %v3657, %v3656
      %v3691 = vpack.c.b16 %v3658, %v3658
      %v3692 = vpack.c.b16 %v3660, %v3659
      %v3693 = vpack.c.b16 %v3661, %v3661
      %v3726 = vunpack.c.l.b16 %v3341
      %v3727 = vunpack.c.l.b16 %v3342
      %v3728 = vunpack.c.l.b16 %v3343
      %v3729 = vunpack.c.l.b16 %v3344
      %v3730 = vunpack.c.l.b16 %v3345
      %v3731 = vunpack.c.l.b16 %v3346
      %v3732 = vunpack.c.l.b16 %v3347
      %v3733 = vunpack.c.l.b16 %v3348
      %v3734 = vunpack.c.l.b16 %v3349
      %v3735 = vunpack.c.l.b16 %v3350
      %v3736 = vunpack.c.l.b16 %v3351
      %v3737 = vunpack.c.l.b16 %v3352
      %v3738 = vunpack.c.l.b16 %v3353
      %v3739 = vunpack.c.l.b16 %v3354
      %v3740 = vunpack.c.l.b16 %v3355
      %v3741 = vunpack.c.l.b16 %v3356
      %v3742 = vunpack.c.l.b16 %v3357
      %v3743 = vunpack.c.l.b16 %v3358
      %v3744 = vunpack.c.l.b16 %v3359
      %v3745 = vunpack.c.l.b16 %v3360
      %v3746 = vunpack.c.l.b16 %v3361
      %v3747 = vunpack.c.l.b16 %v3362
      %v3748 = vunpack.c.l.b16 %v3363
      %v3749 = vunpack.c.l.b16 %v3364
      %v3750 = vunpack.c.l.b16 %v3365
      %v3751 = vunpack.c.l.b16 %v3366
      %v3752 = vunpack.c.l.b16 %v3367
      %v3753 = vunpack.c.l.b16 %v3368
      %v3754 = vunpack.c.l.b16 %v3369
      %v3755 = vunpack.c.l.b16 %v3370
      %v3756 = vunpack.c.l.b16 %v3371
      %v3757 = vunpack.c.l.b16 %v3372
      %v3758 = vpack.c.b16 %v3727, %v3726
      %v3759 = vpack.c.b16 %v3729, %v3728
      %v3760 = vpack.c.b16 %v3731, %v3730
      %v3761 = vpack.c.b16 %v3733, %v3732
      %v3762 = vpack.c.b16 %v3735, %v3734
      %v3763 = vpack.c.b16 %v3737, %v3736
      %v3764 = vpack.c.b16 %v3739, %v3738
      %v3765 = vpack.c.b16 %v3741, %v3740
      %v3766 = vpack.c.b16 %v3743, %v3742
      %v3767 = vpack.c.b16 %v3745, %v3744
      %v3768 = vpack.c.b16 %v3747, %v3746
      %v3769 = vpack.c.b16 %v3749, %v3748
      %v3770 = vpack.c.b16 %v3751, %v3750
      %v3771 = vpack.c.b16 %v3753, %v3752
      %v3772 = vpack.c.b16 %v3755, %v3754
      %v3773 = vpack.c.b16 %v3757, %v3756
      %v3775 = vshrl.u32 %v3758, 16
      %v3777 = vrot.slane %v3775, 6
      %v3778 = vshll.u32 %v3758, 16
      %v3780 = vrot.slane %v3778, 7
      %v3781 = vor.u32 %v3777, %v3780
      %v3783 = vshrl.u32 %v3759, 16
      %v3785 = vrot.slane %v3783, 6
      %v3786 = vshll.u32 %v3759, 16
      %v3788 = vrot.slane %v3786, 7
      %v3789 = vor.u32 %v3785, %v3788
      %v3791 = vshrl.u32 %v3760, 16
      %v3793 = vrot.slane %v3791, 6
      %v3794 = vshll.u32 %v3760, 16
      %v3796 = vrot.slane %v3794, 7
      %v3797 = vor.u32 %v3793, %v3796
      %v3799 = vshrl.u32 %v3761, 16
      %v3801 = vrot.slane %v3799, 6
      %v3802 = vshll.u32 %v3761, 16
      %v3804 = vrot.slane %v3802, 7
      %v3805 = vor.u32 %v3801, %v3804
      %v3807 = vshrl.u32 %v3762, 16
      %v3809 = vrot.slane %v3807, 6
      %v3810 = vshll.u32 %v3762, 16
      %v3812 = vrot.slane %v3810, 7
      %v3813 = vor.u32 %v3809, %v3812
      %v3815 = vshrl.u32 %v3763, 16
      %v3817 = vrot.slane %v3815, 6
      %v3818 = vshll.u32 %v3763, 16
      %v3820 = vrot.slane %v3818, 7
      %v3821 = vor.u32 %v3817, %v3820
      %v3823 = vshrl.u32 %v3764, 16
      %v3825 = vrot.slane %v3823, 6
      %v3826 = vshll.u32 %v3764, 16
      %v3828 = vrot.slane %v3826, 7
      %v3829 = vor.u32 %v3825, %v3828
      %v3831 = vshrl.u32 %v3765, 16
      %v3833 = vrot.slane %v3831, 6
      %v3834 = vshll.u32 %v3765, 16
      %v3836 = vrot.slane %v3834, 7
      %v3837 = vor.u32 %v3833, %v3836
      %v3839 = vshrl.u32 %v3766, 16
      %v3841 = vrot.slane %v3839, 6
      %v3842 = vshll.u32 %v3766, 16
      %v3844 = vrot.slane %v3842, 7
      %v3845 = vor.u32 %v3841, %v3844
      %v3847 = vshrl.u32 %v3767, 16
      %v3849 = vrot.slane %v3847, 6
      %v3850 = vshll.u32 %v3767, 16
      %v3852 = vrot.slane %v3850, 7
      %v3853 = vor.u32 %v3849, %v3852
      %v3855 = vshrl.u32 %v3768, 16
      %v3857 = vrot.slane %v3855, 6
      %v3858 = vshll.u32 %v3768, 16
      %v3860 = vrot.slane %v3858, 7
      %v3861 = vor.u32 %v3857, %v3860
      %v3863 = vshrl.u32 %v3769, 16
      %v3865 = vrot.slane %v3863, 6
      %v3866 = vshll.u32 %v3769, 16
      %v3868 = vrot.slane %v3866, 7
      %v3869 = vor.u32 %v3865, %v3868
      %v3871 = vshrl.u32 %v3770, 16
      %v3873 = vrot.slane %v3871, 6
      %v3874 = vshll.u32 %v3770, 16
      %v3876 = vrot.slane %v3874, 7
      %v3877 = vor.u32 %v3873, %v3876
      %v3879 = vshrl.u32 %v3771, 16
      %v3881 = vrot.slane %v3879, 6
      %v3882 = vshll.u32 %v3771, 16
      %v3884 = vrot.slane %v3882, 7
      %v3885 = vor.u32 %v3881, %v3884
      %v3887 = vshrl.u32 %v3772, 16
      %v3889 = vrot.slane %v3887, 6
      %v3890 = vshll.u32 %v3772, 16
      %v3892 = vrot.slane %v3890, 7
      %v3893 = vor.u32 %v3889, %v3892
      %v3895 = vshrl.u32 %v3773, 16
      %v3897 = vrot.slane %v3895, 6
      %v3898 = vshll.u32 %v3773, 16
      %v3900 = vrot.slane %v3898, 7
      %v3901 = vor.u32 %v3897, %v3900
      %3902 = vrot.lane.b32.xlu0 %v3781, 16
      %v3903 = vpop.permute.xlu0 %3902
      %3904 = vrot.lane.b32.xlu0 %v3789, 16
      %v3905 = vpop.permute.xlu0 %3904
      %3906 = vrot.lane.b32.xlu0 %v3797, 16
      %v3907 = vpop.permute.xlu0 %3906
      %3908 = vrot.lane.b32.xlu0 %v3805, 16
      %v3909 = vpop.permute.xlu0 %3908
      %3910 = vrot.lane.b32.xlu0 %v3813, 16
      %v3911 = vpop.permute.xlu0 %3910
      %3912 = vrot.lane.b32.xlu0 %v3821, 16
      %v3913 = vpop.permute.xlu0 %3912
      %3914 = vrot.lane.b32.xlu0 %v3829, 16
      %v3915 = vpop.permute.xlu0 %3914
      %3916 = vrot.lane.b32.xlu0 %v3837, 16
      %v3917 = vpop.permute.xlu0 %3916
      %3918 = vrot.lane.b32.xlu0 %v3845, 16
      %v3919 = vpop.permute.xlu0 %3918
      %3920 = vrot.lane.b32.xlu0 %v3853, 16
      %v3921 = vpop.permute.xlu0 %3920
      %3922 = vrot.lane.b32.xlu0 %v3861, 16
      %v3923 = vpop.permute.xlu0 %3922
      %3924 = vrot.lane.b32.xlu0 %v3869, 16
      %v3925 = vpop.permute.xlu0 %3924
      %3926 = vrot.lane.b32.xlu0 %v3877, 16
      %v3927 = vpop.permute.xlu0 %3926
      %3928 = vrot.lane.b32.xlu0 %v3885, 16
      %v3929 = vpop.permute.xlu0 %3928
      %3930 = vrot.lane.b32.xlu0 %v3893, 16
      %v3931 = vpop.permute.xlu0 %3930
      %3932 = vrot.lane.b32.xlu0 %v3901, 16
      %v3933 = vpop.permute.xlu0 %3932
      %v3966 = vunpack.c.l.b16 %v3373
      %v3967 = vunpack.c.l.b16 %v3374
      %v3968 = vunpack.c.l.b16 %v3375
      %v3969 = vunpack.c.l.b16 %v3376
      %v3970 = vunpack.c.l.b16 %v3377
      %v3971 = vunpack.c.l.b16 %v3378
      %v3972 = vunpack.c.l.b16 %v3379
      %v3973 = vunpack.c.l.b16 %v3380
      %v3974 = vunpack.c.l.b16 %v3381
      %v3975 = vunpack.c.l.b16 %v3382
      %v3976 = vunpack.c.l.b16 %v3383
      %v3977 = vunpack.c.l.b16 %v3384
      %v3978 = vunpack.c.l.b16 %v3385
      %v3979 = vunpack.c.l.b16 %v3386
      %v3980 = vunpack.c.l.b16 %v3387
      %v3981 = vunpack.c.l.b16 %v3388
      %v3982 = vunpack.c.l.b16 %v3389
      %v3983 = vunpack.c.l.b16 %v3390
      %v3984 = vunpack.c.l.b16 %v3391
      %v3985 = vunpack.c.l.b16 %v3392
      %v3986 = vunpack.c.l.b16 %v3393
      %v3987 = vunpack.c.l.b16 %v3394
      %v3988 = vunpack.c.l.b16 %v3395
      %v3989 = vunpack.c.l.b16 %v3396
      %v3990 = vunpack.c.l.b16 %v3397
      %v3991 = vunpack.c.l.b16 %v3398
      %v3992 = vunpack.c.l.b16 %v3399
      %v3993 = vunpack.c.l.b16 %v3400
      %v3994 = vunpack.c.l.b16 %v3401
      %v3995 = vunpack.c.l.b16 %v3402
      %v3996 = vunpack.c.l.b16 %v3403
      %v3997 = vunpack.c.l.b16 %v3404
      %v3998 = vpack.c.b16 %v3727, %v3966
      %v3999 = vpack.c.b16 %v3967, %v3967
      %v4000 = vpack.c.b16 %v3729, %v3968
      %v4001 = vpack.c.b16 %v3969, %v3969
      %v4002 = vpack.c.b16 %v3731, %v3970
      %v4003 = vpack.c.b16 %v3971, %v3971
      %v4004 = vpack.c.b16 %v3733, %v3972
      %v4005 = vpack.c.b16 %v3973, %v3973
      %v4006 = vpack.c.b16 %v3735, %v3974
      %v4007 = vpack.c.b16 %v3975, %v3975
      %v4008 = vpack.c.b16 %v3737, %v3976
      %v4009 = vpack.c.b16 %v3977, %v3977
      %v4010 = vpack.c.b16 %v3739, %v3978
      %v4011 = vpack.c.b16 %v3979, %v3979
      %v4012 = vpack.c.b16 %v3741, %v3980
      %v4013 = vpack.c.b16 %v3981, %v3981
      %v4014 = vpack.c.b16 %v3743, %v3982
      %v4015 = vpack.c.b16 %v3983, %v3983
      %v4016 = vpack.c.b16 %v3745, %v3984
      %v4017 = vpack.c.b16 %v3985, %v3985
      %v4018 = vpack.c.b16 %v3747, %v3986
      %v4019 = vpack.c.b16 %v3987, %v3987
      %v4020 = vpack.c.b16 %v3749, %v3988
      %v4021 = vpack.c.b16 %v3989, %v3989
      %v4022 = vpack.c.b16 %v3751, %v3990
      %v4023 = vpack.c.b16 %v3991, %v3991
      %v4024 = vpack.c.b16 %v3753, %v3992
      %v4025 = vpack.c.b16 %v3993, %v3993
      %v4026 = vpack.c.b16 %v3755, %v3994
      %v4027 = vpack.c.b16 %v3995, %v3995
      %v4028 = vpack.c.b16 %v3757, %v3996
      %v4029 = vpack.c.b16 %v3997, %v3997
      %vm4030 = vsmask.f32 256
      %v4032 = vshrl.u32 %v3998, 16
      %v4034 = vrot.slane %v4032, 7
      %v4035 = vshll.u32 %v3998, 16
      %v4037 = vor.u32 %v4034, %v4035
      %v4039 = vshrl.u32 %v3999, 16
      %v4041 = vrot.slane %v4039, 7
      %v4042 = vshll.u32 %v3999, 16
      %v4044 = vor.u32 %v4041, %v4042
      %v4045 = vsel %vm4030, %v4034, %v4044
      %v4047 = vshrl.u32 %v4000, 16
      %v4049 = vrot.slane %v4047, 7
      %v4050 = vshll.u32 %v4000, 16
      %v4052 = vor.u32 %v4049, %v4050
      %v4054 = vshrl.u32 %v4001, 16
      %v4056 = vrot.slane %v4054, 7
      %v4057 = vshll.u32 %v4001, 16
      %v4059 = vor.u32 %v4056, %v4057
      %v4060 = vsel %vm4030, %v4049, %v4059
      %v4062 = vshrl.u32 %v4002, 16
      %v4064 = vrot.slane %v4062, 7
      %v4065 = vshll.u32 %v4002, 16
      %v4067 = vor.u32 %v4064, %v4065
      %v4069 = vshrl.u32 %v4003, 16
      %v4071 = vrot.slane %v4069, 7
      %v4072 = vshll.u32 %v4003, 16
      %v4074 = vor.u32 %v4071, %v4072
      %v4075 = vsel %vm4030, %v4064, %v4074
      %v4077 = vshrl.u32 %v4004, 16
      %v4079 = vrot.slane %v4077, 7
      %v4080 = vshll.u32 %v4004, 16
      %v4082 = vor.u32 %v4079, %v4080
      %v4084 = vshrl.u32 %v4005, 16
      %v4086 = vrot.slane %v4084, 7
      %v4087 = vshll.u32 %v4005, 16
      %v4089 = vor.u32 %v4086, %v4087
      %v4090 = vsel %vm4030, %v4079, %v4089
      %v4092 = vshrl.u32 %v4006, 16
      %v4094 = vrot.slane %v4092, 7
      %v4095 = vshll.u32 %v4006, 16
      %v4097 = vor.u32 %v4094, %v4095
      %v4099 = vshrl.u32 %v4007, 16
      %v4101 = vrot.slane %v4099, 7
      %v4102 = vshll.u32 %v4007, 16
      %v4104 = vor.u32 %v4101, %v4102
      %v4105 = vsel %vm4030, %v4094, %v4104
      %v4107 = vshrl.u32 %v4008, 16
      %v4109 = vrot.slane %v4107, 7
      %v4110 = vshll.u32 %v4008, 16
      %v4112 = vor.u32 %v4109, %v4110
      %v4114 = vshrl.u32 %v4009, 16
      %v4116 = vrot.slane %v4114, 7
      %v4117 = vshll.u32 %v4009, 16
      %v4119 = vor.u32 %v4116, %v4117
      %v4120 = vsel %vm4030, %v4109, %v4119
      %v4122 = vshrl.u32 %v4010, 16
      %v4124 = vrot.slane %v4122, 7
      %v4125 = vshll.u32 %v4010, 16
      %v4127 = vor.u32 %v4124, %v4125
      %v4129 = vshrl.u32 %v4011, 16
      %v4131 = vrot.slane %v4129, 7
      %v4132 = vshll.u32 %v4011, 16
      %v4134 = vor.u32 %v4131, %v4132
      %v4135 = vsel %vm4030, %v4124, %v4134
      %v4137 = vshrl.u32 %v4012, 16
      %v4139 = vrot.slane %v4137, 7
      %v4140 = vshll.u32 %v4012, 16
      %v4142 = vor.u32 %v4139, %v4140
      %v4144 = vshrl.u32 %v4013, 16
      %v4146 = vrot.slane %v4144, 7
      %v4147 = vshll.u32 %v4013, 16
      %v4149 = vor.u32 %v4146, %v4147
      %v4150 = vsel %vm4030, %v4139, %v4149
      %v4152 = vshrl.u32 %v4014, 16
      %v4154 = vrot.slane %v4152, 7
      %v4155 = vshll.u32 %v4014, 16
      %v4157 = vor.u32 %v4154, %v4155
      %v4159 = vshrl.u32 %v4015, 16
      %v4161 = vrot.slane %v4159, 7
      %v4162 = vshll.u32 %v4015, 16
      %v4164 = vor.u32 %v4161, %v4162
      %v4165 = vsel %vm4030, %v4154, %v4164
      %v4167 = vshrl.u32 %v4016, 16
      %v4169 = vrot.slane %v4167, 7
      %v4170 = vshll.u32 %v4016, 16
      %v4172 = vor.u32 %v4169, %v4170
      %v4174 = vshrl.u32 %v4017, 16
      %v4176 = vrot.slane %v4174, 7
      %v4177 = vshll.u32 %v4017, 16
      %v4179 = vor.u32 %v4176, %v4177
      %v4180 = vsel %vm4030, %v4169, %v4179
      %v4182 = vshrl.u32 %v4018, 16
      %v4184 = vrot.slane %v4182, 7
      %v4185 = vshll.u32 %v4018, 16
      %v4187 = vor.u32 %v4184, %v4185
      %v4189 = vshrl.u32 %v4019, 16
      %v4191 = vrot.slane %v4189, 7
      %v4192 = vshll.u32 %v4019, 16
      %v4194 = vor.u32 %v4191, %v4192
      %v4195 = vsel %vm4030, %v4184, %v4194
      %v4197 = vshrl.u32 %v4020, 16
      %v4199 = vrot.slane %v4197, 7
      %v4200 = vshll.u32 %v4020, 16
      %v4202 = vor.u32 %v4199, %v4200
      %v4204 = vshrl.u32 %v4021, 16
      %v4206 = vrot.slane %v4204, 7
      %v4207 = vshll.u32 %v4021, 16
      %v4209 = vor.u32 %v4206, %v4207
      %v4210 = vsel %vm4030, %v4199, %v4209
      %v4212 = vshrl.u32 %v4022, 16
      %v4214 = vrot.slane %v4212, 7
      %v4215 = vshll.u32 %v4022, 16
      %v4217 = vor.u32 %v4214, %v4215
      %v4219 = vshrl.u32 %v4023, 16
      %v4221 = vrot.slane %v4219, 7
      %v4222 = vshll.u32 %v4023, 16
      %v4224 = vor.u32 %v4221, %v4222
      %v4225 = vsel %vm4030, %v4214, %v4224
      %v4227 = vshrl.u32 %v4024, 16
      %v4229 = vrot.slane %v4227, 7
      %v4230 = vshll.u32 %v4024, 16
      %v4232 = vor.u32 %v4229, %v4230
      %v4234 = vshrl.u32 %v4025, 16
      %v4236 = vrot.slane %v4234, 7
      %v4237 = vshll.u32 %v4025, 16
      %v4239 = vor.u32 %v4236, %v4237
      %v4240 = vsel %vm4030, %v4229, %v4239
      %v4242 = vshrl.u32 %v4026, 16
      %v4244 = vrot.slane %v4242, 7
      %v4245 = vshll.u32 %v4026, 16
      %v4247 = vor.u32 %v4244, %v4245
      %v4249 = vshrl.u32 %v4027, 16
      %v4251 = vrot.slane %v4249, 7
      %v4252 = vshll.u32 %v4027, 16
      %v4254 = vor.u32 %v4251, %v4252
      %v4255 = vsel %vm4030, %v4244, %v4254
      %v4257 = vshrl.u32 %v4028, 16
      %v4259 = vrot.slane %v4257, 7
      %v4260 = vshll.u32 %v4028, 16
      %v4262 = vor.u32 %v4259, %v4260
      %v4264 = vshrl.u32 %v4029, 16
      %v4266 = vrot.slane %v4264, 7
      %v4267 = vshll.u32 %v4029, 16
      %v4269 = vor.u32 %v4266, %v4267
      %v4270 = vsel %vm4030, %v4259, %v4269
      %4271 = vrot.lane.b32.xlu0 %v4037, 32
      %v4272 = vpop.permute.xlu0 %4271
      %4273 = vrot.lane.b32.xlu0 %v4045, 32
      %v4274 = vpop.permute.xlu0 %4273
      %4275 = vrot.lane.b32.xlu0 %v4052, 32
      %v4276 = vpop.permute.xlu0 %4275
      %4277 = vrot.lane.b32.xlu0 %v4060, 32
      %v4278 = vpop.permute.xlu0 %4277
      %4279 = vrot.lane.b32.xlu0 %v4067, 32
      %v4280 = vpop.permute.xlu0 %4279
      %4281 = vrot.lane.b32.xlu0 %v4075, 32
      %v4282 = vpop.permute.xlu0 %4281
      %4283 = vrot.lane.b32.xlu0 %v4082, 32
      %v4284 = vpop.permute.xlu0 %4283
      %4285 = vrot.lane.b32.xlu0 %v4090, 32
      %v4286 = vpop.permute.xlu0 %4285
      %4287 = vrot.lane.b32.xlu0 %v4097, 32
      %v4288 = vpop.permute.xlu0 %4287
      %4289 = vrot.lane.b32.xlu0 %v4105, 32
      %v4290 = vpop.permute.xlu0 %4289
      %4291 = vrot.lane.b32.xlu0 %v4112, 32
      %v4292 = vpop.permute.xlu0 %4291
      %4293 = vrot.lane.b32.xlu0 %v4120, 32
      %v4294 = vpop.permute.xlu0 %4293
      %4295 = vrot.lane.b32.xlu0 %v4127, 32
      %v4296 = vpop.permute.xlu0 %4295
      %4297 = vrot.lane.b32.xlu0 %v4135, 32
      %v4298 = vpop.permute.xlu0 %4297
      %4299 = vrot.lane.b32.xlu0 %v4142, 32
      %v4300 = vpop.permute.xlu0 %4299
      %4301 = vrot.lane.b32.xlu0 %v4150, 32
      %v4302 = vpop.permute.xlu0 %4301
      %4303 = vrot.lane.b32.xlu0 %v4157, 32
      %v4304 = vpop.permute.xlu0 %4303
      %4305 = vrot.lane.b32.xlu0 %v4165, 32
      %v4306 = vpop.permute.xlu0 %4305
      %4307 = vrot.lane.b32.xlu0 %v4172, 32
      %v4308 = vpop.permute.xlu0 %4307
      %4309 = vrot.lane.b32.xlu0 %v4180, 32
      %v4310 = vpop.permute.xlu0 %4309
      %4311 = vrot.lane.b32.xlu0 %v4187, 32
      %v4312 = vpop.permute.xlu0 %4311
      %4313 = vrot.lane.b32.xlu0 %v4195, 32
      %v4314 = vpop.permute.xlu0 %4313
      %4315 = vrot.lane.b32.xlu0 %v4202, 32
      %v4316 = vpop.permute.xlu0 %4315
      %4317 = vrot.lane.b32.xlu0 %v4210, 32
      %v4318 = vpop.permute.xlu0 %4317
      %4319 = vrot.lane.b32.xlu0 %v4217, 32
      %v4320 = vpop.permute.xlu0 %4319
      %4321 = vrot.lane.b32.xlu0 %v4225, 32
      %v4322 = vpop.permute.xlu0 %4321
      %4323 = vrot.lane.b32.xlu0 %v4232, 32
      %v4324 = vpop.permute.xlu0 %4323
      %4325 = vrot.lane.b32.xlu0 %v4240, 32
      %v4326 = vpop.permute.xlu0 %4325
      %4327 = vrot.lane.b32.xlu0 %v4247, 32
      %v4328 = vpop.permute.xlu0 %4327
      %4329 = vrot.lane.b32.xlu0 %v4255, 32
      %v4330 = vpop.permute.xlu0 %4329
      %4331 = vrot.lane.b32.xlu0 %v4262, 32
      %v4332 = vpop.permute.xlu0 %4331
      %4333 = vrot.lane.b32.xlu0 %v4270, 32
      %v4334 = vpop.permute.xlu0 %4333
      %v4367 = vunpack.c.l.b16 %v3405
      %v4368 = vunpack.c.l.b16 %v3406
      %v4369 = vunpack.c.l.b16 %v3407
      %v4370 = vunpack.c.l.b16 %v3408
      %v4371 = vunpack.c.l.b16 %v3409
      %v4372 = vunpack.c.l.b16 %v3410
      %v4373 = vunpack.c.l.b16 %v3411
      %v4374 = vunpack.c.l.b16 %v3412
      %v4375 = vunpack.c.l.b16 %v3413
      %v4376 = vunpack.c.l.b16 %v3414
      %v4377 = vunpack.c.l.b16 %v3415
      %v4378 = vunpack.c.l.b16 %v3416
      %v4379 = vunpack.c.l.b16 %v3417
      %v4380 = vunpack.c.l.b16 %v3418
      %v4381 = vunpack.c.l.b16 %v3419
      %v4382 = vunpack.c.l.b16 %v3420
      %v4383 = vunpack.c.l.b16 %v3421
      %v4384 = vunpack.c.l.b16 %v3422
      %v4385 = vunpack.c.l.b16 %v3423
      %v4386 = vunpack.c.l.b16 %v3424
      %v4387 = vunpack.c.l.b16 %v3425
      %v4388 = vunpack.c.l.b16 %v3426
      %v4389 = vunpack.c.l.b16 %v3427
      %v4390 = vunpack.c.l.b16 %v3428
      %v4391 = vunpack.c.l.b16 %v3429
      %v4392 = vunpack.c.l.b16 %v3430
      %v4393 = vunpack.c.l.b16 %v3431
      %v4394 = vunpack.c.l.b16 %v3432
      %v4395 = vunpack.c.l.b16 %v3433
      %v4396 = vunpack.c.l.b16 %v3434
      %v4397 = vunpack.c.l.b16 %v3435
      %v4398 = vunpack.c.l.b16 %v3436
      %v4399 = vpack.c.b16 %v3727, %v4367
      %v4400 = vpack.c.b16 %v4368, %v4368
      %v4401 = vpack.c.b16 %v3729, %v4369
      %v4402 = vpack.c.b16 %v4370, %v4370
      %v4403 = vpack.c.b16 %v3731, %v4371
      %v4404 = vpack.c.b16 %v4372, %v4372
      %v4405 = vpack.c.b16 %v3733, %v4373
      %v4406 = vpack.c.b16 %v4374, %v4374
      %v4407 = vpack.c.b16 %v3735, %v4375
      %v4408 = vpack.c.b16 %v4376, %v4376
      %v4409 = vpack.c.b16 %v3737, %v4377
      %v4410 = vpack.c.b16 %v4378, %v4378
      %v4411 = vpack.c.b16 %v3739, %v4379
      %v4412 = vpack.c.b16 %v4380, %v4380
      %v4413 = vpack.c.b16 %v3741, %v4381
      %v4414 = vpack.c.b16 %v4382, %v4382
      %v4415 = vpack.c.b16 %v3743, %v4383
      %v4416 = vpack.c.b16 %v4384, %v4384
      %v4417 = vpack.c.b16 %v3745, %v4385
      %v4418 = vpack.c.b16 %v4386, %v4386
      %v4419 = vpack.c.b16 %v3747, %v4387
      %v4420 = vpack.c.b16 %v4388, %v4388
      %v4421 = vpack.c.b16 %v3749, %v4389
      %v4422 = vpack.c.b16 %v4390, %v4390
      %v4423 = vpack.c.b16 %v3751, %v4391
      %v4424 = vpack.c.b16 %v4392, %v4392
      %v4425 = vpack.c.b16 %v3753, %v4393
      %v4426 = vpack.c.b16 %v4394, %v4394
      %v4427 = vpack.c.b16 %v3755, %v4395
      %v4428 = vpack.c.b16 %v4396, %v4396
      %v4429 = vpack.c.b16 %v3757, %v4397
      %v4430 = vpack.c.b16 %v4398, %v4398
      %v4432 = vshrl.u32 %v4399, 16
      %v4434 = vshll.u32 %v4399, 16
      %v4436 = vrot.slane %v4434, 1
      %v4437 = vor.u32 %v4432, %v4436
      %v4439 = vshll.u32 %v4400, 16
      %v4441 = vrot.slane %v4439, 1
      %v4442 = vsel %vm868, %v4437, %v4441
      %v4443 = vshrl.u32 %v4400, 16
      %v4445 = vor.u32 %v4443, %v4441
      %v4447 = vshrl.u32 %v4401, 16
      %v4449 = vshll.u32 %v4401, 16
      %v4451 = vrot.slane %v4449, 1
      %v4452 = vor.u32 %v4447, %v4451
      %v4454 = vshll.u32 %v4402, 16
      %v4456 = vrot.slane %v4454, 1
      %v4457 = vsel %vm868, %v4452, %v4456
      %v4458 = vshrl.u32 %v4402, 16
      %v4460 = vor.u32 %v4458, %v4456
      %v4462 = vshrl.u32 %v4403, 16
      %v4464 = vshll.u32 %v4403, 16
      %v4466 = vrot.slane %v4464, 1
      %v4467 = vor.u32 %v4462, %v4466
      %v4469 = vshll.u32 %v4404, 16
      %v4471 = vrot.slane %v4469, 1
      %v4472 = vsel %vm868, %v4467, %v4471
      %v4473 = vshrl.u32 %v4404, 16
      %v4475 = vor.u32 %v4473, %v4471
      %v4477 = vshrl.u32 %v4405, 16
      %v4479 = vshll.u32 %v4405, 16
      %v4481 = vrot.slane %v4479, 1
      %v4482 = vor.u32 %v4477, %v4481
      %v4484 = vshll.u32 %v4406, 16
      %v4486 = vrot.slane %v4484, 1
      %v4487 = vsel %vm868, %v4482, %v4486
      %v4488 = vshrl.u32 %v4406, 16
      %v4490 = vor.u32 %v4488, %v4486
      %v4492 = vshrl.u32 %v4407, 16
      %v4494 = vshll.u32 %v4407, 16
      %v4496 = vrot.slane %v4494, 1
      %v4497 = vor.u32 %v4492, %v4496
      %v4499 = vshll.u32 %v4408, 16
      %v4501 = vrot.slane %v4499, 1
      %v4502 = vsel %vm868, %v4497, %v4501
      %v4503 = vshrl.u32 %v4408, 16
      %v4505 = vor.u32 %v4503, %v4501
      %v4507 = vshrl.u32 %v4409, 16
      %v4509 = vshll.u32 %v4409, 16
      %v4511 = vrot.slane %v4509, 1
      %v4512 = vor.u32 %v4507, %v4511
      %v4514 = vshll.u32 %v4410, 16
      %v4516 = vrot.slane %v4514, 1
      %v4517 = vsel %vm868, %v4512, %v4516
      %v4518 = vshrl.u32 %v4410, 16
      %v4520 = vor.u32 %v4518, %v4516
      %v4522 = vshrl.u32 %v4411, 16
      %v4524 = vshll.u32 %v4411, 16
      %v4526 = vrot.slane %v4524, 1
      %v4527 = vor.u32 %v4522, %v4526
      %v4529 = vshll.u32 %v4412, 16
      %v4531 = vrot.slane %v4529, 1
      %v4532 = vsel %vm868, %v4527, %v4531
      %v4533 = vshrl.u32 %v4412, 16
      %v4535 = vor.u32 %v4533, %v4531
      %v4537 = vshrl.u32 %v4413, 16
      %v4539 = vshll.u32 %v4413, 16
      %v4541 = vrot.slane %v4539, 1
      %v4542 = vor.u32 %v4537, %v4541
      %v4544 = vshll.u32 %v4414, 16
      %v4546 = vrot.slane %v4544, 1
      %v4547 = vsel %vm868, %v4542, %v4546
      %v4548 = vshrl.u32 %v4414, 16
      %v4550 = vor.u32 %v4548, %v4546
      %v4552 = vshrl.u32 %v4415, 16
      %v4554 = vshll.u32 %v4415, 16
      %v4556 = vrot.slane %v4554, 1
      %v4557 = vor.u32 %v4552, %v4556
      %v4559 = vshll.u32 %v4416, 16
      %v4561 = vrot.slane %v4559, 1
      %v4562 = vsel %vm868, %v4557, %v4561
      %v4563 = vshrl.u32 %v4416, 16
      %v4565 = vor.u32 %v4563, %v4561
      %v4567 = vshrl.u32 %v4417, 16
      %v4569 = vshll.u32 %v4417, 16
      %v4571 = vrot.slane %v4569, 1
      %v4572 = vor.u32 %v4567, %v4571
      %v4574 = vshll.u32 %v4418, 16
      %v4576 = vrot.slane %v4574, 1
      %v4577 = vsel %vm868, %v4572, %v4576
      %v4578 = vshrl.u32 %v4418, 16
      %v4580 = vor.u32 %v4578, %v4576
      %v4582 = vshrl.u32 %v4419, 16
      %v4584 = vshll.u32 %v4419, 16
      %v4586 = vrot.slane %v4584, 1
      %v4587 = vor.u32 %v4582, %v4586
      %v4589 = vshll.u32 %v4420, 16
      %v4591 = vrot.slane %v4589, 1
      %v4592 = vsel %vm868, %v4587, %v4591
      %v4593 = vshrl.u32 %v4420, 16
      %v4595 = vor.u32 %v4593, %v4591
      %v4597 = vshrl.u32 %v4421, 16
      %v4599 = vshll.u32 %v4421, 16
      %v4601 = vrot.slane %v4599, 1
      %v4602 = vor.u32 %v4597, %v4601
      %v4604 = vshll.u32 %v4422, 16
      %v4606 = vrot.slane %v4604, 1
      %v4607 = vsel %vm868, %v4602, %v4606
      %v4608 = vshrl.u32 %v4422, 16
      %v4610 = vor.u32 %v4608, %v4606
      %v4612 = vshrl.u32 %v4423, 16
      %v4614 = vshll.u32 %v4423, 16
      %v4616 = vrot.slane %v4614, 1
      %v4617 = vor.u32 %v4612, %v4616
      %v4619 = vshll.u32 %v4424, 16
      %v4621 = vrot.slane %v4619, 1
      %v4622 = vsel %vm868, %v4617, %v4621
      %v4623 = vshrl.u32 %v4424, 16
      %v4625 = vor.u32 %v4623, %v4621
      %v4627 = vshrl.u32 %v4425, 16
      %v4629 = vshll.u32 %v4425, 16
      %v4631 = vrot.slane %v4629, 1
      %v4632 = vor.u32 %v4627, %v4631
      %v4634 = vshll.u32 %v4426, 16
      %v4636 = vrot.slane %v4634, 1
      %v4637 = vsel %vm868, %v4632, %v4636
      %v4638 = vshrl.u32 %v4426, 16
      %v4640 = vor.u32 %v4638, %v4636
      %v4642 = vshrl.u32 %v4427, 16
      %v4644 = vshll.u32 %v4427, 16
      %v4646 = vrot.slane %v4644, 1
      %v4647 = vor.u32 %v4642, %v4646
      %v4649 = vshll.u32 %v4428, 16
      %v4651 = vrot.slane %v4649, 1
      %v4652 = vsel %vm868, %v4647, %v4651
      %v4653 = vshrl.u32 %v4428, 16
      %v4655 = vor.u32 %v4653, %v4651
      %v4657 = vshrl.u32 %v4429, 16
      %v4659 = vshll.u32 %v4429, 16
      %v4661 = vrot.slane %v4659, 1
      %v4662 = vor.u32 %v4657, %v4661
      %v4664 = vshll.u32 %v4430, 16
      %v4666 = vrot.slane %v4664, 1
      %v4667 = vsel %vm868, %v4662, %v4666
      %v4668 = vshrl.u32 %v4430, 16
      %v4670 = vor.u32 %v4668, %v4666
      %4671 = vrot.lane.b32.xlu0 %v4442, 48
      %v4672 = vpop.permute.xlu0 %4671
      %4673 = vrot.lane.b32.xlu0 %v4445, 48
      %v4674 = vpop.permute.xlu0 %4673
      %4675 = vrot.lane.b32.xlu0 %v4457, 48
      %v4676 = vpop.permute.xlu0 %4675
      %4677 = vrot.lane.b32.xlu0 %v4460, 48
      %v4678 = vpop.permute.xlu0 %4677
      %4679 = vrot.lane.b32.xlu0 %v4472, 48
      %v4680 = vpop.permute.xlu0 %4679
      %4681 = vrot.lane.b32.xlu0 %v4475, 48
      %v4682 = vpop.permute.xlu0 %4681
      %4683 = vrot.lane.b32.xlu0 %v4487, 48
      %v4684 = vpop.permute.xlu0 %4683
      %4685 = vrot.lane.b32.xlu0 %v4490, 48
      %v4686 = vpop.permute.xlu0 %4685
      %4687 = vrot.lane.b32.xlu0 %v4502, 48
      %v4688 = vpop.permute.xlu0 %4687
      %4689 = vrot.lane.b32.xlu0 %v4505, 48
      %v4690 = vpop.permute.xlu0 %4689
      %4691 = vrot.lane.b32.xlu0 %v4517, 48
      %v4692 = vpop.permute.xlu0 %4691
      %4693 = vrot.lane.b32.xlu0 %v4520, 48
      %v4694 = vpop.permute.xlu0 %4693
      %4695 = vrot.lane.b32.xlu0 %v4532, 48
      %v4696 = vpop.permute.xlu0 %4695
      %4697 = vrot.lane.b32.xlu0 %v4535, 48
      %v4698 = vpop.permute.xlu0 %4697
      %4699 = vrot.lane.b32.xlu0 %v4547, 48
      %v4700 = vpop.permute.xlu0 %4699
      %4701 = vrot.lane.b32.xlu0 %v4550, 48
      %v4702 = vpop.permute.xlu0 %4701
      %4703 = vrot.lane.b32.xlu0 %v4562, 48
      %v4704 = vpop.permute.xlu0 %4703
      %4705 = vrot.lane.b32.xlu0 %v4565, 48
      %v4706 = vpop.permute.xlu0 %4705
      %4707 = vrot.lane.b32.xlu0 %v4577, 48
      %v4708 = vpop.permute.xlu0 %4707
      %4709 = vrot.lane.b32.xlu0 %v4580, 48
      %v4710 = vpop.permute.xlu0 %4709
      %4711 = vrot.lane.b32.xlu0 %v4592, 48
      %v4712 = vpop.permute.xlu0 %4711
      %4713 = vrot.lane.b32.xlu0 %v4595, 48
      %v4714 = vpop.permute.xlu0 %4713
      %4715 = vrot.lane.b32.xlu0 %v4607, 48
      %v4716 = vpop.permute.xlu0 %4715
      %4717 = vrot.lane.b32.xlu0 %v4610, 48
      %v4718 = vpop.permute.xlu0 %4717
      %4719 = vrot.lane.b32.xlu0 %v4622, 48
      %v4720 = vpop.permute.xlu0 %4719
      %4721 = vrot.lane.b32.xlu0 %v4625, 48
      %v4722 = vpop.permute.xlu0 %4721
      %4723 = vrot.lane.b32.xlu0 %v4637, 48
      %v4724 = vpop.permute.xlu0 %4723
      %4725 = vrot.lane.b32.xlu0 %v4640, 48
      %v4726 = vpop.permute.xlu0 %4725
      %4727 = vrot.lane.b32.xlu0 %v4652, 48
      %v4728 = vpop.permute.xlu0 %4727
      %4729 = vrot.lane.b32.xlu0 %v4655, 48
      %v4730 = vpop.permute.xlu0 %4729
      %4731 = vrot.lane.b32.xlu0 %v4667, 48
      %v4732 = vpop.permute.xlu0 %4731
      %4733 = vrot.lane.b32.xlu0 %v4670, 48
      %v4734 = vpop.permute.xlu0 %4733
      %v4767 = vunpack.c.l.b16 %v3437
      %v4768 = vunpack.c.l.b16 %v3438
      %v4769 = vunpack.c.l.b16 %v3439
      %v4770 = vunpack.c.l.b16 %v3440
      %v4771 = vunpack.c.l.b16 %v3441
      %v4772 = vunpack.c.l.b16 %v3442
      %v4773 = vunpack.c.l.b16 %v3443
      %v4774 = vunpack.c.l.b16 %v3444
      %v4775 = vunpack.c.l.b16 %v3445
      %v4776 = vunpack.c.l.b16 %v3446
      %v4777 = vunpack.c.l.b16 %v3447
      %v4778 = vunpack.c.l.b16 %v3448
      %v4779 = vunpack.c.l.b16 %v3449
      %v4780 = vunpack.c.l.b16 %v3450
      %v4781 = vunpack.c.l.b16 %v3451
      %v4782 = vunpack.c.l.b16 %v3452
      %v4783 = vunpack.c.l.b16 %v3453
      %v4784 = vunpack.c.l.b16 %v3454
      %v4785 = vunpack.c.l.b16 %v3455
      %v4786 = vunpack.c.l.b16 %v3456
      %v4787 = vunpack.c.l.b16 %v3457
      %v4788 = vunpack.c.l.b16 %v3458
      %v4789 = vunpack.c.l.b16 %v3459
      %v4790 = vunpack.c.l.b16 %v3460
      %v4791 = vunpack.c.l.b16 %v3461
      %v4792 = vunpack.c.l.b16 %v3462
      %v4793 = vunpack.c.l.b16 %v3463
      %v4794 = vunpack.c.l.b16 %v3464
      %v4795 = vunpack.c.l.b16 %v3465
      %v4796 = vunpack.c.l.b16 %v3466
      %v4797 = vunpack.c.l.b16 %v3467
      %v4798 = vunpack.c.l.b16 %v3468
      %v4799 = vpack.c.b16 %v4768, %v4767
      %v4800 = vpack.c.b16 %v4770, %v4769
      %v4801 = vpack.c.b16 %v4772, %v4771
      %v4802 = vpack.c.b16 %v4774, %v4773
      %v4803 = vpack.c.b16 %v4776, %v4775
      %v4804 = vpack.c.b16 %v4778, %v4777
      %v4805 = vpack.c.b16 %v4780, %v4779
      %v4806 = vpack.c.b16 %v4782, %v4781
      %v4807 = vpack.c.b16 %v4784, %v4783
      %v4808 = vpack.c.b16 %v4786, %v4785
      %v4809 = vpack.c.b16 %v4788, %v4787
      %v4810 = vpack.c.b16 %v4790, %v4789
      %v4811 = vpack.c.b16 %v4792, %v4791
      %v4812 = vpack.c.b16 %v4794, %v4793
      %v4813 = vpack.c.b16 %v4796, %v4795
      %v4814 = vpack.c.b16 %v4798, %v4797
      %v4816 = vshrl.u32 %v4799, 16
      %v4818 = vrot.slane %v4816, 6
      %v4819 = vshll.u32 %v4799, 16
      %v4821 = vrot.slane %v4819, 7
      %v4822 = vor.u32 %v4818, %v4821
      %v4824 = vshrl.u32 %v4800, 16
      %v4826 = vrot.slane %v4824, 6
      %v4827 = vshll.u32 %v4800, 16
      %v4829 = vrot.slane %v4827, 7
      %v4830 = vor.u32 %v4826, %v4829
      %v4832 = vshrl.u32 %v4801, 16
      %v4834 = vrot.slane %v4832, 6
      %v4835 = vshll.u32 %v4801, 16
      %v4837 = vrot.slane %v4835, 7
      %v4838 = vor.u32 %v4834, %v4837
      %v4840 = vshrl.u32 %v4802, 16
      %v4842 = vrot.slane %v4840, 6
      %v4843 = vshll.u32 %v4802, 16
      %v4845 = vrot.slane %v4843, 7
      %v4846 = vor.u32 %v4842, %v4845
      %v4848 = vshrl.u32 %v4803, 16
      %v4850 = vrot.slane %v4848, 6
      %v4851 = vshll.u32 %v4803, 16
      %v4853 = vrot.slane %v4851, 7
      %v4854 = vor.u32 %v4850, %v4853
      %v4856 = vshrl.u32 %v4804, 16
      %v4858 = vrot.slane %v4856, 6
      %v4859 = vshll.u32 %v4804, 16
      %v4861 = vrot.slane %v4859, 7
      %v4862 = vor.u32 %v4858, %v4861
      %v4864 = vshrl.u32 %v4805, 16
      %v4866 = vrot.slane %v4864, 6
      %v4867 = vshll.u32 %v4805, 16
      %v4869 = vrot.slane %v4867, 7
      %v4870 = vor.u32 %v4866, %v4869
      %v4872 = vshrl.u32 %v4806, 16
      %v4874 = vrot.slane %v4872, 6
      %v4875 = vshll.u32 %v4806, 16
      %v4877 = vrot.slane %v4875, 7
      %v4878 = vor.u32 %v4874, %v4877
      %v4880 = vshrl.u32 %v4807, 16
      %v4882 = vrot.slane %v4880, 6
      %v4883 = vshll.u32 %v4807, 16
      %v4885 = vrot.slane %v4883, 7
      %v4886 = vor.u32 %v4882, %v4885
      %v4888 = vshrl.u32 %v4808, 16
      %v4890 = vrot.slane %v4888, 6
      %v4891 = vshll.u32 %v4808, 16
      %v4893 = vrot.slane %v4891, 7
      %v4894 = vor.u32 %v4890, %v4893
      %v4896 = vshrl.u32 %v4809, 16
      %v4898 = vrot.slane %v4896, 6
      %v4899 = vshll.u32 %v4809, 16
      %v4901 = vrot.slane %v4899, 7
      %v4902 = vor.u32 %v4898, %v4901
      %v4904 = vshrl.u32 %v4810, 16
      %v4906 = vrot.slane %v4904, 6
      %v4907 = vshll.u32 %v4810, 16
      %v4909 = vrot.slane %v4907, 7
      %v4910 = vor.u32 %v4906, %v4909
      %v4912 = vshrl.u32 %v4811, 16
      %v4914 = vrot.slane %v4912, 6
      %v4915 = vshll.u32 %v4811, 16
      %v4917 = vrot.slane %v4915, 7
      %v4918 = vor.u32 %v4914, %v4917
      %v4920 = vshrl.u32 %v4812, 16
      %v4922 = vrot.slane %v4920, 6
      %v4923 = vshll.u32 %v4812, 16
      %v4925 = vrot.slane %v4923, 7
      %v4926 = vor.u32 %v4922, %v4925
      %v4928 = vshrl.u32 %v4813, 16
      %v4930 = vrot.slane %v4928, 6
      %v4931 = vshll.u32 %v4813, 16
      %v4933 = vrot.slane %v4931, 7
      %v4934 = vor.u32 %v4930, %v4933
      %v4936 = vshrl.u32 %v4814, 16
      %v4938 = vrot.slane %v4936, 6
      %v4939 = vshll.u32 %v4814, 16
      %v4941 = vrot.slane %v4939, 7
      %v4942 = vor.u32 %v4938, %v4941
      %4943 = vrot.lane.b32.xlu0 %v4822, 64
      %v4944 = vpop.permute.xlu0 %4943
      %4945 = vrot.lane.b32.xlu0 %v4830, 64
      %v4946 = vpop.permute.xlu0 %4945
      %4947 = vrot.lane.b32.xlu0 %v4838, 64
      %v4948 = vpop.permute.xlu0 %4947
      %4949 = vrot.lane.b32.xlu0 %v4846, 64
      %v4950 = vpop.permute.xlu0 %4949
      %4951 = vrot.lane.b32.xlu0 %v4854, 64
      %v4952 = vpop.permute.xlu0 %4951
      %4953 = vrot.lane.b32.xlu0 %v4862, 64
      %v4954 = vpop.permute.xlu0 %4953
      %4955 = vrot.lane.b32.xlu0 %v4870, 64
      %v4956 = vpop.permute.xlu0 %4955
      %4957 = vrot.lane.b32.xlu0 %v4878, 64
      %v4958 = vpop.permute.xlu0 %4957
      %4959 = vrot.lane.b32.xlu0 %v4886, 64
      %v4960 = vpop.permute.xlu0 %4959
      %4961 = vrot.lane.b32.xlu0 %v4894, 64
      %v4962 = vpop.permute.xlu0 %4961
      %4963 = vrot.lane.b32.xlu0 %v4902, 64
      %v4964 = vpop.permute.xlu0 %4963
      %4965 = vrot.lane.b32.xlu0 %v4910, 64
      %v4966 = vpop.permute.xlu0 %4965
      %4967 = vrot.lane.b32.xlu0 %v4918, 64
      %v4968 = vpop.permute.xlu0 %4967
      %4969 = vrot.lane.b32.xlu0 %v4926, 64
      %v4970 = vpop.permute.xlu0 %4969
      %4971 = vrot.lane.b32.xlu0 %v4934, 64
      %v4972 = vpop.permute.xlu0 %4971
      %4973 = vrot.lane.b32.xlu0 %v4942, 64
      %v4974 = vpop.permute.xlu0 %4973
      %v5007 = vunpack.c.l.b16 %v3469
      %v5008 = vunpack.c.l.b16 %v3470
      %v5009 = vunpack.c.l.b16 %v3471
      %v5010 = vunpack.c.l.b16 %v3472
      %v5011 = vunpack.c.l.b16 %v3473
      %v5012 = vunpack.c.l.b16 %v3474
      %v5013 = vunpack.c.l.b16 %v3475
      %v5014 = vunpack.c.l.b16 %v3476
      %v5015 = vunpack.c.l.b16 %v3477
      %v5016 = vunpack.c.l.b16 %v3478
      %v5017 = vunpack.c.l.b16 %v3479
      %v5018 = vunpack.c.l.b16 %v3480
      %v5019 = vunpack.c.l.b16 %v3481
      %v5020 = vunpack.c.l.b16 %v3482
      %v5021 = vunpack.c.l.b16 %v3483
      %v5022 = vunpack.c.l.b16 %v3484
      %v5023 = vunpack.c.l.b16 %v3485
      %v5024 = vunpack.c.l.b16 %v3486
      %v5025 = vunpack.c.l.b16 %v3487
      %v5026 = vunpack.c.l.b16 %v3488
      %v5027 = vunpack.c.l.b16 %v3489
      %v5028 = vunpack.c.l.b16 %v3490
      %v5029 = vunpack.c.l.b16 %v3491
      %v5030 = vunpack.c.l.b16 %v3492
      %v5031 = vunpack.c.l.b16 %v3493
      %v5032 = vunpack.c.l.b16 %v3494
      %v5033 = vunpack.c.l.b16 %v3495
      %v5034 = vunpack.c.l.b16 %v3496
      %v5035 = vunpack.c.l.b16 %v3497
      %v5036 = vunpack.c.l.b16 %v3498
      %v5037 = vunpack.c.l.b16 %v3499
      %v5038 = vunpack.c.l.b16 %v3500
      %v5039 = vpack.c.b16 %v4768, %v5007
      %v5040 = vpack.c.b16 %v5008, %v5008
      %v5041 = vpack.c.b16 %v4770, %v5009
      %v5042 = vpack.c.b16 %v5010, %v5010
      %v5043 = vpack.c.b16 %v4772, %v5011
      %v5044 = vpack.c.b16 %v5012, %v5012
      %v5045 = vpack.c.b16 %v4774, %v5013
      %v5046 = vpack.c.b16 %v5014, %v5014
      %v5047 = vpack.c.b16 %v4776, %v5015
      %v5048 = vpack.c.b16 %v5016, %v5016
      %v5049 = vpack.c.b16 %v4778, %v5017
      %v5050 = vpack.c.b16 %v5018, %v5018
      %v5051 = vpack.c.b16 %v4780, %v5019
      %v5052 = vpack.c.b16 %v5020, %v5020
      %v5053 = vpack.c.b16 %v4782, %v5021
      %v5054 = vpack.c.b16 %v5022, %v5022
      %v5055 = vpack.c.b16 %v4784, %v5023
      %v5056 = vpack.c.b16 %v5024, %v5024
      %v5057 = vpack.c.b16 %v4786, %v5025
      %v5058 = vpack.c.b16 %v5026, %v5026
      %v5059 = vpack.c.b16 %v4788, %v5027
      %v5060 = vpack.c.b16 %v5028, %v5028
      %v5061 = vpack.c.b16 %v4790, %v5029
      %v5062 = vpack.c.b16 %v5030, %v5030
      %v5063 = vpack.c.b16 %v4792, %v5031
      %v5064 = vpack.c.b16 %v5032, %v5032
      %v5065 = vpack.c.b16 %v4794, %v5033
      %v5066 = vpack.c.b16 %v5034, %v5034
      %v5067 = vpack.c.b16 %v4796, %v5035
      %v5068 = vpack.c.b16 %v5036, %v5036
      %v5069 = vpack.c.b16 %v4798, %v5037
      %v5070 = vpack.c.b16 %v5038, %v5038
      %v5072 = vshrl.u32 %v5039, 16
      %v5074 = vrot.slane %v5072, 7
      %v5075 = vshll.u32 %v5039, 16
      %v5077 = vor.u32 %v5074, %v5075
      %v5079 = vshrl.u32 %v5040, 16
      %v5081 = vrot.slane %v5079, 7
      %v5082 = vshll.u32 %v5040, 16
      %v5084 = vor.u32 %v5081, %v5082
      %v5085 = vsel %vm4030, %v5074, %v5084
      %v5087 = vshrl.u32 %v5041, 16
      %v5089 = vrot.slane %v5087, 7
      %v5090 = vshll.u32 %v5041, 16
      %v5092 = vor.u32 %v5089, %v5090
      %v5094 = vshrl.u32 %v5042, 16
      %v5096 = vrot.slane %v5094, 7
      %v5097 = vshll.u32 %v5042, 16
      %v5099 = vor.u32 %v5096, %v5097
      %v5100 = vsel %vm4030, %v5089, %v5099
      %v5102 = vshrl.u32 %v5043, 16
      %v5104 = vrot.slane %v5102, 7
      %v5105 = vshll.u32 %v5043, 16
      %v5107 = vor.u32 %v5104, %v5105
      %v5109 = vshrl.u32 %v5044, 16
      %v5111 = vrot.slane %v5109, 7
      %v5112 = vshll.u32 %v5044, 16
      %v5114 = vor.u32 %v5111, %v5112
      %v5115 = vsel %vm4030, %v5104, %v5114
      %v5117 = vshrl.u32 %v5045, 16
      %v5119 = vrot.slane %v5117, 7
      %v5120 = vshll.u32 %v5045, 16
      %v5122 = vor.u32 %v5119, %v5120
      %v5124 = vshrl.u32 %v5046, 16
      %v5126 = vrot.slane %v5124, 7
      %v5127 = vshll.u32 %v5046, 16
      %v5129 = vor.u32 %v5126, %v5127
      %v5130 = vsel %vm4030, %v5119, %v5129
      %v5132 = vshrl.u32 %v5047, 16
      %v5134 = vrot.slane %v5132, 7
      %v5135 = vshll.u32 %v5047, 16
      %v5137 = vor.u32 %v5134, %v5135
      %v5139 = vshrl.u32 %v5048, 16
      %v5141 = vrot.slane %v5139, 7
      %v5142 = vshll.u32 %v5048, 16
      %v5144 = vor.u32 %v5141, %v5142
      %v5145 = vsel %vm4030, %v5134, %v5144
      %v5147 = vshrl.u32 %v5049, 16
      %v5149 = vrot.slane %v5147, 7
      %v5150 = vshll.u32 %v5049, 16
      %v5152 = vor.u32 %v5149, %v5150
      %v5154 = vshrl.u32 %v5050, 16
      %v5156 = vrot.slane %v5154, 7
      %v5157 = vshll.u32 %v5050, 16
      %v5159 = vor.u32 %v5156, %v5157
      %v5160 = vsel %vm4030, %v5149, %v5159
      %v5162 = vshrl.u32 %v5051, 16
      %v5164 = vrot.slane %v5162, 7
      %v5165 = vshll.u32 %v5051, 16
      %v5167 = vor.u32 %v5164, %v5165
      %v5169 = vshrl.u32 %v5052, 16
      %v5171 = vrot.slane %v5169, 7
      %v5172 = vshll.u32 %v5052, 16
      %v5174 = vor.u32 %v5171, %v5172
      %v5175 = vsel %vm4030, %v5164, %v5174
      %v5177 = vshrl.u32 %v5053, 16
      %v5179 = vrot.slane %v5177, 7
      %v5180 = vshll.u32 %v5053, 16
      %v5182 = vor.u32 %v5179, %v5180
      %v5184 = vshrl.u32 %v5054, 16
      %v5186 = vrot.slane %v5184, 7
      %v5187 = vshll.u32 %v5054, 16
      %v5189 = vor.u32 %v5186, %v5187
      %v5190 = vsel %vm4030, %v5179, %v5189
      %v5192 = vshrl.u32 %v5055, 16
      %v5194 = vrot.slane %v5192, 7
      %v5195 = vshll.u32 %v5055, 16
      %v5197 = vor.u32 %v5194, %v5195
      %v5199 = vshrl.u32 %v5056, 16
      %v5201 = vrot.slane %v5199, 7
      %v5202 = vshll.u32 %v5056, 16
      %v5204 = vor.u32 %v5201, %v5202
      %v5205 = vsel %vm4030, %v5194, %v5204
      %v5207 = vshrl.u32 %v5057, 16
      %v5209 = vrot.slane %v5207, 7
      %v5210 = vshll.u32 %v5057, 16
      %v5212 = vor.u32 %v5209, %v5210
      %v5214 = vshrl.u32 %v5058, 16
      %v5216 = vrot.slane %v5214, 7
      %v5217 = vshll.u32 %v5058, 16
      %v5219 = vor.u32 %v5216, %v5217
      %v5220 = vsel %vm4030, %v5209, %v5219
      %v5222 = vshrl.u32 %v5059, 16
      %v5224 = vrot.slane %v5222, 7
      %v5225 = vshll.u32 %v5059, 16
      %v5227 = vor.u32 %v5224, %v5225
      %v5229 = vshrl.u32 %v5060, 16
      %v5231 = vrot.slane %v5229, 7
      %v5232 = vshll.u32 %v5060, 16
      %v5234 = vor.u32 %v5231, %v5232
      %v5235 = vsel %vm4030, %v5224, %v5234
      %v5237 = vshrl.u32 %v5061, 16
      %v5239 = vrot.slane %v5237, 7
      %v5240 = vshll.u32 %v5061, 16
      %v5242 = vor.u32 %v5239, %v5240
      %v5244 = vshrl.u32 %v5062, 16
      %v5246 = vrot.slane %v5244, 7
      %v5247 = vshll.u32 %v5062, 16
      %v5249 = vor.u32 %v5246, %v5247
      %v5250 = vsel %vm4030, %v5239, %v5249
      %v5252 = vshrl.u32 %v5063, 16
      %v5254 = vrot.slane %v5252, 7
      %v5255 = vshll.u32 %v5063, 16
      %v5257 = vor.u32 %v5254, %v5255
      %v5259 = vshrl.u32 %v5064, 16
      %v5261 = vrot.slane %v5259, 7
      %v5262 = vshll.u32 %v5064, 16
      %v5264 = vor.u32 %v5261, %v5262
      %v5265 = vsel %vm4030, %v5254, %v5264
      %v5267 = vshrl.u32 %v5065, 16
      %v5269 = vrot.slane %v5267, 7
      %v5270 = vshll.u32 %v5065, 16
      %v5272 = vor.u32 %v5269, %v5270
      %v5274 = vshrl.u32 %v5066, 16
      %v5276 = vrot.slane %v5274, 7
      %v5277 = vshll.u32 %v5066, 16
      %v5279 = vor.u32 %v5276, %v5277
      %v5280 = vsel %vm4030, %v5269, %v5279
      %v5282 = vshrl.u32 %v5067, 16
      %v5284 = vrot.slane %v5282, 7
      %v5285 = vshll.u32 %v5067, 16
      %v5287 = vor.u32 %v5284, %v5285
      %v5289 = vshrl.u32 %v5068, 16
      %v5291 = vrot.slane %v5289, 7
      %v5292 = vshll.u32 %v5068, 16
      %v5294 = vor.u32 %v5291, %v5292
      %v5295 = vsel %vm4030, %v5284, %v5294
      %v5297 = vshrl.u32 %v5069, 16
      %v5299 = vrot.slane %v5297, 7
      %v5300 = vshll.u32 %v5069, 16
      %v5302 = vor.u32 %v5299, %v5300
      %v5304 = vshrl.u32 %v5070, 16
      %v5306 = vrot.slane %v5304, 7
      %v5307 = vshll.u32 %v5070, 16
      %v5309 = vor.u32 %v5306, %v5307
      %v5310 = vsel %vm4030, %v5299, %v5309
      %5311 = vrot.lane.b32.xlu0 %v5077, 80
      %v5312 = vpop.permute.xlu0 %5311
      %5313 = vrot.lane.b32.xlu0 %v5085, 80
      %v5314 = vpop.permute.xlu0 %5313
      %5315 = vrot.lane.b32.xlu0 %v5092, 80
      %v5316 = vpop.permute.xlu0 %5315
      %5317 = vrot.lane.b32.xlu0 %v5100, 80
      %v5318 = vpop.permute.xlu0 %5317
      %5319 = vrot.lane.b32.xlu0 %v5107, 80
      %v5320 = vpop.permute.xlu0 %5319
      %5321 = vrot.lane.b32.xlu0 %v5115, 80
      %v5322 = vpop.permute.xlu0 %5321
      %5323 = vrot.lane.b32.xlu0 %v5122, 80
      %v5324 = vpop.permute.xlu0 %5323
      %5325 = vrot.lane.b32.xlu0 %v5130, 80
      %v5326 = vpop.permute.xlu0 %5325
      %5327 = vrot.lane.b32.xlu0 %v5137, 80
      %v5328 = vpop.permute.xlu0 %5327
      %5329 = vrot.lane.b32.xlu0 %v5145, 80
      %v5330 = vpop.permute.xlu0 %5329
      %5331 = vrot.lane.b32.xlu0 %v5152, 80
      %v5332 = vpop.permute.xlu0 %5331
      %5333 = vrot.lane.b32.xlu0 %v5160, 80
      %v5334 = vpop.permute.xlu0 %5333
      %5335 = vrot.lane.b32.xlu0 %v5167, 80
      %v5336 = vpop.permute.xlu0 %5335
      %5337 = vrot.lane.b32.xlu0 %v5175, 80
      %v5338 = vpop.permute.xlu0 %5337
      %5339 = vrot.lane.b32.xlu0 %v5182, 80
      %v5340 = vpop.permute.xlu0 %5339
      %5341 = vrot.lane.b32.xlu0 %v5190, 80
      %v5342 = vpop.permute.xlu0 %5341
      %5343 = vrot.lane.b32.xlu0 %v5197, 80
      %v5344 = vpop.permute.xlu0 %5343
      %5345 = vrot.lane.b32.xlu0 %v5205, 80
      %v5346 = vpop.permute.xlu0 %5345
      %5347 = vrot.lane.b32.xlu0 %v5212, 80
      %v5348 = vpop.permute.xlu0 %5347
      %5349 = vrot.lane.b32.xlu0 %v5220, 80
      %v5350 = vpop.permute.xlu0 %5349
      %5351 = vrot.lane.b32.xlu0 %v5227, 80
      %v5352 = vpop.permute.xlu0 %5351
      %5353 = vrot.lane.b32.xlu0 %v5235, 80
      %v5354 = vpop.permute.xlu0 %5353
      %5355 = vrot.lane.b32.xlu0 %v5242, 80
      %v5356 = vpop.permute.xlu0 %5355
      %5357 = vrot.lane.b32.xlu0 %v5250, 80
      %v5358 = vpop.permute.xlu0 %5357
      %5359 = vrot.lane.b32.xlu0 %v5257, 80
      %v5360 = vpop.permute.xlu0 %5359
      %5361 = vrot.lane.b32.xlu0 %v5265, 80
      %v5362 = vpop.permute.xlu0 %5361
      %5363 = vrot.lane.b32.xlu0 %v5272, 80
      %v5364 = vpop.permute.xlu0 %5363
      %5365 = vrot.lane.b32.xlu0 %v5280, 80
      %v5366 = vpop.permute.xlu0 %5365
      %5367 = vrot.lane.b32.xlu0 %v5287, 80
      %v5368 = vpop.permute.xlu0 %5367
      %5369 = vrot.lane.b32.xlu0 %v5295, 80
      %v5370 = vpop.permute.xlu0 %5369
      %5371 = vrot.lane.b32.xlu0 %v5302, 80
      %v5372 = vpop.permute.xlu0 %5371
      %5373 = vrot.lane.b32.xlu0 %v5310, 80
      %v5374 = vpop.permute.xlu0 %5373
      %v5407 = vunpack.c.l.b16 %v3501
      %v5408 = vunpack.c.l.b16 %v3502
      %v5409 = vunpack.c.l.b16 %v3503
      %v5410 = vunpack.c.l.b16 %v3504
      %v5411 = vunpack.c.l.b16 %v3505
      %v5412 = vunpack.c.l.b16 %v3506
      %v5413 = vunpack.c.l.b16 %v3507
      %v5414 = vunpack.c.l.b16 %v3508
      %v5415 = vunpack.c.l.b16 %v3509
      %v5416 = vunpack.c.l.b16 %v3510
      %v5417 = vunpack.c.l.b16 %v3511
      %v5418 = vunpack.c.l.b16 %v3512
      %v5419 = vunpack.c.l.b16 %v3513
      %v5420 = vunpack.c.l.b16 %v3514
      %v5421 = vunpack.c.l.b16 %v3515
      %v5422 = vunpack.c.l.b16 %v3516
      %v5423 = vunpack.c.l.b16 %v3517
      %v5424 = vunpack.c.l.b16 %v3518
      %v5425 = vunpack.c.l.b16 %v3519
      %v5426 = vunpack.c.l.b16 %v3520
      %v5427 = vunpack.c.l.b16 %v3521
      %v5428 = vunpack.c.l.b16 %v3522
      %v5429 = vunpack.c.l.b16 %v3523
      %v5430 = vunpack.c.l.b16 %v3524
      %v5431 = vunpack.c.l.b16 %v3525
      %v5432 = vunpack.c.l.b16 %v3526
      %v5433 = vunpack.c.l.b16 %v3527
      %v5434 = vunpack.c.l.b16 %v3528
      %v5435 = vunpack.c.l.b16 %v3529
      %v5436 = vunpack.c.l.b16 %v3530
      %v5437 = vunpack.c.l.b16 %v3531
      %v5438 = vunpack.c.l.b16 %v3532
      %v5439 = vpack.c.b16 %v4768, %v5407
      %v5440 = vpack.c.b16 %v5408, %v5408
      %v5441 = vpack.c.b16 %v4770, %v5409
      %v5442 = vpack.c.b16 %v5410, %v5410
      %v5443 = vpack.c.b16 %v4772, %v5411
      %v5444 = vpack.c.b16 %v5412, %v5412
      %v5445 = vpack.c.b16 %v4774, %v5413
      %v5446 = vpack.c.b16 %v5414, %v5414
      %v5447 = vpack.c.b16 %v4776, %v5415
      %v5448 = vpack.c.b16 %v5416, %v5416
      %v5449 = vpack.c.b16 %v4778, %v5417
      %v5450 = vpack.c.b16 %v5418, %v5418
      %v5451 = vpack.c.b16 %v4780, %v5419
      %v5452 = vpack.c.b16 %v5420, %v5420
      %v5453 = vpack.c.b16 %v4782, %v5421
      %v5454 = vpack.c.b16 %v5422, %v5422
      %v5455 = vpack.c.b16 %v4784, %v5423
      %v5456 = vpack.c.b16 %v5424, %v5424
      %v5457 = vpack.c.b16 %v4786, %v5425
      %v5458 = vpack.c.b16 %v5426, %v5426
      %v5459 = vpack.c.b16 %v4788, %v5427
      %v5460 = vpack.c.b16 %v5428, %v5428
      %v5461 = vpack.c.b16 %v4790, %v5429
      %v5462 = vpack.c.b16 %v5430, %v5430
      %v5463 = vpack.c.b16 %v4792, %v5431
      %v5464 = vpack.c.b16 %v5432, %v5432
      %v5465 = vpack.c.b16 %v4794, %v5433
      %v5466 = vpack.c.b16 %v5434, %v5434
      %v5467 = vpack.c.b16 %v4796, %v5435
      %v5468 = vpack.c.b16 %v5436, %v5436
      %v5469 = vpack.c.b16 %v4798, %v5437
      %v5470 = vpack.c.b16 %v5438, %v5438
      %v5472 = vshrl.u32 %v5439, 16
      %v5474 = vshll.u32 %v5439, 16
      %v5476 = vrot.slane %v5474, 1
      %v5477 = vor.u32 %v5472, %v5476
      %v5479 = vshll.u32 %v5440, 16
      %v5481 = vrot.slane %v5479, 1
      %v5482 = vsel %vm868, %v5477, %v5481
      %v5483 = vshrl.u32 %v5440, 16
      %v5485 = vor.u32 %v5483, %v5481
      %v5487 = vshrl.u32 %v5441, 16
      %v5489 = vshll.u32 %v5441, 16
      %v5491 = vrot.slane %v5489, 1
      %v5492 = vor.u32 %v5487, %v5491
      %v5494 = vshll.u32 %v5442, 16
      %v5496 = vrot.slane %v5494, 1
      %v5497 = vsel %vm868, %v5492, %v5496
      %v5498 = vshrl.u32 %v5442, 16
      %v5500 = vor.u32 %v5498, %v5496
      %v5502 = vshrl.u32 %v5443, 16
      %v5504 = vshll.u32 %v5443, 16
      %v5506 = vrot.slane %v5504, 1
      %v5507 = vor.u32 %v5502, %v5506
      %v5509 = vshll.u32 %v5444, 16
      %v5511 = vrot.slane %v5509, 1
      %v5512 = vsel %vm868, %v5507, %v5511
      %v5513 = vshrl.u32 %v5444, 16
      %v5515 = vor.u32 %v5513, %v5511
      %v5517 = vshrl.u32 %v5445, 16
      %v5519 = vshll.u32 %v5445, 16
      %v5521 = vrot.slane %v5519, 1
      %v5522 = vor.u32 %v5517, %v5521
      %v5524 = vshll.u32 %v5446, 16
      %v5526 = vrot.slane %v5524, 1
      %v5527 = vsel %vm868, %v5522, %v5526
      %v5528 = vshrl.u32 %v5446, 16
      %v5530 = vor.u32 %v5528, %v5526
      %v5532 = vshrl.u32 %v5447, 16
      %v5534 = vshll.u32 %v5447, 16
      %v5536 = vrot.slane %v5534, 1
      %v5537 = vor.u32 %v5532, %v5536
      %v5539 = vshll.u32 %v5448, 16
      %v5541 = vrot.slane %v5539, 1
      %v5542 = vsel %vm868, %v5537, %v5541
      %v5543 = vshrl.u32 %v5448, 16
      %v5545 = vor.u32 %v5543, %v5541
      %v5547 = vshrl.u32 %v5449, 16
      %v5549 = vshll.u32 %v5449, 16
      %v5551 = vrot.slane %v5549, 1
      %v5552 = vor.u32 %v5547, %v5551
      %v5554 = vshll.u32 %v5450, 16
      %v5556 = vrot.slane %v5554, 1
      %v5557 = vsel %vm868, %v5552, %v5556
      %v5558 = vshrl.u32 %v5450, 16
      %v5560 = vor.u32 %v5558, %v5556
      %v5562 = vshrl.u32 %v5451, 16
      %v5564 = vshll.u32 %v5451, 16
      %v5566 = vrot.slane %v5564, 1
      %v5567 = vor.u32 %v5562, %v5566
      %v5569 = vshll.u32 %v5452, 16
      %v5571 = vrot.slane %v5569, 1
      %v5572 = vsel %vm868, %v5567, %v5571
      %v5573 = vshrl.u32 %v5452, 16
      %v5575 = vor.u32 %v5573, %v5571
      %v5577 = vshrl.u32 %v5453, 16
      %v5579 = vshll.u32 %v5453, 16
      %v5581 = vrot.slane %v5579, 1
      %v5582 = vor.u32 %v5577, %v5581
      %v5584 = vshll.u32 %v5454, 16
      %v5586 = vrot.slane %v5584, 1
      %v5587 = vsel %vm868, %v5582, %v5586
      %v5588 = vshrl.u32 %v5454, 16
      %v5590 = vor.u32 %v5588, %v5586
      %v5592 = vshrl.u32 %v5455, 16
      %v5594 = vshll.u32 %v5455, 16
      %v5596 = vrot.slane %v5594, 1
      %v5597 = vor.u32 %v5592, %v5596
      %v5599 = vshll.u32 %v5456, 16
      %v5601 = vrot.slane %v5599, 1
      %v5602 = vsel %vm868, %v5597, %v5601
      %v5603 = vshrl.u32 %v5456, 16
      %v5605 = vor.u32 %v5603, %v5601
      %v5607 = vshrl.u32 %v5457, 16
      %v5609 = vshll.u32 %v5457, 16
      %v5611 = vrot.slane %v5609, 1
      %v5612 = vor.u32 %v5607, %v5611
      %v5614 = vshll.u32 %v5458, 16
      %v5616 = vrot.slane %v5614, 1
      %v5617 = vsel %vm868, %v5612, %v5616
      %v5618 = vshrl.u32 %v5458, 16
      %v5620 = vor.u32 %v5618, %v5616
      %v5622 = vshrl.u32 %v5459, 16
      %v5624 = vshll.u32 %v5459, 16
      %v5626 = vrot.slane %v5624, 1
      %v5627 = vor.u32 %v5622, %v5626
      %v5629 = vshll.u32 %v5460, 16
      %v5631 = vrot.slane %v5629, 1
      %v5632 = vsel %vm868, %v5627, %v5631
      %v5633 = vshrl.u32 %v5460, 16
      %v5635 = vor.u32 %v5633, %v5631
      %v5637 = vshrl.u32 %v5461, 16
      %v5639 = vshll.u32 %v5461, 16
      %v5641 = vrot.slane %v5639, 1
      %v5642 = vor.u32 %v5637, %v5641
      %v5644 = vshll.u32 %v5462, 16
      %v5646 = vrot.slane %v5644, 1
      %v5647 = vsel %vm868, %v5642, %v5646
      %v5648 = vshrl.u32 %v5462, 16
      %v5650 = vor.u32 %v5648, %v5646
      %v5652 = vshrl.u32 %v5463, 16
      %v5654 = vshll.u32 %v5463, 16
      %v5656 = vrot.slane %v5654, 1
      %v5657 = vor.u32 %v5652, %v5656
      %v5659 = vshll.u32 %v5464, 16
      %v5661 = vrot.slane %v5659, 1
      %v5662 = vsel %vm868, %v5657, %v5661
      %v5663 = vshrl.u32 %v5464, 16
      %v5665 = vor.u32 %v5663, %v5661
      %v5667 = vshrl.u32 %v5465, 16
      %v5669 = vshll.u32 %v5465, 16
      %v5671 = vrot.slane %v5669, 1
      %v5672 = vor.u32 %v5667, %v5671
      %v5674 = vshll.u32 %v5466, 16
      %v5676 = vrot.slane %v5674, 1
      %v5677 = vsel %vm868, %v5672, %v5676
      %v5678 = vshrl.u32 %v5466, 16
      %v5680 = vor.u32 %v5678, %v5676
      %v5682 = vshrl.u32 %v5467, 16
      %v5684 = vshll.u32 %v5467, 16
      %v5686 = vrot.slane %v5684, 1
      %v5687 = vor.u32 %v5682, %v5686
      %v5689 = vshll.u32 %v5468, 16
      %v5691 = vrot.slane %v5689, 1
      %v5692 = vsel %vm868, %v5687, %v5691
      %v5693 = vshrl.u32 %v5468, 16
      %v5695 = vor.u32 %v5693, %v5691
      %v5697 = vshrl.u32 %v5469, 16
      %v5699 = vshll.u32 %v5469, 16
      %v5701 = vrot.slane %v5699, 1
      %v5702 = vor.u32 %v5697, %v5701
      %v5704 = vshll.u32 %v5470, 16
      %v5706 = vrot.slane %v5704, 1
      %v5707 = vsel %vm868, %v5702, %v5706
      %v5708 = vshrl.u32 %v5470, 16
      %v5710 = vor.u32 %v5708, %v5706
      %5711 = vrot.lane.b32.xlu0 %v5482, 96
      %v5712 = vpop.permute.xlu0 %5711
      %5713 = vrot.lane.b32.xlu0 %v5485, 96
      %v5714 = vpop.permute.xlu0 %5713
      %5715 = vrot.lane.b32.xlu0 %v5497, 96
      %v5716 = vpop.permute.xlu0 %5715
      %5717 = vrot.lane.b32.xlu0 %v5500, 96
      %v5718 = vpop.permute.xlu0 %5717
      %5719 = vrot.lane.b32.xlu0 %v5512, 96
      %v5720 = vpop.permute.xlu0 %5719
      %5721 = vrot.lane.b32.xlu0 %v5515, 96
      %v5722 = vpop.permute.xlu0 %5721
      %5723 = vrot.lane.b32.xlu0 %v5527, 96
      %v5724 = vpop.permute.xlu0 %5723
      %5725 = vrot.lane.b32.xlu0 %v5530, 96
      %v5726 = vpop.permute.xlu0 %5725
      %5727 = vrot.lane.b32.xlu0 %v5542, 96
      %v5728 = vpop.permute.xlu0 %5727
      %5729 = vrot.lane.b32.xlu0 %v5545, 96
      %v5730 = vpop.permute.xlu0 %5729
      %5731 = vrot.lane.b32.xlu0 %v5557, 96
      %v5732 = vpop.permute.xlu0 %5731
      %5733 = vrot.lane.b32.xlu0 %v5560, 96
      %v5734 = vpop.permute.xlu0 %5733
      %5735 = vrot.lane.b32.xlu0 %v5572, 96
      %v5736 = vpop.permute.xlu0 %5735
      %5737 = vrot.lane.b32.xlu0 %v5575, 96
      %v5738 = vpop.permute.xlu0 %5737
      %5739 = vrot.lane.b32.xlu0 %v5587, 96
      %v5740 = vpop.permute.xlu0 %5739
      %5741 = vrot.lane.b32.xlu0 %v5590, 96
      %v5742 = vpop.permute.xlu0 %5741
      %5743 = vrot.lane.b32.xlu0 %v5602, 96
      %v5744 = vpop.permute.xlu0 %5743
      %5745 = vrot.lane.b32.xlu0 %v5605, 96
      %v5746 = vpop.permute.xlu0 %5745
      %5747 = vrot.lane.b32.xlu0 %v5617, 96
      %v5748 = vpop.permute.xlu0 %5747
      %5749 = vrot.lane.b32.xlu0 %v5620, 96
      %v5750 = vpop.permute.xlu0 %5749
      %5751 = vrot.lane.b32.xlu0 %v5632, 96
      %v5752 = vpop.permute.xlu0 %5751
      %5753 = vrot.lane.b32.xlu0 %v5635, 96
      %v5754 = vpop.permute.xlu0 %5753
      %5755 = vrot.lane.b32.xlu0 %v5647, 96
      %v5756 = vpop.permute.xlu0 %5755
      %5757 = vrot.lane.b32.xlu0 %v5650, 96
      %v5758 = vpop.permute.xlu0 %5757
      %5759 = vrot.lane.b32.xlu0 %v5662, 96
      %v5760 = vpop.permute.xlu0 %5759
      %5761 = vrot.lane.b32.xlu0 %v5665, 96
      %v5762 = vpop.permute.xlu0 %5761
      %5763 = vrot.lane.b32.xlu0 %v5677, 96
      %v5764 = vpop.permute.xlu0 %5763
      %5765 = vrot.lane.b32.xlu0 %v5680, 96
      %v5766 = vpop.permute.xlu0 %5765
      %5767 = vrot.lane.b32.xlu0 %v5692, 96
      %v5768 = vpop.permute.xlu0 %5767
      %5769 = vrot.lane.b32.xlu0 %v5695, 96
      %v5770 = vpop.permute.xlu0 %5769
      %5771 = vrot.lane.b32.xlu0 %v5707, 96
      %v5772 = vpop.permute.xlu0 %5771
      %5773 = vrot.lane.b32.xlu0 %v5710, 96
      %v5774 = vpop.permute.xlu0 %5773
      %v5807 = vunpack.c.l.b16 %v3534
      %v5808 = vunpack.c.l.b16 %v3535
      %v5809 = vunpack.c.l.b16 %v3536
      %v5810 = vunpack.c.l.b16 %v3537
      %v5811 = vunpack.c.l.b16 %v3538
      %v5812 = vunpack.c.l.b16 %v3539
      %v5813 = vunpack.c.l.b16 %v3540
      %v5814 = vunpack.c.l.b16 %v3541
      %v5815 = vunpack.c.l.b16 %v3542
      %v5816 = vunpack.c.l.b16 %v3543
      %v5817 = vunpack.c.l.b16 %v3544
      %v5818 = vunpack.c.l.b16 %v3545
      %v5819 = vunpack.c.l.b16 %v3546
      %v5820 = vunpack.c.l.b16 %v3547
      %v5821 = vunpack.c.l.b16 %v3548
      %v5822 = vunpack.c.l.b16 %v3549
      %v5823 = vunpack.c.l.b16 %v3550
      %v5824 = vunpack.c.l.b16 %v3551
      %v5825 = vunpack.c.l.b16 %v3552
      %v5826 = vunpack.c.l.b16 %v3553
      %v5827 = vunpack.c.l.b16 %v3554
      %v5828 = vunpack.c.l.b16 %v3555
      %v5829 = vunpack.c.l.b16 %v3556
      %v5830 = vunpack.c.l.b16 %v3557
      %v5831 = vunpack.c.l.b16 %v3558
      %v5832 = vunpack.c.l.b16 %v3559
      %v5833 = vunpack.c.l.b16 %v3560
      %v5834 = vunpack.c.l.b16 %v3561
      %v5835 = vunpack.c.l.b16 %v3562
      %v5836 = vunpack.c.l.b16 %v3563
      %v5837 = vunpack.c.l.b16 %v3564
      %v5838 = vunpack.c.l.b16 %v3565
      %v5839 = vpack.c.b16 %v5808, %v5807
      %v5840 = vpack.c.b16 %v5810, %v5809
      %v5841 = vpack.c.b16 %v5812, %v5811
      %v5842 = vpack.c.b16 %v5814, %v5813
      %v5843 = vpack.c.b16 %v5816, %v5815
      %v5844 = vpack.c.b16 %v5818, %v5817
      %v5845 = vpack.c.b16 %v5820, %v5819
      %v5846 = vpack.c.b16 %v5822, %v5821
      %v5847 = vpack.c.b16 %v5824, %v5823
      %v5848 = vpack.c.b16 %v5826, %v5825
      %v5849 = vpack.c.b16 %v5828, %v5827
      %v5850 = vpack.c.b16 %v5830, %v5829
      %v5851 = vpack.c.b16 %v5832, %v5831
      %v5852 = vpack.c.b16 %v5834, %v5833
      %v5853 = vpack.c.b16 %v5836, %v5835
      %v5854 = vpack.c.b16 %v5838, %v5837
      %v5856 = vshrl.u32 %v5839, 16
      %v5858 = vrot.slane %v5856, 6
      %v5859 = vshll.u32 %v5839, 16
      %v5861 = vrot.slane %v5859, 7
      %v5862 = vor.u32 %v5858, %v5861
      %v5864 = vshrl.u32 %v5840, 16
      %v5866 = vrot.slane %v5864, 6
      %v5867 = vshll.u32 %v5840, 16
      %v5869 = vrot.slane %v5867, 7
      %v5870 = vor.u32 %v5866, %v5869
      %v5872 = vshrl.u32 %v5841, 16
      %v5874 = vrot.slane %v5872, 6
      %v5875 = vshll.u32 %v5841, 16
      %v5877 = vrot.slane %v5875, 7
      %v5878 = vor.u32 %v5874, %v5877
      %v5880 = vshrl.u32 %v5842, 16
      %v5882 = vrot.slane %v5880, 6
      %v5883 = vshll.u32 %v5842, 16
      %v5885 = vrot.slane %v5883, 7
      %v5886 = vor.u32 %v5882, %v5885
      %v5888 = vshrl.u32 %v5843, 16
      %v5890 = vrot.slane %v5888, 6
      %v5891 = vshll.u32 %v5843, 16
      %v5893 = vrot.slane %v5891, 7
      %v5894 = vor.u32 %v5890, %v5893
      %v5896 = vshrl.u32 %v5844, 16
      %v5898 = vrot.slane %v5896, 6
      %v5899 = vshll.u32 %v5844, 16
      %v5901 = vrot.slane %v5899, 7
      %v5902 = vor.u32 %v5898, %v5901
      %v5904 = vshrl.u32 %v5845, 16
      %v5906 = vrot.slane %v5904, 6
      %v5907 = vshll.u32 %v5845, 16
      %v5909 = vrot.slane %v5907, 7
      %v5910 = vor.u32 %v5906, %v5909
      %v5912 = vshrl.u32 %v5846, 16
      %v5914 = vrot.slane %v5912, 6
      %v5915 = vshll.u32 %v5846, 16
      %v5917 = vrot.slane %v5915, 7
      %v5918 = vor.u32 %v5914, %v5917
      %v5920 = vshrl.u32 %v5847, 16
      %v5922 = vrot.slane %v5920, 6
      %v5923 = vshll.u32 %v5847, 16
      %v5925 = vrot.slane %v5923, 7
      %v5926 = vor.u32 %v5922, %v5925
      %v5928 = vshrl.u32 %v5848, 16
      %v5930 = vrot.slane %v5928, 6
      %v5931 = vshll.u32 %v5848, 16
      %v5933 = vrot.slane %v5931, 7
      %v5934 = vor.u32 %v5930, %v5933
      %v5936 = vshrl.u32 %v5849, 16
      %v5938 = vrot.slane %v5936, 6
      %v5939 = vshll.u32 %v5849, 16
      %v5941 = vrot.slane %v5939, 7
      %v5942 = vor.u32 %v5938, %v5941
      %v5944 = vshrl.u32 %v5850, 16
      %v5946 = vrot.slane %v5944, 6
      %v5947 = vshll.u32 %v5850, 16
      %v5949 = vrot.slane %v5947, 7
      %v5950 = vor.u32 %v5946, %v5949
      %v5952 = vshrl.u32 %v5851, 16
      %v5954 = vrot.slane %v5952, 6
      %v5955 = vshll.u32 %v5851, 16
      %v5957 = vrot.slane %v5955, 7
      %v5958 = vor.u32 %v5954, %v5957
      %v5960 = vshrl.u32 %v5852, 16
      %v5962 = vrot.slane %v5960, 6
      %v5963 = vshll.u32 %v5852, 16
      %v5965 = vrot.slane %v5963, 7
      %v5966 = vor.u32 %v5962, %v5965
      %v5968 = vshrl.u32 %v5853, 16
      %v5970 = vrot.slane %v5968, 6
      %v5971 = vshll.u32 %v5853, 16
      %v5973 = vrot.slane %v5971, 7
      %v5974 = vor.u32 %v5970, %v5973
      %v5976 = vshrl.u32 %v5854, 16
      %v5978 = vrot.slane %v5976, 6
      %v5979 = vshll.u32 %v5854, 16
      %v5981 = vrot.slane %v5979, 7
      %v5982 = vor.u32 %v5978, %v5981
      %5983 = vrot.lane.b32.xlu0 %v5862, 112
      %v5984 = vpop.permute.xlu0 %5983
      %5985 = vrot.lane.b32.xlu0 %v5870, 112
      %v5986 = vpop.permute.xlu0 %5985
      %5987 = vrot.lane.b32.xlu0 %v5878, 112
      %v5988 = vpop.permute.xlu0 %5987
      %5989 = vrot.lane.b32.xlu0 %v5886, 112
      %v5990 = vpop.permute.xlu0 %5989
      %5991 = vrot.lane.b32.xlu0 %v5894, 112
      %v5992 = vpop.permute.xlu0 %5991
      %5993 = vrot.lane.b32.xlu0 %v5902, 112
      %v5994 = vpop.permute.xlu0 %5993
      %5995 = vrot.lane.b32.xlu0 %v5910, 112
      %v5996 = vpop.permute.xlu0 %5995
      %5997 = vrot.lane.b32.xlu0 %v5918, 112
      %v5998 = vpop.permute.xlu0 %5997
      %5999 = vrot.lane.b32.xlu0 %v5926, 112
      %v6000 = vpop.permute.xlu0 %5999
      %6001 = vrot.lane.b32.xlu0 %v5934, 112
      %v6002 = vpop.permute.xlu0 %6001
      %6003 = vrot.lane.b32.xlu0 %v5942, 112
      %v6004 = vpop.permute.xlu0 %6003
      %6005 = vrot.lane.b32.xlu0 %v5950, 112
      %v6006 = vpop.permute.xlu0 %6005
      %6007 = vrot.lane.b32.xlu0 %v5958, 112
      %v6008 = vpop.permute.xlu0 %6007
      %6009 = vrot.lane.b32.xlu0 %v5966, 112
      %v6010 = vpop.permute.xlu0 %6009
      %6011 = vrot.lane.b32.xlu0 %v5974, 112
      %v6012 = vpop.permute.xlu0 %6011
      %6013 = vrot.lane.b32.xlu0 %v5982, 112
      %v6014 = vpop.permute.xlu0 %6013
      %v6017 = vsel %vm2534, %v3662, %v3903
      %v6019 = vsel %vm2534, %v3663, %v3903
      %v6022 = vsel %vm2534, %v3664, %v3905
      %v6024 = vsel %vm2534, %v3665, %v3905
      %v6027 = vsel %vm2534, %v3666, %v3907
      %v6029 = vsel %vm2534, %v3667, %v3907
      %v6032 = vsel %vm2534, %v3668, %v3909
      %v6034 = vsel %vm2534, %v3669, %v3909
      %v6037 = vsel %vm2534, %v3670, %v3911
      %v6039 = vsel %vm2534, %v3671, %v3911
      %v6042 = vsel %vm2534, %v3672, %v3913
      %v6044 = vsel %vm2534, %v3673, %v3913
      %v6047 = vsel %vm2534, %v3674, %v3915
      %v6049 = vsel %vm2534, %v3675, %v3915
      %v6052 = vsel %vm2534, %v3676, %v3917
      %v6054 = vsel %vm2534, %v3677, %v3917
      %v6057 = vsel %vm2534, %v3678, %v3919
      %v6059 = vsel %vm2534, %v3679, %v3919
      %v6062 = vsel %vm2534, %v3680, %v3921
      %v6064 = vsel %vm2534, %v3681, %v3921
      %v6067 = vsel %vm2534, %v3682, %v3923
      %v6069 = vsel %vm2534, %v3683, %v3923
      %v6072 = vsel %vm2534, %v3684, %v3925
      %v6074 = vsel %vm2534, %v3685, %v3925
      %v6077 = vsel %vm2534, %v3686, %v3927
      %v6079 = vsel %vm2534, %v3687, %v3927
      %v6082 = vsel %vm2534, %v3688, %v3929
      %v6084 = vsel %vm2534, %v3689, %v3929
      %v6087 = vsel %vm2534, %v3690, %v3931
      %v6089 = vsel %vm2534, %v3691, %v3931
      %v6092 = vsel %vm2534, %v3692, %v3933
      %v6094 = vsel %vm2534, %v3693, %v3933
      %v6096 = vsel %vm2615, %v6017, %v4272
      %v6098 = vsel %vm2615, %v6019, %v4274
      %v6100 = vsel %vm2615, %v6022, %v4276
      %v6102 = vsel %vm2615, %v6024, %v4278
      %v6104 = vsel %vm2615, %v6027, %v4280
      %v6106 = vsel %vm2615, %v6029, %v4282
      %v6108 = vsel %vm2615, %v6032, %v4284
      %v6110 = vsel %vm2615, %v6034, %v4286
      %v6112 = vsel %vm2615, %v6037, %v4288
      %v6114 = vsel %vm2615, %v6039, %v4290
      %v6116 = vsel %vm2615, %v6042, %v4292
      %v6118 = vsel %vm2615, %v6044, %v4294
      %v6120 = vsel %vm2615, %v6047, %v4296
      %v6122 = vsel %vm2615, %v6049, %v4298
      %v6124 = vsel %vm2615, %v6052, %v4300
      %v6126 = vsel %vm2615, %v6054, %v4302
      %v6128 = vsel %vm2615, %v6057, %v4304
      %v6130 = vsel %vm2615, %v6059, %v4306
      %v6132 = vsel %vm2615, %v6062, %v4308
      %v6134 = vsel %vm2615, %v6064, %v4310
      %v6136 = vsel %vm2615, %v6067, %v4312
      %v6138 = vsel %vm2615, %v6069, %v4314
      %v6140 = vsel %vm2615, %v6072, %v4316
      %v6142 = vsel %vm2615, %v6074, %v4318
      %v6144 = vsel %vm2615, %v6077, %v4320
      %v6146 = vsel %vm2615, %v6079, %v4322
      %v6148 = vsel %vm2615, %v6082, %v4324
      %v6150 = vsel %vm2615, %v6084, %v4326
      %v6152 = vsel %vm2615, %v6087, %v4328
      %v6154 = vsel %vm2615, %v6089, %v4330
      %v6156 = vsel %vm2615, %v6092, %v4332
      %v6158 = vsel %vm2615, %v6094, %v4334
      %v6160 = vsel %vm2680, %v6096, %v4672
      %v6162 = vsel %vm2680, %v6098, %v4674
      %v6164 = vsel %vm2680, %v6100, %v4676
      %v6166 = vsel %vm2680, %v6102, %v4678
      %v6168 = vsel %vm2680, %v6104, %v4680
      %v6170 = vsel %vm2680, %v6106, %v4682
      %v6172 = vsel %vm2680, %v6108, %v4684
      %v6174 = vsel %vm2680, %v6110, %v4686
      %v6176 = vsel %vm2680, %v6112, %v4688
      %v6178 = vsel %vm2680, %v6114, %v4690
      %v6180 = vsel %vm2680, %v6116, %v4692
      %v6182 = vsel %vm2680, %v6118, %v4694
      %v6184 = vsel %vm2680, %v6120, %v4696
      %v6186 = vsel %vm2680, %v6122, %v4698
      %v6188 = vsel %vm2680, %v6124, %v4700
      %v6190 = vsel %vm2680, %v6126, %v4702
      %v6192 = vsel %vm2680, %v6128, %v4704
      %v6194 = vsel %vm2680, %v6130, %v4706
      %v6196 = vsel %vm2680, %v6132, %v4708
      %v6198 = vsel %vm2680, %v6134, %v4710
      %v6200 = vsel %vm2680, %v6136, %v4712
      %v6202 = vsel %vm2680, %v6138, %v4714
      %v6204 = vsel %vm2680, %v6140, %v4716
      %v6206 = vsel %vm2680, %v6142, %v4718
      %v6208 = vsel %vm2680, %v6144, %v4720
      %v6210 = vsel %vm2680, %v6146, %v4722
      %v6212 = vsel %vm2680, %v6148, %v4724
      %v6214 = vsel %vm2680, %v6150, %v4726
      %v6216 = vsel %vm2680, %v6152, %v4728
      %v6218 = vsel %vm2680, %v6154, %v4730
      %v6220 = vsel %vm2680, %v6156, %v4732
      %v6222 = vsel %vm2680, %v6158, %v4734
      %v6224 = vsel %vm2745, %v6160, %v4944
      %v6225 = vsel %vm2745, %v6162, %v4944
      %v6227 = vsel %vm2745, %v6164, %v4946
      %v6228 = vsel %vm2745, %v6166, %v4946
      %v6230 = vsel %vm2745, %v6168, %v4948
      %v6231 = vsel %vm2745, %v6170, %v4948
      %v6233 = vsel %vm2745, %v6172, %v4950
      %v6234 = vsel %vm2745, %v6174, %v4950
      %v6236 = vsel %vm2745, %v6176, %v4952
      %v6237 = vsel %vm2745, %v6178, %v4952
      %v6239 = vsel %vm2745, %v6180, %v4954
      %v6240 = vsel %vm2745, %v6182, %v4954
      %v6242 = vsel %vm2745, %v6184, %v4956
      %v6243 = vsel %vm2745, %v6186, %v4956
      %v6245 = vsel %vm2745, %v6188, %v4958
      %v6246 = vsel %vm2745, %v6190, %v4958
      %v6248 = vsel %vm2745, %v6192, %v4960
      %v6249 = vsel %vm2745, %v6194, %v4960
      %v6251 = vsel %vm2745, %v6196, %v4962
      %v6252 = vsel %vm2745, %v6198, %v4962
      %v6254 = vsel %vm2745, %v6200, %v4964
      %v6255 = vsel %vm2745, %v6202, %v4964
      %v6257 = vsel %vm2745, %v6204, %v4966
      %v6258 = vsel %vm2745, %v6206, %v4966
      %v6260 = vsel %vm2745, %v6208, %v4968
      %v6261 = vsel %vm2745, %v6210, %v4968
      %v6263 = vsel %vm2745, %v6212, %v4970
      %v6264 = vsel %vm2745, %v6214, %v4970
      %v6266 = vsel %vm2745, %v6216, %v4972
      %v6267 = vsel %vm2745, %v6218, %v4972
      %v6269 = vsel %vm2745, %v6220, %v4974
      %v6270 = vsel %vm2745, %v6222, %v4974
      %v6272 = vsel %vm2810, %v6224, %v5312
      %v6274 = vsel %vm2810, %v6225, %v5314
      %v6276 = vsel %vm2810, %v6227, %v5316
      %v6278 = vsel %vm2810, %v6228, %v5318
      %v6280 = vsel %vm2810, %v6230, %v5320
      %v6282 = vsel %vm2810, %v6231, %v5322
      %v6284 = vsel %vm2810, %v6233, %v5324
      %v6286 = vsel %vm2810, %v6234, %v5326
      %v6288 = vsel %vm2810, %v6236, %v5328
      %v6290 = vsel %vm2810, %v6237, %v5330
      %v6292 = vsel %vm2810, %v6239, %v5332
      %v6294 = vsel %vm2810, %v6240, %v5334
      %v6296 = vsel %vm2810, %v6242, %v5336
      %v6298 = vsel %vm2810, %v6243, %v5338
      %v6300 = vsel %vm2810, %v6245, %v5340
      %v6302 = vsel %vm2810, %v6246, %v5342
      %v6304 = vsel %vm2810, %v6248, %v5344
      %v6306 = vsel %vm2810, %v6249, %v5346
      %v6308 = vsel %vm2810, %v6251, %v5348
      %v6310 = vsel %vm2810, %v6252, %v5350
      %v6312 = vsel %vm2810, %v6254, %v5352
      %v6314 = vsel %vm2810, %v6255, %v5354
      %v6316 = vsel %vm2810, %v6257, %v5356
      %v6318 = vsel %vm2810, %v6258, %v5358
      %v6320 = vsel %vm2810, %v6260, %v5360
      %v6322 = vsel %vm2810, %v6261, %v5362
      %v6324 = vsel %vm2810, %v6263, %v5364
      %v6326 = vsel %vm2810, %v6264, %v5366
      %v6328 = vsel %vm2810, %v6266, %v5368
      %v6330 = vsel %vm2810, %v6267, %v5370
      %v6332 = vsel %vm2810, %v6269, %v5372
      %v6334 = vsel %vm2810, %v6270, %v5374
      %v6336 = vsel %vm2875, %v6272, %v5712
      %v6338 = vsel %vm2875, %v6274, %v5714
      %v6340 = vsel %vm2875, %v6276, %v5716
      %v6342 = vsel %vm2875, %v6278, %v5718
      %v6344 = vsel %vm2875, %v6280, %v5720
      %v6346 = vsel %vm2875, %v6282, %v5722
      %v6348 = vsel %vm2875, %v6284, %v5724
      %v6350 = vsel %vm2875, %v6286, %v5726
      %v6352 = vsel %vm2875, %v6288, %v5728
      %v6354 = vsel %vm2875, %v6290, %v5730
      %v6356 = vsel %vm2875, %v6292, %v5732
      %v6358 = vsel %vm2875, %v6294, %v5734
      %v6360 = vsel %vm2875, %v6296, %v5736
      %v6362 = vsel %vm2875, %v6298, %v5738
      %v6364 = vsel %vm2875, %v6300, %v5740
      %v6366 = vsel %vm2875, %v6302, %v5742
      %v6368 = vsel %vm2875, %v6304, %v5744
      %v6370 = vsel %vm2875, %v6306, %v5746
      %v6372 = vsel %vm2875, %v6308, %v5748
      %v6374 = vsel %vm2875, %v6310, %v5750
      %v6376 = vsel %vm2875, %v6312, %v5752
      %v6378 = vsel %vm2875, %v6314, %v5754
      %v6380 = vsel %vm2875, %v6316, %v5756
      %v6382 = vsel %vm2875, %v6318, %v5758
      %v6384 = vsel %vm2875, %v6320, %v5760
      %v6386 = vsel %vm2875, %v6322, %v5762
      %v6388 = vsel %vm2875, %v6324, %v5764
      %v6390 = vsel %vm2875, %v6326, %v5766
      %v6392 = vsel %vm2875, %v6328, %v5768
      %v6394 = vsel %vm2875, %v6330, %v5770
      %v6396 = vsel %vm2875, %v6332, %v5772
      %v6398 = vsel %vm2875, %v6334, %v5774
      %v6400 = vsel %vm2940, %v6336, %v5984
      %v6401 = vsel %vm2940, %v6338, %v5984
      %v6403 = vsel %vm2940, %v6340, %v5986
      %v6404 = vsel %vm2940, %v6342, %v5986
      %v6406 = vsel %vm2940, %v6344, %v5988
      %v6407 = vsel %vm2940, %v6346, %v5988
      %v6409 = vsel %vm2940, %v6348, %v5990
      %v6410 = vsel %vm2940, %v6350, %v5990
      %v6412 = vsel %vm2940, %v6352, %v5992
      %v6413 = vsel %vm2940, %v6354, %v5992
      %v6415 = vsel %vm2940, %v6356, %v5994
      %v6416 = vsel %vm2940, %v6358, %v5994
      %v6418 = vsel %vm2940, %v6360, %v5996
      %v6419 = vsel %vm2940, %v6362, %v5996
      %v6421 = vsel %vm2940, %v6364, %v5998
      %v6422 = vsel %vm2940, %v6366, %v5998
      %v6424 = vsel %vm2940, %v6368, %v6000
      %v6425 = vsel %vm2940, %v6370, %v6000
      %v6427 = vsel %vm2940, %v6372, %v6002
      %v6428 = vsel %vm2940, %v6374, %v6002
      %v6430 = vsel %vm2940, %v6376, %v6004
      %v6431 = vsel %vm2940, %v6378, %v6004
      %v6433 = vsel %vm2940, %v6380, %v6006
      %v6434 = vsel %vm2940, %v6382, %v6006
      %v6436 = vsel %vm2940, %v6384, %v6008
      %v6437 = vsel %vm2940, %v6386, %v6008
      %v6439 = vsel %vm2940, %v6388, %v6010
      %v6440 = vsel %vm2940, %v6390, %v6010
      %v6442 = vsel %vm2940, %v6392, %v6012
      %v6443 = vsel %vm2940, %v6394, %v6012
      %v6445 = vsel %vm2940, %v6396, %v6014
      %v6446 = vsel %vm2940, %v6398, %v6014
      %vm6447 = vsmask.f32 6400
      %v6448 = vshrl.u32 %v6400, 16
      %v6450 = vrot.slane %v6448, 1
      %v6451 = vshll.u32 %v6400, 16
      %v6453 = vrot.slane %v6451, 2
      %v6454 = vor.u32 %v6450, %v6453
      %v6455 = vshrl.u32 %v6401, 16
      %v6457 = vrot.slane %v6455, 1
      %v6458 = vshll.u32 %v6401, 16
      %v6460 = vrot.slane %v6458, 2
      %v6461 = vor.u32 %v6457, %v6460
      %v6462 = vsel %vm6447, %v6454, %v6461
      %v6463 = vshrl.u32 %v6403, 16
      %v6465 = vrot.slane %v6463, 1
      %v6466 = vshll.u32 %v6403, 16
      %v6468 = vrot.slane %v6466, 2
      %v6469 = vor.u32 %v6465, %v6468
      %v6470 = vshrl.u32 %v6404, 16
      %v6472 = vrot.slane %v6470, 1
      %v6473 = vshll.u32 %v6404, 16
      %v6475 = vrot.slane %v6473, 2
      %v6476 = vor.u32 %v6472, %v6475
      %v6477 = vsel %vm6447, %v6469, %v6476
      %v6478 = vshrl.u32 %v6406, 16
      %v6480 = vrot.slane %v6478, 1
      %v6481 = vshll.u32 %v6406, 16
      %v6483 = vrot.slane %v6481, 2
      %v6484 = vor.u32 %v6480, %v6483
      %v6485 = vshrl.u32 %v6407, 16
      %v6487 = vrot.slane %v6485, 1
      %v6488 = vshll.u32 %v6407, 16
      %v6490 = vrot.slane %v6488, 2
      %v6491 = vor.u32 %v6487, %v6490
      %v6492 = vsel %vm6447, %v6484, %v6491
      %v6493 = vshrl.u32 %v6409, 16
      %v6495 = vrot.slane %v6493, 1
      %v6496 = vshll.u32 %v6409, 16
      %v6498 = vrot.slane %v6496, 2
      %v6499 = vor.u32 %v6495, %v6498
      %v6500 = vshrl.u32 %v6410, 16
      %v6502 = vrot.slane %v6500, 1
      %v6503 = vshll.u32 %v6410, 16
      %v6505 = vrot.slane %v6503, 2
      %v6506 = vor.u32 %v6502, %v6505
      %v6507 = vsel %vm6447, %v6499, %v6506
      %v6508 = vshrl.u32 %v6412, 16
      %v6510 = vrot.slane %v6508, 1
      %v6511 = vshll.u32 %v6412, 16
      %v6513 = vrot.slane %v6511, 2
      %v6514 = vor.u32 %v6510, %v6513
      %v6515 = vshrl.u32 %v6413, 16
      %v6517 = vrot.slane %v6515, 1
      %v6518 = vshll.u32 %v6413, 16
      %v6520 = vrot.slane %v6518, 2
      %v6521 = vor.u32 %v6517, %v6520
      %v6522 = vsel %vm6447, %v6514, %v6521
      %v6523 = vshrl.u32 %v6415, 16
      %v6525 = vrot.slane %v6523, 1
      %v6526 = vshll.u32 %v6415, 16
      %v6528 = vrot.slane %v6526, 2
      %v6529 = vor.u32 %v6525, %v6528
      %v6530 = vshrl.u32 %v6416, 16
      %v6532 = vrot.slane %v6530, 1
      %v6533 = vshll.u32 %v6416, 16
      %v6535 = vrot.slane %v6533, 2
      %v6536 = vor.u32 %v6532, %v6535
      %v6537 = vsel %vm6447, %v6529, %v6536
      %v6538 = vshrl.u32 %v6418, 16
      %v6540 = vrot.slane %v6538, 1
      %v6541 = vshll.u32 %v6418, 16
      %v6543 = vrot.slane %v6541, 2
      %v6544 = vor.u32 %v6540, %v6543
      %v6545 = vshrl.u32 %v6419, 16
      %v6547 = vrot.slane %v6545, 1
      %v6548 = vshll.u32 %v6419, 16
      %v6550 = vrot.slane %v6548, 2
      %v6551 = vor.u32 %v6547, %v6550
      %v6552 = vsel %vm6447, %v6544, %v6551
      %v6553 = vshrl.u32 %v6421, 16
      %v6555 = vrot.slane %v6553, 1
      %v6556 = vshll.u32 %v6421, 16
      %v6558 = vrot.slane %v6556, 2
      %v6559 = vor.u32 %v6555, %v6558
      %v6560 = vshrl.u32 %v6422, 16
      %v6562 = vrot.slane %v6560, 1
      %v6563 = vshll.u32 %v6422, 16
      %v6565 = vrot.slane %v6563, 2
      %v6566 = vor.u32 %v6562, %v6565
      %v6567 = vsel %vm6447, %v6559, %v6566
      %v6568 = vshrl.u32 %v6424, 16
      %v6570 = vrot.slane %v6568, 1
      %v6571 = vshll.u32 %v6424, 16
      %v6573 = vrot.slane %v6571, 2
      %v6574 = vor.u32 %v6570, %v6573
      %v6575 = vshrl.u32 %v6425, 16
      %v6577 = vrot.slane %v6575, 1
      %v6578 = vshll.u32 %v6425, 16
      %v6580 = vrot.slane %v6578, 2
      %v6581 = vor.u32 %v6577, %v6580
      %v6582 = vsel %vm6447, %v6574, %v6581
      %v6583 = vshrl.u32 %v6427, 16
      %v6585 = vrot.slane %v6583, 1
      %v6586 = vshll.u32 %v6427, 16
      %v6588 = vrot.slane %v6586, 2
      %v6589 = vor.u32 %v6585, %v6588
      %v6590 = vshrl.u32 %v6428, 16
      %v6592 = vrot.slane %v6590, 1
      %v6593 = vshll.u32 %v6428, 16
      %v6595 = vrot.slane %v6593, 2
      %v6596 = vor.u32 %v6592, %v6595
      %v6597 = vsel %vm6447, %v6589, %v6596
      %v6598 = vshrl.u32 %v6430, 16
      %v6600 = vrot.slane %v6598, 1
      %v6601 = vshll.u32 %v6430, 16
      %v6603 = vrot.slane %v6601, 2
      %v6604 = vor.u32 %v6600, %v6603
      %v6605 = vshrl.u32 %v6431, 16
      %v6607 = vrot.slane %v6605, 1
      %v6608 = vshll.u32 %v6431, 16
      %v6610 = vrot.slane %v6608, 2
      %v6611 = vor.u32 %v6607, %v6610
      %v6612 = vsel %vm6447, %v6604, %v6611
      %v6613 = vshrl.u32 %v6433, 16
      %v6615 = vrot.slane %v6613, 1
      %v6616 = vshll.u32 %v6433, 16
      %v6618 = vrot.slane %v6616, 2
      %v6619 = vor.u32 %v6615, %v6618
      %v6620 = vshrl.u32 %v6434, 16
      %v6622 = vrot.slane %v6620, 1
      %v6623 = vshll.u32 %v6434, 16
      %v6625 = vrot.slane %v6623, 2
      %v6626 = vor.u32 %v6622, %v6625
      %v6627 = vsel %vm6447, %v6619, %v6626
      %v6628 = vshrl.u32 %v6436, 16
      %v6630 = vrot.slane %v6628, 1
      %v6631 = vshll.u32 %v6436, 16
      %v6633 = vrot.slane %v6631, 2
      %v6634 = vor.u32 %v6630, %v6633
      %v6635 = vshrl.u32 %v6437, 16
      %v6637 = vrot.slane %v6635, 1
      %v6638 = vshll.u32 %v6437, 16
      %v6640 = vrot.slane %v6638, 2
      %v6641 = vor.u32 %v6637, %v6640
      %v6642 = vsel %vm6447, %v6634, %v6641
      %v6643 = vshrl.u32 %v6439, 16
      %v6645 = vrot.slane %v6643, 1
      %v6646 = vshll.u32 %v6439, 16
      %v6648 = vrot.slane %v6646, 2
      %v6649 = vor.u32 %v6645, %v6648
      %v6650 = vshrl.u32 %v6440, 16
      %v6652 = vrot.slane %v6650, 1
      %v6653 = vshll.u32 %v6440, 16
      %v6655 = vrot.slane %v6653, 2
      %v6656 = vor.u32 %v6652, %v6655
      %v6657 = vsel %vm6447, %v6649, %v6656
      %v6658 = vshrl.u32 %v6442, 16
      %v6660 = vrot.slane %v6658, 1
      %v6661 = vshll.u32 %v6442, 16
      %v6663 = vrot.slane %v6661, 2
      %v6664 = vor.u32 %v6660, %v6663
      %v6665 = vshrl.u32 %v6443, 16
      %v6667 = vrot.slane %v6665, 1
      %v6668 = vshll.u32 %v6443, 16
      %v6670 = vrot.slane %v6668, 2
      %v6671 = vor.u32 %v6667, %v6670
      %v6672 = vsel %vm6447, %v6664, %v6671
      %v6673 = vshrl.u32 %v6445, 16
      %v6675 = vrot.slane %v6673, 1
      %v6676 = vshll.u32 %v6445, 16
      %v6678 = vrot.slane %v6676, 2
      %v6679 = vor.u32 %v6675, %v6678
      %v6680 = vshrl.u32 %v6446, 16
      %v6682 = vrot.slane %v6680, 1
      %v6683 = vshll.u32 %v6446, 16
      %v6685 = vrot.slane %v6683, 2
      %v6686 = vor.u32 %v6682, %v6685
      %v6687 = vsel %vm6447, %v6679, %v6686
      %v6688 = vunpack.c.l.b16 %v6462
      %v6689 = vunpack.c.h.b16 %v6462
      %v6690 = vunpack.c.l.b16 %v6477
      %v6691 = vunpack.c.h.b16 %v6477
      %v6692 = vunpack.c.l.b16 %v6492
      %v6693 = vunpack.c.h.b16 %v6492
      %v6694 = vunpack.c.l.b16 %v6507
      %v6695 = vunpack.c.h.b16 %v6507
      %v6696 = vunpack.c.l.b16 %v6522
      %v6697 = vunpack.c.h.b16 %v6522
      %v6698 = vunpack.c.l.b16 %v6537
      %v6699 = vunpack.c.h.b16 %v6537
      %v6700 = vunpack.c.l.b16 %v6552
      %v6701 = vunpack.c.h.b16 %v6552
      %v6702 = vunpack.c.l.b16 %v6567
      %v6703 = vunpack.c.h.b16 %v6567
      %v6704 = vunpack.c.l.b16 %v6582
      %v6705 = vunpack.c.h.b16 %v6582
      %v6706 = vunpack.c.l.b16 %v6597
      %v6707 = vunpack.c.h.b16 %v6597
      %v6708 = vunpack.c.l.b16 %v6612
      %v6709 = vunpack.c.h.b16 %v6612
      %v6710 = vunpack.c.l.b16 %v6627
      %v6711 = vunpack.c.h.b16 %v6627
      %v6712 = vunpack.c.l.b16 %v6642
      %v6713 = vunpack.c.h.b16 %v6642
      %v6714 = vunpack.c.l.b16 %v6657
      %v6715 = vunpack.c.h.b16 %v6657
      %v6716 = vunpack.c.l.b16 %v6672
      %v6717 = vunpack.c.h.b16 %v6672
      %v6718 = vunpack.c.l.b16 %v6687
      %v6719 = vunpack.c.h.b16 %v6687
      %v6720 = vpack.c.b16 %v6688, %v6688
      %v6721 = vpack.c.b16 %v6689, %v6689
      %v6722 = vpack.c.b16 %v6690, %v6690
      %v6723 = vpack.c.b16 %v6691, %v6691
      %v6724 = vpack.c.b16 %v6692, %v6692
      %v6725 = vpack.c.b16 %v6693, %v6693
      %v6726 = vpack.c.b16 %v6694, %v6694
      %v6727 = vpack.c.b16 %v6695, %v6695
      %v6728 = vpack.c.b16 %v6696, %v6696
      %v6729 = vpack.c.b16 %v6697, %v6697
      %v6730 = vpack.c.b16 %v6698, %v6698
      %v6731 = vpack.c.b16 %v6699, %v6699
      %v6732 = vpack.c.b16 %v6700, %v6700
      %v6733 = vpack.c.b16 %v6701, %v6701
      %v6734 = vpack.c.b16 %v6702, %v6702
      %v6735 = vpack.c.b16 %v6703, %v6703
      %v6736 = vpack.c.b16 %v6704, %v6704
      %v6737 = vpack.c.b16 %v6705, %v6705
      %v6738 = vpack.c.b16 %v6706, %v6706
      %v6739 = vpack.c.b16 %v6707, %v6707
      %v6740 = vpack.c.b16 %v6708, %v6708
      %v6741 = vpack.c.b16 %v6709, %v6709
      %v6742 = vpack.c.b16 %v6710, %v6710
      %v6743 = vpack.c.b16 %v6711, %v6711
      %v6744 = vpack.c.b16 %v6712, %v6712
      %v6745 = vpack.c.b16 %v6713, %v6713
      %v6746 = vpack.c.b16 %v6714, %v6714
      %v6747 = vpack.c.b16 %v6715, %v6715
      %v6748 = vpack.c.b16 %v6716, %v6716
      %v6749 = vpack.c.b16 %v6717, %v6717
      %v6750 = vpack.c.b16 %v6718, %v6718
      %v6751 = vpack.c.b16 %v6719, %v6719
      %6784 = vst [vmem:[#allocation3 + $0x4] sm:$0xf] %v6720
      %6785 = vst [vmem:[#allocation3 + $0x10] sm:$0xf] %v6721
      %6786 = vst [vmem:[#allocation3 + $0x1c] sm:$0xf] %v6722
      %6787 = vst [vmem:[#allocation3 + $0x28] sm:$0xf] %v6723
      %6788 = vst [vmem:[#allocation3 + $0x34] sm:$0xf] %v6724
      %6789 = vst [vmem:[#allocation3 + $0x40] sm:$0xf] %v6725
      %6790 = vst [vmem:[#allocation3 + $0x4c] sm:$0xf] %v6726
      %6791 = vst [vmem:[#allocation3 + $0x58] sm:$0xf] %v6727
      %6792 = vst [vmem:[#allocation3 + $0x64] sm:$0xf] %v6728
      %6793 = vst [vmem:[#allocation3 + $0x70] sm:$0xf] %v6729
      %6794 = vst [vmem:[#allocation3 + $0x7c] sm:$0xf] %v6730
      %6795 = vst [vmem:[#allocation3 + $0x88] sm:$0xf] %v6731
      %6796 = vst [vmem:[#allocation3 + $0x94] sm:$0xf] %v6732
      %6797 = vst [vmem:[#allocation3 + $0xa0] sm:$0xf] %v6733
      %6798 = vst [vmem:[#allocation3 + $0xac] sm:$0xf] %v6734
      %6799 = vst [vmem:[#allocation3 + $0xb8] sm:$0xf] %v6735
      %6800 = vst [vmem:[#allocation3 + $0xc4] sm:$0xf] %v6736
      %6801 = vst [vmem:[#allocation3 + $0xd0] sm:$0xf] %v6737
      %6802 = vst [vmem:[#allocation3 + $0xdc] sm:$0xf] %v6738
      %6803 = vst [vmem:[#allocation3 + $0xe8] sm:$0xf] %v6739
      %6804 = vst [vmem:[#allocation3 + $0xf4] sm:$0xf] %v6740
      %6805 = vst [vmem:[#allocation3 + $0x100] sm:$0xf] %v6741
      %6806 = vst [vmem:[#allocation3 + $0x10c] sm:$0xf] %v6742
      %6807 = vst [vmem:[#allocation3 + $0x118] sm:$0xf] %v6743
      %6808 = vst [vmem:[#allocation3 + $0x124] sm:$0xf] %v6744
      %6809 = vst [vmem:[#allocation3 + $0x130] sm:$0xf] %v6745
      %6810 = vst [vmem:[#allocation3 + $0x13c] sm:$0xf] %v6746
      %6811 = vst [vmem:[#allocation3 + $0x148] sm:$0xf] %v6747
      %6812 = vst [vmem:[#allocation3 + $0x154] sm:$0xf] %v6748
      %6813 = vst [vmem:[#allocation3 + $0x160] sm:$0xf] %v6749
      %6814 = vst [vmem:[#allocation3 + $0x16c] sm:$0xf] %v6750
      %6815 = vst [vmem:[#allocation3 + $0x178] sm:$0xf] %v6751
      %v6816 = vld [vmem:[%s3533] sm:$0xe]
      %v6817 = vld [vmem:[%s3533 + $0x4] sm:$0xf]
      %v6818 = vld [vmem:[%s3533 + $0x8] sm:$0x1]
      %v6819 = vld [vmem:[%s3533 + $0xc] sm:$0xe]
      %v6820 = vld [vmem:[%s3533 + $0x10] sm:$0xf]
      %v6821 = vld [vmem:[%s3533 + $0x14] sm:$0x1]
      %v6822 = vld [vmem:[%s3533 + $0x18] sm:$0xe]
      %v6823 = vld [vmem:[%s3533 + $0x1c] sm:$0xf]
      %v6824 = vld [vmem:[%s3533 + $0x20] sm:$0x1]
      %v6825 = vld [vmem:[%s3533 + $0x24] sm:$0xe]
      %v6826 = vld [vmem:[%s3533 + $0x28] sm:$0xf]
      %v6827 = vld [vmem:[%s3533 + $0x2c] sm:$0x1]
      %v6828 = vld [vmem:[%s3533 + $0x30] sm:$0xe]
      %v6829 = vld [vmem:[%s3533 + $0x34] sm:$0xf]
      %v6830 = vld [vmem:[%s3533 + $0x38] sm:$0x1]
      %v6831 = vld [vmem:[%s3533 + $0x3c] sm:$0xe]
      %v6832 = vld [vmem:[%s3533 + $0x40] sm:$0xf]
      %v6833 = vld [vmem:[%s3533 + $0x44] sm:$0x1]
      %v6834 = vld [vmem:[%s3533 + $0x48] sm:$0xe]
      %v6835 = vld [vmem:[%s3533 + $0x4c] sm:$0xf]
      %v6836 = vld [vmem:[%s3533 + $0x50] sm:$0x1]
      %v6837 = vld [vmem:[%s3533 + $0x54] sm:$0xe]
      %v6838 = vld [vmem:[%s3533 + $0x58] sm:$0xf]
      %v6839 = vld [vmem:[%s3533 + $0x5c] sm:$0x1]
      %v6840 = vld [vmem:[%s3533 + $0x60] sm:$0xe]
      %v6841 = vld [vmem:[%s3533 + $0x64] sm:$0xf]
      %v6842 = vld [vmem:[%s3533 + $0x68] sm:$0x1]
      %v6843 = vld [vmem:[%s3533 + $0x6c] sm:$0xe]
      %v6844 = vld [vmem:[%s3533 + $0x70] sm:$0xf]
      %v6845 = vld [vmem:[%s3533 + $0x74] sm:$0x1]
      %v6846 = vld [vmem:[%s3533 + $0x78] sm:$0xe]
      %v6847 = vld [vmem:[%s3533 + $0x7c] sm:$0xf]
      %v6848 = vld [vmem:[%s3533 + $0x80] sm:$0x1]
      %v6849 = vld [vmem:[%s3533 + $0x84] sm:$0xe]
      %v6850 = vld [vmem:[%s3533 + $0x88] sm:$0xf]
      %v6851 = vld [vmem:[%s3533 + $0x8c] sm:$0x1]
      %v6852 = vld [vmem:[%s3533 + $0x90] sm:$0xe]
      %v6853 = vld [vmem:[%s3533 + $0x94] sm:$0xf]
      %v6854 = vld [vmem:[%s3533 + $0x98] sm:$0x1]
      %v6855 = vld [vmem:[%s3533 + $0x9c] sm:$0xe]
      %v6856 = vld [vmem:[%s3533 + $0xa0] sm:$0xf]
      %v6857 = vld [vmem:[%s3533 + $0xa4] sm:$0x1]
      %v6858 = vld [vmem:[%s3533 + $0xa8] sm:$0xe]
      %v6859 = vld [vmem:[%s3533 + $0xac] sm:$0xf]
      %v6860 = vld [vmem:[%s3533 + $0xb0] sm:$0x1]
      %v6861 = vld [vmem:[%s3533 + $0xb4] sm:$0xe]
      %v6862 = vld [vmem:[%s3533 + $0xb8] sm:$0xf]
      %v6863 = vld [vmem:[%s3533 + $0xbc] sm:$0x1]
      %v6864 = vld [vmem:[%s3533] sm:$0xc]
      %v6865 = vld [vmem:[%s3533 + $0x8] sm:$0x3]
      %v6866 = vld [vmem:[%s3533 + $0xc] sm:$0xc]
      %v6867 = vld [vmem:[%s3533 + $0x14] sm:$0x3]
      %v6868 = vld [vmem:[%s3533 + $0x18] sm:$0xc]
      %v6869 = vld [vmem:[%s3533 + $0x20] sm:$0x3]
      %v6870 = vld [vmem:[%s3533 + $0x24] sm:$0xc]
      %v6871 = vld [vmem:[%s3533 + $0x2c] sm:$0x3]
      %v6872 = vld [vmem:[%s3533 + $0x30] sm:$0xc]
      %v6873 = vld [vmem:[%s3533 + $0x38] sm:$0x3]
      %v6874 = vld [vmem:[%s3533 + $0x3c] sm:$0xc]
      %v6875 = vld [vmem:[%s3533 + $0x44] sm:$0x3]
      %v6876 = vld [vmem:[%s3533 + $0x48] sm:$0xc]
      %v6877 = vld [vmem:[%s3533 + $0x50] sm:$0x3]
      %v6878 = vld [vmem:[%s3533 + $0x54] sm:$0xc]
      %v6879 = vld [vmem:[%s3533 + $0x5c] sm:$0x3]
      %v6880 = vld [vmem:[%s3533 + $0x60] sm:$0xc]
      %v6881 = vld [vmem:[%s3533 + $0x68] sm:$0x3]
      %v6882 = vld [vmem:[%s3533 + $0x6c] sm:$0xc]
      %v6883 = vld [vmem:[%s3533 + $0x74] sm:$0x3]
      %v6884 = vld [vmem:[%s3533 + $0x78] sm:$0xc]
      %v6885 = vld [vmem:[%s3533 + $0x80] sm:$0x3]
      %v6886 = vld [vmem:[%s3533 + $0x84] sm:$0xc]
      %v6887 = vld [vmem:[%s3533 + $0x8c] sm:$0x3]
      %v6888 = vld [vmem:[%s3533 + $0x90] sm:$0xc]
      %v6889 = vld [vmem:[%s3533 + $0x98] sm:$0x3]
      %v6890 = vld [vmem:[%s3533 + $0x9c] sm:$0xc]
      %v6891 = vld [vmem:[%s3533 + $0xa4] sm:$0x3]
      %v6892 = vld [vmem:[%s3533 + $0xa8] sm:$0xc]
      %v6893 = vld [vmem:[%s3533 + $0xb0] sm:$0x3]
      %v6894 = vld [vmem:[%s3533 + $0xb4] sm:$0xc]
      %v6895 = vld [vmem:[%s3533 + $0xbc] sm:$0x3]
      %v6896 = vld [vmem:[%s187] sm:$0xe]
      %v6897 = vld [vmem:[%s187 + $0x4] sm:$0xf]
      %v6898 = vld [vmem:[%s187 + $0x8] sm:$0x1]
      %v6899 = vld [vmem:[%s187 + $0xc] sm:$0xe]
      %v6900 = vld [vmem:[%s187 + $0x10] sm:$0xf]
      %v6901 = vld [vmem:[%s187 + $0x14] sm:$0x1]
      %v6902 = vld [vmem:[%s187 + $0x18] sm:$0xe]
      %v6903 = vld [vmem:[%s187 + $0x1c] sm:$0xf]
      %v6904 = vld [vmem:[%s187 + $0x20] sm:$0x1]
      %v6905 = vld [vmem:[%s187 + $0x24] sm:$0xe]
      %v6906 = vld [vmem:[%s187 + $0x28] sm:$0xf]
      %v6907 = vld [vmem:[%s187 + $0x2c] sm:$0x1]
      %v6908 = vld [vmem:[%s187 + $0x30] sm:$0xe]
      %v6909 = vld [vmem:[%s187 + $0x34] sm:$0xf]
      %v6910 = vld [vmem:[%s187 + $0x38] sm:$0x1]
      %v6911 = vld [vmem:[%s187 + $0x3c] sm:$0xe]
      %v6912 = vld [vmem:[%s187 + $0x40] sm:$0xf]
      %v6913 = vld [vmem:[%s187 + $0x44] sm:$0x1]
      %v6914 = vld [vmem:[%s187 + $0x48] sm:$0xe]
      %v6915 = vld [vmem:[%s187 + $0x4c] sm:$0xf]
      %v6916 = vld [vmem:[%s187 + $0x50] sm:$0x1]
      %v6917 = vld [vmem:[%s187 + $0x54] sm:$0xe]
      %v6918 = vld [vmem:[%s187 + $0x58] sm:$0xf]
      %v6919 = vld [vmem:[%s187 + $0x5c] sm:$0x1]
      %v6920 = vld [vmem:[%s187 + $0x60] sm:$0xe]
      %v6921 = vld [vmem:[%s187 + $0x64] sm:$0xf]
      %v6922 = vld [vmem:[%s187 + $0x68] sm:$0x1]
      %v6923 = vld [vmem:[%s187 + $0x6c] sm:$0xe]
      %v6924 = vld [vmem:[%s187 + $0x70] sm:$0xf]
      %v6925 = vld [vmem:[%s187 + $0x74] sm:$0x1]
      %v6926 = vld [vmem:[%s187 + $0x78] sm:$0xe]
      %v6927 = vld [vmem:[%s187 + $0x7c] sm:$0xf]
      %v6928 = vld [vmem:[%s187 + $0x80] sm:$0x1]
      %v6929 = vld [vmem:[%s187 + $0x84] sm:$0xe]
      %v6930 = vld [vmem:[%s187 + $0x88] sm:$0xf]
      %v6931 = vld [vmem:[%s187 + $0x8c] sm:$0x1]
      %v6932 = vld [vmem:[%s187 + $0x90] sm:$0xe]
      %v6933 = vld [vmem:[%s187 + $0x94] sm:$0xf]
      %v6934 = vld [vmem:[%s187 + $0x98] sm:$0x1]
      %v6935 = vld [vmem:[%s187 + $0x9c] sm:$0xe]
      %v6936 = vld [vmem:[%s187 + $0xa0] sm:$0xf]
      %v6937 = vld [vmem:[%s187 + $0xa4] sm:$0x1]
      %v6938 = vld [vmem:[%s187 + $0xa8] sm:$0xe]
      %v6939 = vld [vmem:[%s187 + $0xac] sm:$0xf]
      %v6940 = vld [vmem:[%s187 + $0xb0] sm:$0x1]
      %v6941 = vld [vmem:[%s187 + $0xb4] sm:$0xe]
      %v6942 = vld [vmem:[%s187 + $0xb8] sm:$0xf]
      %v6943 = vld [vmem:[%s187 + $0xbc] sm:$0x1]
      %v6992 = vunpack.c.l.b16 %v6816
      %v6993 = vunpack.c.l.b16 %v6817
      %v6994 = vunpack.c.l.b16 %v6818
      %v6995 = vunpack.c.l.b16 %v6819
      %v6996 = vunpack.c.l.b16 %v6820
      %v6997 = vunpack.c.l.b16 %v6821
      %v6998 = vunpack.c.l.b16 %v6822
      %v6999 = vunpack.c.l.b16 %v6823
      %v7000 = vunpack.c.l.b16 %v6824
      %v7001 = vunpack.c.l.b16 %v6825
      %v7002 = vunpack.c.l.b16 %v6826
      %v7003 = vunpack.c.l.b16 %v6827
      %v7004 = vunpack.c.l.b16 %v6828
      %v7005 = vunpack.c.l.b16 %v6829
      %v7006 = vunpack.c.l.b16 %v6830
      %v7007 = vunpack.c.l.b16 %v6831
      %v7008 = vunpack.c.l.b16 %v6832
      %v7009 = vunpack.c.l.b16 %v6833
      %v7010 = vunpack.c.l.b16 %v6834
      %v7011 = vunpack.c.l.b16 %v6835
      %v7012 = vunpack.c.l.b16 %v6836
      %v7013 = vunpack.c.l.b16 %v6837
      %v7014 = vunpack.c.l.b16 %v6838
      %v7015 = vunpack.c.l.b16 %v6839
      %v7016 = vunpack.c.l.b16 %v6840
      %v7017 = vunpack.c.l.b16 %v6841
      %v7018 = vunpack.c.l.b16 %v6842
      %v7019 = vunpack.c.l.b16 %v6843
      %v7020 = vunpack.c.l.b16 %v6844
      %v7021 = vunpack.c.l.b16 %v6845
      %v7022 = vunpack.c.l.b16 %v6846
      %v7023 = vunpack.c.l.b16 %v6847
      %v7024 = vunpack.c.l.b16 %v6848
      %v7025 = vunpack.c.l.b16 %v6849
      %v7026 = vunpack.c.l.b16 %v6850
      %v7027 = vunpack.c.l.b16 %v6851
      %v7028 = vunpack.c.l.b16 %v6852
      %v7029 = vunpack.c.l.b16 %v6853
      %v7030 = vunpack.c.l.b16 %v6854
      %v7031 = vunpack.c.l.b16 %v6855
      %v7032 = vunpack.c.l.b16 %v6856
      %v7033 = vunpack.c.l.b16 %v6857
      %v7034 = vunpack.c.l.b16 %v6858
      %v7035 = vunpack.c.l.b16 %v6859
      %v7036 = vunpack.c.l.b16 %v6860
      %v7037 = vunpack.c.l.b16 %v6861
      %v7038 = vunpack.c.l.b16 %v6862
      %v7039 = vunpack.c.l.b16 %v6863
      %v7040 = vpack.c.b16 %v6993, %v6992
      %v7041 = vpack.c.b16 %v6994, %v6994
      %v7042 = vpack.c.b16 %v6996, %v6995
      %v7043 = vpack.c.b16 %v6997, %v6997
      %v7044 = vpack.c.b16 %v6999, %v6998
      %v7045 = vpack.c.b16 %v7000, %v7000
      %v7046 = vpack.c.b16 %v7002, %v7001
      %v7047 = vpack.c.b16 %v7003, %v7003
      %v7048 = vpack.c.b16 %v7005, %v7004
      %v7049 = vpack.c.b16 %v7006, %v7006
      %v7050 = vpack.c.b16 %v7008, %v7007
      %v7051 = vpack.c.b16 %v7009, %v7009
      %v7052 = vpack.c.b16 %v7011, %v7010
      %v7053 = vpack.c.b16 %v7012, %v7012
      %v7054 = vpack.c.b16 %v7014, %v7013
      %v7055 = vpack.c.b16 %v7015, %v7015
      %v7056 = vpack.c.b16 %v7017, %v7016
      %v7057 = vpack.c.b16 %v7018, %v7018
      %v7058 = vpack.c.b16 %v7020, %v7019
      %v7059 = vpack.c.b16 %v7021, %v7021
      %v7060 = vpack.c.b16 %v7023, %v7022
      %v7061 = vpack.c.b16 %v7024, %v7024
      %v7062 = vpack.c.b16 %v7026, %v7025
      %v7063 = vpack.c.b16 %v7027, %v7027
      %v7064 = vpack.c.b16 %v7029, %v7028
      %v7065 = vpack.c.b16 %v7030, %v7030
      %v7066 = vpack.c.b16 %v7032, %v7031
      %v7067 = vpack.c.b16 %v7033, %v7033
      %v7068 = vpack.c.b16 %v7035, %v7034
      %v7069 = vpack.c.b16 %v7036, %v7036
      %v7070 = vpack.c.b16 %v7038, %v7037
      %v7071 = vpack.c.b16 %v7039, %v7039
      %v7104 = vunpack.c.l.b16 %v6864
      %v7105 = vunpack.c.l.b16 %v6865
      %v7106 = vunpack.c.l.b16 %v6866
      %v7107 = vunpack.c.l.b16 %v6867
      %v7108 = vunpack.c.l.b16 %v6868
      %v7109 = vunpack.c.l.b16 %v6869
      %v7110 = vunpack.c.l.b16 %v6870
      %v7111 = vunpack.c.l.b16 %v6871
      %v7112 = vunpack.c.l.b16 %v6872
      %v7113 = vunpack.c.l.b16 %v6873
      %v7114 = vunpack.c.l.b16 %v6874
      %v7115 = vunpack.c.l.b16 %v6875
      %v7116 = vunpack.c.l.b16 %v6876
      %v7117 = vunpack.c.l.b16 %v6877
      %v7118 = vunpack.c.l.b16 %v6878
      %v7119 = vunpack.c.l.b16 %v6879
      %v7120 = vunpack.c.l.b16 %v6880
      %v7121 = vunpack.c.l.b16 %v6881
      %v7122 = vunpack.c.l.b16 %v6882
      %v7123 = vunpack.c.l.b16 %v6883
      %v7124 = vunpack.c.l.b16 %v6884
      %v7125 = vunpack.c.l.b16 %v6885
      %v7126 = vunpack.c.l.b16 %v6886
      %v7127 = vunpack.c.l.b16 %v6887
      %v7128 = vunpack.c.l.b16 %v6888
      %v7129 = vunpack.c.l.b16 %v6889
      %v7130 = vunpack.c.l.b16 %v6890
      %v7131 = vunpack.c.l.b16 %v6891
      %v7132 = vunpack.c.l.b16 %v6892
      %v7133 = vunpack.c.l.b16 %v6893
      %v7134 = vunpack.c.l.b16 %v6894
      %v7135 = vunpack.c.l.b16 %v6895
      %v7136 = vpack.c.b16 %v6993, %v7104
      %v7137 = vpack.c.b16 %v7105, %v7105
      %v7138 = vpack.c.b16 %v6996, %v7106
      %v7139 = vpack.c.b16 %v7107, %v7107
      %v7140 = vpack.c.b16 %v6999, %v7108
      %v7141 = vpack.c.b16 %v7109, %v7109
      %v7142 = vpack.c.b16 %v7002, %v7110
      %v7143 = vpack.c.b16 %v7111, %v7111
      %v7144 = vpack.c.b16 %v7005, %v7112
      %v7145 = vpack.c.b16 %v7113, %v7113
      %v7146 = vpack.c.b16 %v7008, %v7114
      %v7147 = vpack.c.b16 %v7115, %v7115
      %v7148 = vpack.c.b16 %v7011, %v7116
      %v7149 = vpack.c.b16 %v7117, %v7117
      %v7150 = vpack.c.b16 %v7014, %v7118
      %v7151 = vpack.c.b16 %v7119, %v7119
      %v7152 = vpack.c.b16 %v7017, %v7120
      %v7153 = vpack.c.b16 %v7121, %v7121
      %v7154 = vpack.c.b16 %v7020, %v7122
      %v7155 = vpack.c.b16 %v7123, %v7123
      %v7156 = vpack.c.b16 %v7023, %v7124
      %v7157 = vpack.c.b16 %v7125, %v7125
      %v7158 = vpack.c.b16 %v7026, %v7126
      %v7159 = vpack.c.b16 %v7127, %v7127
      %v7160 = vpack.c.b16 %v7029, %v7128
      %v7161 = vpack.c.b16 %v7129, %v7129
      %v7162 = vpack.c.b16 %v7032, %v7130
      %v7163 = vpack.c.b16 %v7131, %v7131
      %v7164 = vpack.c.b16 %v7035, %v7132
      %v7165 = vpack.c.b16 %v7133, %v7133
      %v7166 = vpack.c.b16 %v7038, %v7134
      %v7167 = vpack.c.b16 %v7135, %v7135
      %v7168 = vrot.slane %v7136, 1
      %v7169 = vrot.slane %v7137, 1
      %v7170 = vsel %vm1205, %v7168, %v7169
      %v7171 = vrot.slane %v7138, 1
      %v7172 = vrot.slane %v7139, 1
      %v7173 = vsel %vm1205, %v7171, %v7172
      %v7174 = vrot.slane %v7140, 1
      %v7175 = vrot.slane %v7141, 1
      %v7176 = vsel %vm1205, %v7174, %v7175
      %v7177 = vrot.slane %v7142, 1
      %v7178 = vrot.slane %v7143, 1
      %v7179 = vsel %vm1205, %v7177, %v7178
      %v7180 = vrot.slane %v7144, 1
      %v7181 = vrot.slane %v7145, 1
      %v7182 = vsel %vm1205, %v7180, %v7181
      %v7183 = vrot.slane %v7146, 1
      %v7184 = vrot.slane %v7147, 1
      %v7185 = vsel %vm1205, %v7183, %v7184
      %v7186 = vrot.slane %v7148, 1
      %v7187 = vrot.slane %v7149, 1
      %v7188 = vsel %vm1205, %v7186, %v7187
      %v7189 = vrot.slane %v7150, 1
      %v7190 = vrot.slane %v7151, 1
      %v7191 = vsel %vm1205, %v7189, %v7190
      %v7192 = vrot.slane %v7152, 1
      %v7193 = vrot.slane %v7153, 1
      %v7194 = vsel %vm1205, %v7192, %v7193
      %v7195 = vrot.slane %v7154, 1
      %v7196 = vrot.slane %v7155, 1
      %v7197 = vsel %vm1205, %v7195, %v7196
      %v7198 = vrot.slane %v7156, 1
      %v7199 = vrot.slane %v7157, 1
      %v7200 = vsel %vm1205, %v7198, %v7199
      %v7201 = vrot.slane %v7158, 1
      %v7202 = vrot.slane %v7159, 1
      %v7203 = vsel %vm1205, %v7201, %v7202
      %v7204 = vrot.slane %v7160, 1
      %v7205 = vrot.slane %v7161, 1
      %v7206 = vsel %vm1205, %v7204, %v7205
      %v7207 = vrot.slane %v7162, 1
      %v7208 = vrot.slane %v7163, 1
      %v7209 = vsel %vm1205, %v7207, %v7208
      %v7210 = vrot.slane %v7164, 1
      %v7211 = vrot.slane %v7165, 1
      %v7212 = vsel %vm1205, %v7210, %v7211
      %v7213 = vrot.slane %v7166, 1
      %v7214 = vrot.slane %v7167, 1
      %v7215 = vsel %vm1205, %v7213, %v7214
      %7216 = vrot.lane.b32.xlu0 %v7170, 16
      %v7217 = vpop.permute.xlu0 %7216
      %7218 = vrot.lane.b32.xlu0 %v7169, 16
      %v7219 = vpop.permute.xlu0 %7218
      %7220 = vrot.lane.b32.xlu0 %v7173, 16
      %v7221 = vpop.permute.xlu0 %7220
      %7222 = vrot.lane.b32.xlu0 %v7172, 16
      %v7223 = vpop.permute.xlu0 %7222
      %7224 = vrot.lane.b32.xlu0 %v7176, 16
      %v7225 = vpop.permute.xlu0 %7224
      %7226 = vrot.lane.b32.xlu0 %v7175, 16
      %v7227 = vpop.permute.xlu0 %7226
      %7228 = vrot.lane.b32.xlu0 %v7179, 16
      %v7229 = vpop.permute.xlu0 %7228
      %7230 = vrot.lane.b32.xlu0 %v7178, 16
      %v7231 = vpop.permute.xlu0 %7230
      %7232 = vrot.lane.b32.xlu0 %v7182, 16
      %v7233 = vpop.permute.xlu0 %7232
      %7234 = vrot.lane.b32.xlu0 %v7181, 16
      %v7235 = vpop.permute.xlu0 %7234
      %7236 = vrot.lane.b32.xlu0 %v7185, 16
      %v7237 = vpop.permute.xlu0 %7236
      %7238 = vrot.lane.b32.xlu0 %v7184, 16
      %v7239 = vpop.permute.xlu0 %7238
      %7240 = vrot.lane.b32.xlu0 %v7188, 16
      %v7241 = vpop.permute.xlu0 %7240
      %7242 = vrot.lane.b32.xlu0 %v7187, 16
      %v7243 = vpop.permute.xlu0 %7242
      %7244 = vrot.lane.b32.xlu0 %v7191, 16
      %v7245 = vpop.permute.xlu0 %7244
      %7246 = vrot.lane.b32.xlu0 %v7190, 16
      %v7247 = vpop.permute.xlu0 %7246
      %7248 = vrot.lane.b32.xlu0 %v7194, 16
      %v7249 = vpop.permute.xlu0 %7248
      %7250 = vrot.lane.b32.xlu0 %v7193, 16
      %v7251 = vpop.permute.xlu0 %7250
      %7252 = vrot.lane.b32.xlu0 %v7197, 16
      %v7253 = vpop.permute.xlu0 %7252
      %7254 = vrot.lane.b32.xlu0 %v7196, 16
      %v7255 = vpop.permute.xlu0 %7254
      %7256 = vrot.lane.b32.xlu0 %v7200, 16
      %v7257 = vpop.permute.xlu0 %7256
      %7258 = vrot.lane.b32.xlu0 %v7199, 16
      %v7259 = vpop.permute.xlu0 %7258
      %7260 = vrot.lane.b32.xlu0 %v7203, 16
      %v7261 = vpop.permute.xlu0 %7260
      %7262 = vrot.lane.b32.xlu0 %v7202, 16
      %v7263 = vpop.permute.xlu0 %7262
      %7264 = vrot.lane.b32.xlu0 %v7206, 16
      %v7265 = vpop.permute.xlu0 %7264
      %7266 = vrot.lane.b32.xlu0 %v7205, 16
      %v7267 = vpop.permute.xlu0 %7266
      %7268 = vrot.lane.b32.xlu0 %v7209, 16
      %v7269 = vpop.permute.xlu0 %7268
      %7270 = vrot.lane.b32.xlu0 %v7208, 16
      %v7271 = vpop.permute.xlu0 %7270
      %7272 = vrot.lane.b32.xlu0 %v7212, 16
      %v7273 = vpop.permute.xlu0 %7272
      %7274 = vrot.lane.b32.xlu0 %v7211, 16
      %v7275 = vpop.permute.xlu0 %7274
      %7276 = vrot.lane.b32.xlu0 %v7215, 16
      %v7277 = vpop.permute.xlu0 %7276
      %7278 = vrot.lane.b32.xlu0 %v7214, 16
      %v7279 = vpop.permute.xlu0 %7278
      %v7328 = vunpack.c.l.b16 %v6896
      %v7329 = vunpack.c.l.b16 %v6897
      %v7330 = vunpack.c.l.b16 %v6898
      %v7331 = vunpack.c.l.b16 %v6899
      %v7332 = vunpack.c.l.b16 %v6900
      %v7333 = vunpack.c.l.b16 %v6901
      %v7334 = vunpack.c.l.b16 %v6902
      %v7335 = vunpack.c.l.b16 %v6903
      %v7336 = vunpack.c.l.b16 %v6904
      %v7337 = vunpack.c.l.b16 %v6905
      %v7338 = vunpack.c.l.b16 %v6906
      %v7339 = vunpack.c.l.b16 %v6907
      %v7340 = vunpack.c.l.b16 %v6908
      %v7341 = vunpack.c.l.b16 %v6909
      %v7342 = vunpack.c.l.b16 %v6910
      %v7343 = vunpack.c.l.b16 %v6911
      %v7344 = vunpack.c.l.b16 %v6912
      %v7345 = vunpack.c.l.b16 %v6913
      %v7346 = vunpack.c.l.b16 %v6914
      %v7347 = vunpack.c.l.b16 %v6915
      %v7348 = vunpack.c.l.b16 %v6916
      %v7349 = vunpack.c.l.b16 %v6917
      %v7350 = vunpack.c.l.b16 %v6918
      %v7351 = vunpack.c.l.b16 %v6919
      %v7352 = vunpack.c.l.b16 %v6920
      %v7353 = vunpack.c.l.b16 %v6921
      %v7354 = vunpack.c.l.b16 %v6922
      %v7355 = vunpack.c.l.b16 %v6923
      %v7356 = vunpack.c.l.b16 %v6924
      %v7357 = vunpack.c.l.b16 %v6925
      %v7358 = vunpack.c.l.b16 %v6926
      %v7359 = vunpack.c.l.b16 %v6927
      %v7360 = vunpack.c.l.b16 %v6928
      %v7361 = vunpack.c.l.b16 %v6929
      %v7362 = vunpack.c.l.b16 %v6930
      %v7363 = vunpack.c.l.b16 %v6931
      %v7364 = vunpack.c.l.b16 %v6932
      %v7365 = vunpack.c.l.b16 %v6933
      %v7366 = vunpack.c.l.b16 %v6934
      %v7367 = vunpack.c.l.b16 %v6935
      %v7368 = vunpack.c.l.b16 %v6936
      %v7369 = vunpack.c.l.b16 %v6937
      %v7370 = vunpack.c.l.b16 %v6938
      %v7371 = vunpack.c.l.b16 %v6939
      %v7372 = vunpack.c.l.b16 %v6940
      %v7373 = vunpack.c.l.b16 %v6941
      %v7374 = vunpack.c.l.b16 %v6942
      %v7375 = vunpack.c.l.b16 %v6943
      %v7376 = vpack.c.b16 %v7329, %v7328
      %v7377 = vpack.c.b16 %v7330, %v7330
      %v7378 = vpack.c.b16 %v7332, %v7331
      %v7379 = vpack.c.b16 %v7333, %v7333
      %v7380 = vpack.c.b16 %v7335, %v7334
      %v7381 = vpack.c.b16 %v7336, %v7336
      %v7382 = vpack.c.b16 %v7338, %v7337
      %v7383 = vpack.c.b16 %v7339, %v7339
      %v7384 = vpack.c.b16 %v7341, %v7340
      %v7385 = vpack.c.b16 %v7342, %v7342
      %v7386 = vpack.c.b16 %v7344, %v7343
      %v7387 = vpack.c.b16 %v7345, %v7345
      %v7388 = vpack.c.b16 %v7347, %v7346
      %v7389 = vpack.c.b16 %v7348, %v7348
      %v7390 = vpack.c.b16 %v7350, %v7349
      %v7391 = vpack.c.b16 %v7351, %v7351
      %v7392 = vpack.c.b16 %v7353, %v7352
      %v7393 = vpack.c.b16 %v7354, %v7354
      %v7394 = vpack.c.b16 %v7356, %v7355
      %v7395 = vpack.c.b16 %v7357, %v7357
      %v7396 = vpack.c.b16 %v7359, %v7358
      %v7397 = vpack.c.b16 %v7360, %v7360
      %v7398 = vpack.c.b16 %v7362, %v7361
      %v7399 = vpack.c.b16 %v7363, %v7363
      %v7400 = vpack.c.b16 %v7365, %v7364
      %v7401 = vpack.c.b16 %v7366, %v7366
      %v7402 = vpack.c.b16 %v7368, %v7367
      %v7403 = vpack.c.b16 %v7369, %v7369
      %v7404 = vpack.c.b16 %v7371, %v7370
      %v7405 = vpack.c.b16 %v7372, %v7372
      %v7406 = vpack.c.b16 %v7374, %v7373
      %v7407 = vpack.c.b16 %v7375, %v7375
      %7408 = vrot.lane.b32.xlu0 %v7376, 32
      %v7409 = vpop.permute.xlu0 %7408
      %7410 = vrot.lane.b32.xlu0 %v7377, 32
      %v7411 = vpop.permute.xlu0 %7410
      %7412 = vrot.lane.b32.xlu0 %v7378, 32
      %v7413 = vpop.permute.xlu0 %7412
      %7414 = vrot.lane.b32.xlu0 %v7379, 32
      %v7415 = vpop.permute.xlu0 %7414
      %7416 = vrot.lane.b32.xlu0 %v7380, 32
      %v7417 = vpop.permute.xlu0 %7416
      %7418 = vrot.lane.b32.xlu0 %v7381, 32
      %v7419 = vpop.permute.xlu0 %7418
      %7420 = vrot.lane.b32.xlu0 %v7382, 32
      %v7421 = vpop.permute.xlu0 %7420
      %7422 = vrot.lane.b32.xlu0 %v7383, 32
      %v7423 = vpop.permute.xlu0 %7422
      %7424 = vrot.lane.b32.xlu0 %v7384, 32
      %v7425 = vpop.permute.xlu0 %7424
      %7426 = vrot.lane.b32.xlu0 %v7385, 32
      %v7427 = vpop.permute.xlu0 %7426
      %7428 = vrot.lane.b32.xlu0 %v7386, 32
      %v7429 = vpop.permute.xlu0 %7428
      %7430 = vrot.lane.b32.xlu0 %v7387, 32
      %v7431 = vpop.permute.xlu0 %7430
      %7432 = vrot.lane.b32.xlu0 %v7388, 32
      %v7433 = vpop.permute.xlu0 %7432
      %7434 = vrot.lane.b32.xlu0 %v7389, 32
      %v7435 = vpop.permute.xlu0 %7434
      %7436 = vrot.lane.b32.xlu0 %v7390, 32
      %v7437 = vpop.permute.xlu0 %7436
      %7438 = vrot.lane.b32.xlu0 %v7391, 32
      %v7439 = vpop.permute.xlu0 %7438
      %7440 = vrot.lane.b32.xlu0 %v7392, 32
      %v7441 = vpop.permute.xlu0 %7440
      %7442 = vrot.lane.b32.xlu0 %v7393, 32
      %v7443 = vpop.permute.xlu0 %7442
      %7444 = vrot.lane.b32.xlu0 %v7394, 32
      %v7445 = vpop.permute.xlu0 %7444
      %7446 = vrot.lane.b32.xlu0 %v7395, 32
      %v7447 = vpop.permute.xlu0 %7446
      %7448 = vrot.lane.b32.xlu0 %v7396, 32
      %v7449 = vpop.permute.xlu0 %7448
      %7450 = vrot.lane.b32.xlu0 %v7397, 32
      %v7451 = vpop.permute.xlu0 %7450
      %7452 = vrot.lane.b32.xlu0 %v7398, 32
      %v7453 = vpop.permute.xlu0 %7452
      %7454 = vrot.lane.b32.xlu0 %v7399, 32
      %v7455 = vpop.permute.xlu0 %7454
      %7456 = vrot.lane.b32.xlu0 %v7400, 32
      %v7457 = vpop.permute.xlu0 %7456
      %7458 = vrot.lane.b32.xlu0 %v7401, 32
      %v7459 = vpop.permute.xlu0 %7458
      %7460 = vrot.lane.b32.xlu0 %v7402, 32
      %v7461 = vpop.permute.xlu0 %7460
      %7462 = vrot.lane.b32.xlu0 %v7403, 32
      %v7463 = vpop.permute.xlu0 %7462
      %7464 = vrot.lane.b32.xlu0 %v7404, 32
      %v7465 = vpop.permute.xlu0 %7464
      %7466 = vrot.lane.b32.xlu0 %v7405, 32
      %v7467 = vpop.permute.xlu0 %7466
      %7468 = vrot.lane.b32.xlu0 %v7406, 32
      %v7469 = vpop.permute.xlu0 %7468
      %7470 = vrot.lane.b32.xlu0 %v7407, 32
      %v7471 = vpop.permute.xlu0 %7470
      %v7474 = vsel %vm2534, %v7040, %v7217
      %v7477 = vsel %vm2534, %v7041, %v7219
      %v7480 = vsel %vm2534, %v7042, %v7221
      %v7483 = vsel %vm2534, %v7043, %v7223
      %v7486 = vsel %vm2534, %v7044, %v7225
      %v7489 = vsel %vm2534, %v7045, %v7227
      %v7492 = vsel %vm2534, %v7046, %v7229
      %v7495 = vsel %vm2534, %v7047, %v7231
      %v7498 = vsel %vm2534, %v7048, %v7233
      %v7501 = vsel %vm2534, %v7049, %v7235
      %v7504 = vsel %vm2534, %v7050, %v7237
      %v7507 = vsel %vm2534, %v7051, %v7239
      %v7510 = vsel %vm2534, %v7052, %v7241
      %v7513 = vsel %vm2534, %v7053, %v7243
      %v7516 = vsel %vm2534, %v7054, %v7245
      %v7519 = vsel %vm2534, %v7055, %v7247
      %v7522 = vsel %vm2534, %v7056, %v7249
      %v7525 = vsel %vm2534, %v7057, %v7251
      %v7528 = vsel %vm2534, %v7058, %v7253
      %v7531 = vsel %vm2534, %v7059, %v7255
      %v7534 = vsel %vm2534, %v7060, %v7257
      %v7537 = vsel %vm2534, %v7061, %v7259
      %v7540 = vsel %vm2534, %v7062, %v7261
      %v7543 = vsel %vm2534, %v7063, %v7263
      %v7546 = vsel %vm2534, %v7064, %v7265
      %v7549 = vsel %vm2534, %v7065, %v7267
      %v7552 = vsel %vm2534, %v7066, %v7269
      %v7555 = vsel %vm2534, %v7067, %v7271
      %v7558 = vsel %vm2534, %v7068, %v7273
      %v7561 = vsel %vm2534, %v7069, %v7275
      %v7564 = vsel %vm2534, %v7070, %v7277
      %v7567 = vsel %vm2534, %v7071, %v7279
      %v7569 = vsel %vm2615, %v7474, %v7409
      %v7571 = vsel %vm2615, %v7477, %v7411
      %v7573 = vsel %vm2615, %v7480, %v7413
      %v7575 = vsel %vm2615, %v7483, %v7415
      %v7577 = vsel %vm2615, %v7486, %v7417
      %v7579 = vsel %vm2615, %v7489, %v7419
      %v7581 = vsel %vm2615, %v7492, %v7421
      %v7583 = vsel %vm2615, %v7495, %v7423
      %v7585 = vsel %vm2615, %v7498, %v7425
      %v7587 = vsel %vm2615, %v7501, %v7427
      %v7589 = vsel %vm2615, %v7504, %v7429
      %v7591 = vsel %vm2615, %v7507, %v7431
      %v7593 = vsel %vm2615, %v7510, %v7433
      %v7595 = vsel %vm2615, %v7513, %v7435
      %v7597 = vsel %vm2615, %v7516, %v7437
      %v7599 = vsel %vm2615, %v7519, %v7439
      %v7601 = vsel %vm2615, %v7522, %v7441
      %v7603 = vsel %vm2615, %v7525, %v7443
      %v7605 = vsel %vm2615, %v7528, %v7445
      %v7607 = vsel %vm2615, %v7531, %v7447
      %v7609 = vsel %vm2615, %v7534, %v7449
      %v7611 = vsel %vm2615, %v7537, %v7451
      %v7613 = vsel %vm2615, %v7540, %v7453
      %v7615 = vsel %vm2615, %v7543, %v7455
      %v7617 = vsel %vm2615, %v7546, %v7457
      %v7619 = vsel %vm2615, %v7549, %v7459
      %v7621 = vsel %vm2615, %v7552, %v7461
      %v7623 = vsel %vm2615, %v7555, %v7463
      %v7625 = vsel %vm2615, %v7558, %v7465
      %v7627 = vsel %vm2615, %v7561, %v7467
      %v7629 = vsel %vm2615, %v7564, %v7469
      %v7631 = vsel %vm2615, %v7567, %v7471
      %v7633 = vsel %vm2680, %v7569, 0
      %v7634 = vsel %vm2680, %v7571, 0
      %v7635 = vsel %vm2680, %v7573, 0
      %v7636 = vsel %vm2680, %v7575, 0
      %v7637 = vsel %vm2680, %v7577, 0
      %v7638 = vsel %vm2680, %v7579, 0
      %v7639 = vsel %vm2680, %v7581, 0
      %v7640 = vsel %vm2680, %v7583, 0
      %v7641 = vsel %vm2680, %v7585, 0
      %v7642 = vsel %vm2680, %v7587, 0
      %v7643 = vsel %vm2680, %v7589, 0
      %v7644 = vsel %vm2680, %v7591, 0
      %v7645 = vsel %vm2680, %v7593, 0
      %v7646 = vsel %vm2680, %v7595, 0
      %v7647 = vsel %vm2680, %v7597, 0
      %v7648 = vsel %vm2680, %v7599, 0
      %v7649 = vsel %vm2680, %v7601, 0
      %v7650 = vsel %vm2680, %v7603, 0
      %v7651 = vsel %vm2680, %v7605, 0
      %v7652 = vsel %vm2680, %v7607, 0
      %v7653 = vsel %vm2680, %v7609, 0
      %v7654 = vsel %vm2680, %v7611, 0
      %v7655 = vsel %vm2680, %v7613, 0
      %v7656 = vsel %vm2680, %v7615, 0
      %v7657 = vsel %vm2680, %v7617, 0
      %v7658 = vsel %vm2680, %v7619, 0
      %v7659 = vsel %vm2680, %v7621, 0
      %v7660 = vsel %vm2680, %v7623, 0
      %v7661 = vsel %vm2680, %v7625, 0
      %v7662 = vsel %vm2680, %v7627, 0
      %v7663 = vsel %vm2680, %v7629, 0
      %v7664 = vsel %vm2680, %v7631, 0
      %v7697 = vrot.slane %v7633, 1
      %v7698 = vrot.slane %v7634, 1
      %v7699 = vsel %vm1205, %v7697, %v7698
      %v7700 = vrot.slane %v7635, 1
      %v7701 = vrot.slane %v7636, 1
      %v7702 = vsel %vm1205, %v7700, %v7701
      %v7703 = vrot.slane %v7637, 1
      %v7704 = vrot.slane %v7638, 1
      %v7705 = vsel %vm1205, %v7703, %v7704
      %v7706 = vrot.slane %v7639, 1
      %v7707 = vrot.slane %v7640, 1
      %v7708 = vsel %vm1205, %v7706, %v7707
      %v7709 = vrot.slane %v7641, 1
      %v7710 = vrot.slane %v7642, 1
      %v7711 = vsel %vm1205, %v7709, %v7710
      %v7712 = vrot.slane %v7643, 1
      %v7713 = vrot.slane %v7644, 1
      %v7714 = vsel %vm1205, %v7712, %v7713
      %v7715 = vrot.slane %v7645, 1
      %v7716 = vrot.slane %v7646, 1
      %v7717 = vsel %vm1205, %v7715, %v7716
      %v7718 = vrot.slane %v7647, 1
      %v7719 = vrot.slane %v7648, 1
      %v7720 = vsel %vm1205, %v7718, %v7719
      %v7721 = vrot.slane %v7649, 1
      %v7722 = vrot.slane %v7650, 1
      %v7723 = vsel %vm1205, %v7721, %v7722
      %v7724 = vrot.slane %v7651, 1
      %v7725 = vrot.slane %v7652, 1
      %v7726 = vsel %vm1205, %v7724, %v7725
      %v7727 = vrot.slane %v7653, 1
      %v7728 = vrot.slane %v7654, 1
      %v7729 = vsel %vm1205, %v7727, %v7728
      %v7730 = vrot.slane %v7655, 1
      %v7731 = vrot.slane %v7656, 1
      %v7732 = vsel %vm1205, %v7730, %v7731
      %v7733 = vrot.slane %v7657, 1
      %v7734 = vrot.slane %v7658, 1
      %v7735 = vsel %vm1205, %v7733, %v7734
      %v7736 = vrot.slane %v7659, 1
      %v7737 = vrot.slane %v7660, 1
      %v7738 = vsel %vm1205, %v7736, %v7737
      %v7739 = vrot.slane %v7661, 1
      %v7740 = vrot.slane %v7662, 1
      %v7741 = vsel %vm1205, %v7739, %v7740
      %v7742 = vrot.slane %v7663, 1
      %v7743 = vrot.slane %v7664, 1
      %v7744 = vsel %vm1205, %v7742, %v7743
      %v7745 = vunpack.c.l.b16 %v7699
      %v7746 = vunpack.c.h.b16 %v7699
      %v7747 = vunpack.c.l.b16 %v7702
      %v7748 = vunpack.c.h.b16 %v7702
      %v7749 = vunpack.c.l.b16 %v7705
      %v7750 = vunpack.c.h.b16 %v7705
      %v7751 = vunpack.c.l.b16 %v7708
      %v7752 = vunpack.c.h.b16 %v7708
      %v7753 = vunpack.c.l.b16 %v7711
      %v7754 = vunpack.c.h.b16 %v7711
      %v7755 = vunpack.c.l.b16 %v7714
      %v7756 = vunpack.c.h.b16 %v7714
      %v7757 = vunpack.c.l.b16 %v7717
      %v7758 = vunpack.c.h.b16 %v7717
      %v7759 = vunpack.c.l.b16 %v7720
      %v7760 = vunpack.c.h.b16 %v7720
      %v7761 = vunpack.c.l.b16 %v7723
      %v7762 = vunpack.c.h.b16 %v7723
      %v7763 = vunpack.c.l.b16 %v7726
      %v7764 = vunpack.c.h.b16 %v7726
      %v7765 = vunpack.c.l.b16 %v7729
      %v7766 = vunpack.c.h.b16 %v7729
      %v7767 = vunpack.c.l.b16 %v7732
      %v7768 = vunpack.c.h.b16 %v7732
      %v7769 = vunpack.c.l.b16 %v7735
      %v7770 = vunpack.c.h.b16 %v7735
      %v7771 = vunpack.c.l.b16 %v7738
      %v7772 = vunpack.c.h.b16 %v7738
      %v7773 = vunpack.c.l.b16 %v7741
      %v7774 = vunpack.c.h.b16 %v7741
      %v7775 = vunpack.c.l.b16 %v7744
      %v7776 = vunpack.c.h.b16 %v7744
      %v7777 = vpack.c.b16 %v7745, %v7745
      %v7778 = vpack.c.b16 %v7746, %v7746
      %v7779 = vpack.c.b16 %v7747, %v7747
      %v7780 = vpack.c.b16 %v7748, %v7748
      %v7781 = vpack.c.b16 %v7749, %v7749
      %v7782 = vpack.c.b16 %v7750, %v7750
      %v7783 = vpack.c.b16 %v7751, %v7751
      %v7784 = vpack.c.b16 %v7752, %v7752
      %v7785 = vpack.c.b16 %v7753, %v7753
      %v7786 = vpack.c.b16 %v7754, %v7754
      %v7787 = vpack.c.b16 %v7755, %v7755
      %v7788 = vpack.c.b16 %v7756, %v7756
      %v7789 = vpack.c.b16 %v7757, %v7757
      %v7790 = vpack.c.b16 %v7758, %v7758
      %v7791 = vpack.c.b16 %v7759, %v7759
      %v7792 = vpack.c.b16 %v7760, %v7760
      %v7793 = vpack.c.b16 %v7761, %v7761
      %v7794 = vpack.c.b16 %v7762, %v7762
      %v7795 = vpack.c.b16 %v7763, %v7763
      %v7796 = vpack.c.b16 %v7764, %v7764
      %v7797 = vpack.c.b16 %v7765, %v7765
      %v7798 = vpack.c.b16 %v7766, %v7766
      %v7799 = vpack.c.b16 %v7767, %v7767
      %v7800 = vpack.c.b16 %v7768, %v7768
      %v7801 = vpack.c.b16 %v7769, %v7769
      %v7802 = vpack.c.b16 %v7770, %v7770
      %v7803 = vpack.c.b16 %v7771, %v7771
      %v7804 = vpack.c.b16 %v7772, %v7772
      %v7805 = vpack.c.b16 %v7773, %v7773
      %v7806 = vpack.c.b16 %v7774, %v7774
      %v7807 = vpack.c.b16 %v7775, %v7775
      %v7808 = vpack.c.b16 %v7776, %v7776
      %7841 = vst [vmem:[#allocation3 + $0x8] sm:$0xf] %v7777
      %7842 = vst [vmem:[#allocation3 + $0x14] sm:$0xf] %v7778
      %7843 = vst [vmem:[#allocation3 + $0x20] sm:$0xf] %v7779
      %7844 = vst [vmem:[#allocation3 + $0x2c] sm:$0xf] %v7780
      %7845 = vst [vmem:[#allocation3 + $0x38] sm:$0xf] %v7781
      %7846 = vst [vmem:[#allocation3 + $0x44] sm:$0xf] %v7782
      %7847 = vst [vmem:[#allocation3 + $0x50] sm:$0xf] %v7783
      %7848 = vst [vmem:[#allocation3 + $0x5c] sm:$0xf] %v7784
      %7849 = vst [vmem:[#allocation3 + $0x68] sm:$0xf] %v7785
      %7850 = vst [vmem:[#allocation3 + $0x74] sm:$0xf] %v7786
      %7851 = vst [vmem:[#allocation3 + $0x80] sm:$0xf] %v7787
      %7852 = vst [vmem:[#allocation3 + $0x8c] sm:$0xf] %v7788
      %7853 = vst [vmem:[#allocation3 + $0x98] sm:$0xf] %v7789
      %7854 = vst [vmem:[#allocation3 + $0xa4] sm:$0xf] %v7790
      %7855 = vst [vmem:[#allocation3 + $0xb0] sm:$0xf] %v7791
      %7856 = vst [vmem:[#allocation3 + $0xbc] sm:$0xf] %v7792
      %7857 = vst [vmem:[#allocation3 + $0xc8] sm:$0xf] %v7793
      %7858 = vst [vmem:[#allocation3 + $0xd4] sm:$0xf] %v7794
      %7859 = vst [vmem:[#allocation3 + $0xe0] sm:$0xf] %v7795
      %7860 = vst [vmem:[#allocation3 + $0xec] sm:$0xf] %v7796
      %7861 = vst [vmem:[#allocation3 + $0xf8] sm:$0xf] %v7797
      %7862 = vst [vmem:[#allocation3 + $0x104] sm:$0xf] %v7798
      %7863 = vst [vmem:[#allocation3 + $0x110] sm:$0xf] %v7799
      %7864 = vst [vmem:[#allocation3 + $0x11c] sm:$0xf] %v7800
      %7865 = vst [vmem:[#allocation3 + $0x128] sm:$0xf] %v7801
      %7866 = vst [vmem:[#allocation3 + $0x134] sm:$0xf] %v7802
      %7867 = vst [vmem:[#allocation3 + $0x140] sm:$0xf] %v7803
      %7868 = vst [vmem:[#allocation3 + $0x14c] sm:$0xf] %v7804
      %7869 = vst [vmem:[#allocation3 + $0x158] sm:$0xf] %v7805
      %7870 = vst [vmem:[#allocation3 + $0x164] sm:$0xf] %v7806
      %7871 = vst [vmem:[#allocation3 + $0x170] sm:$0xf] %v7807
      %7872 = vst [vmem:[#allocation3 + $0x17c] sm:$0xf] %v7808
      %v7873 = vld [vmem:[%s1] sm:$0xff]
      %v7874 = vld [vmem:[%s1 + $0x8] sm:$0xf]
      %v7875 = vld [vmem:[%s1 + $0xc] sm:$0xff]
      %v7876 = vld [vmem:[%s1 + $0x14] sm:$0xf]
      %v7877 = vld [vmem:[#allocation3] sm:$0xff]
      %v7878 = vld [vmem:[#allocation3 + $0x8] sm:$0xf]
      %v7879 = vld [vmem:[#allocation3 + $0xc] sm:$0xff]
      %v7880 = vld [vmem:[#allocation3 + $0x14] sm:$0xf]
      %v7881 = vld [vmem:[#allocation3 + $0x18] sm:$0xff]
      %v7882 = vld [vmem:[#allocation3 + $0x20] sm:$0xf]
      %v7883 = vld [vmem:[#allocation3 + $0x24] sm:$0xff]
      %v7884 = vld [vmem:[#allocation3 + $0x2c] sm:$0xf]
      %v7885 = vld [vmem:[#allocation3 + $0x30] sm:$0xff]
      %v7886 = vld [vmem:[#allocation3 + $0x38] sm:$0xf]
      %v7887 = vld [vmem:[#allocation3 + $0x3c] sm:$0xff]
      %v7888 = vld [vmem:[#allocation3 + $0x44] sm:$0xf]
      %v7889 = vld [vmem:[#allocation3 + $0x48] sm:$0xff]
      %v7890 = vld [vmem:[#allocation3 + $0x50] sm:$0xf]
      %v7891 = vld [vmem:[#allocation3 + $0x54] sm:$0xff]
      %v7892 = vld [vmem:[#allocation3 + $0x5c] sm:$0xf]
      %v7893 = vld [vmem:[#allocation3 + $0x60] sm:$0xff]
      %v7894 = vld [vmem:[#allocation3 + $0x68] sm:$0xf]
      %v7895 = vld [vmem:[#allocation3 + $0x6c] sm:$0xff]
      %v7896 = vld [vmem:[#allocation3 + $0x74] sm:$0xf]
      %v7897 = vld [vmem:[#allocation3 + $0x78] sm:$0xff]
      %v7898 = vld [vmem:[#allocation3 + $0x80] sm:$0xf]
      %v7899 = vld [vmem:[#allocation3 + $0x84] sm:$0xff]
      %v7900 = vld [vmem:[#allocation3 + $0x8c] sm:$0xf]
      %v7901 = vld [vmem:[#allocation3 + $0x90] sm:$0xff]
      %v7902 = vld [vmem:[#allocation3 + $0x98] sm:$0xf]
      %v7903 = vld [vmem:[#allocation3 + $0x9c] sm:$0xff]
      %v7904 = vld [vmem:[#allocation3 + $0xa4] sm:$0xf]
      %v7905 = vld [vmem:[#allocation3 + $0xa8] sm:$0xff]
      %v7906 = vld [vmem:[#allocation3 + $0xb0] sm:$0xf]
      %v7907 = vld [vmem:[#allocation3 + $0xb4] sm:$0xff]
      %v7908 = vld [vmem:[#allocation3 + $0xbc] sm:$0xf]
      %v7909 = vld [vmem:[#allocation3 + $0xc0] sm:$0xff]
      %v7910 = vld [vmem:[#allocation3 + $0xc8] sm:$0xf]
      %v7911 = vld [vmem:[#allocation3 + $0xcc] sm:$0xff]
      %v7912 = vld [vmem:[#allocation3 + $0xd4] sm:$0xf]
      %v7913 = vld [vmem:[#allocation3 + $0xd8] sm:$0xff]
      %v7914 = vld [vmem:[#allocation3 + $0xe0] sm:$0xf]
      %v7915 = vld [vmem:[#allocation3 + $0xe4] sm:$0xff]
      %v7916 = vld [vmem:[#allocation3 + $0xec] sm:$0xf]
      %v7917 = vld [vmem:[#allocation3 + $0xf0] sm:$0xff]
      %v7918 = vld [vmem:[#allocation3 + $0xf8] sm:$0xf]
      %v7919 = vld [vmem:[#allocation3 + $0xfc] sm:$0xff]
      %v7920 = vld [vmem:[#allocation3 + $0x104] sm:$0xf]
      %v7921 = vld [vmem:[#allocation3 + $0x108] sm:$0xff]
      %v7922 = vld [vmem:[#allocation3 + $0x110] sm:$0xf]
      %v7923 = vld [vmem:[#allocation3 + $0x114] sm:$0xff]
      %v7924 = vld [vmem:[#allocation3 + $0x11c] sm:$0xf]
      %v7925 = vld [vmem:[#allocation3 + $0x120] sm:$0xff]
      %v7926 = vld [vmem:[#allocation3 + $0x128] sm:$0xf]
      %v7927 = vld [vmem:[#allocation3 + $0x12c] sm:$0xff]
      %v7928 = vld [vmem:[#allocation3 + $0x134] sm:$0xf]
      %v7929 = vld [vmem:[#allocation3 + $0x138] sm:$0xff]
      %v7930 = vld [vmem:[#allocation3 + $0x140] sm:$0xf]
      %v7931 = vld [vmem:[#allocation3 + $0x144] sm:$0xff]
      %v7932 = vld [vmem:[#allocation3 + $0x14c] sm:$0xf]
      %v7933 = vld [vmem:[#allocation3 + $0x150] sm:$0xff]
      %v7934 = vld [vmem:[#allocation3 + $0x158] sm:$0xf]
      %v7935 = vld [vmem:[#allocation3 + $0x15c] sm:$0xff]
      %v7936 = vld [vmem:[#allocation3 + $0x164] sm:$0xf]
      %v7937 = vld [vmem:[#allocation3 + $0x168] sm:$0xff]
      %v7938 = vld [vmem:[#allocation3 + $0x170] sm:$0xf]
      %v7939 = vld [vmem:[#allocation3 + $0x174] sm:$0xff]
      %v7940 = vld [vmem:[#allocation3 + $0x17c] sm:$0xf]
      %v7941 = vld [vmem:[%s2] sm:$0xff]
      %v7942 = vld [vmem:[%s2 + $0x8] sm:$0xff]
      %7944 = vset.pattern.permute.xlu0 0
      %7945 = vperm.xlu0 %7944, %v7941
      %v7946 = vpop.permute.xlu0 %7945
      %7949 = vset.pattern.permute.xlu0 0
      %7950 = vperm.xlu0 %7949, %v7942
      %v7951 = vpop.permute.xlu0 %7950
      %v7957 = vunpack.c.l.b16 %v7873
      %v7958 = vunpack.c.h.b16 %v7873
      %v7959 = vunpack.c.l.b16 %v7874
      %v7960 = vunpack.c.l.b16 %v7875
      %v7961 = vunpack.c.h.b16 %v7875
      %v7962 = vunpack.c.l.b16 %v7876
      %v7963 = vpack.c.b16 %v7960, %v7957
      %v7964 = vpack.c.b16 %v7961, %v7958
      %v7965 = vpack.c.b16 %v7962, %v7959
      %v8033 = vunpack.c.l.b16 %v7877
      %v8034 = vunpack.c.h.b16 %v7877
      %v8035 = vunpack.c.l.b16 %v7878
      %v8036 = vunpack.c.l.b16 %v7879
      %v8037 = vunpack.c.h.b16 %v7879
      %v8038 = vunpack.c.l.b16 %v7880
      %v8039 = vunpack.c.l.b16 %v7881
      %v8040 = vunpack.c.h.b16 %v7881
      %v8041 = vunpack.c.l.b16 %v7882
      %v8042 = vunpack.c.l.b16 %v7883
      %v8043 = vunpack.c.h.b16 %v7883
      %v8044 = vunpack.c.l.b16 %v7884
      %v8045 = vunpack.c.l.b16 %v7885
      %v8046 = vunpack.c.h.b16 %v7885
      %v8047 = vunpack.c.l.b16 %v7886
      %v8048 = vunpack.c.l.b16 %v7887
      %v8049 = vunpack.c.h.b16 %v7887
      %v8050 = vunpack.c.l.b16 %v7888
      %v8051 = vunpack.c.l.b16 %v7889
      %v8052 = vunpack.c.h.b16 %v7889
      %v8053 = vunpack.c.l.b16 %v7890
      %v8054 = vunpack.c.l.b16 %v7891
      %v8055 = vunpack.c.h.b16 %v7891
      %v8056 = vunpack.c.l.b16 %v7892
      %v8057 = vunpack.c.l.b16 %v7893
      %v8058 = vunpack.c.h.b16 %v7893
      %v8059 = vunpack.c.l.b16 %v7894
      %v8060 = vunpack.c.l.b16 %v7895
      %v8061 = vunpack.c.h.b16 %v7895
      %v8062 = vunpack.c.l.b16 %v7896
      %v8063 = vunpack.c.l.b16 %v7897
      %v8064 = vunpack.c.h.b16 %v7897
      %v8065 = vunpack.c.l.b16 %v7898
      %v8066 = vunpack.c.l.b16 %v7899
      %v8067 = vunpack.c.h.b16 %v7899
      %v8068 = vunpack.c.l.b16 %v7900
      %v8069 = vunpack.c.l.b16 %v7901
      %v8070 = vunpack.c.h.b16 %v7901
      %v8071 = vunpack.c.l.b16 %v7902
      %v8072 = vunpack.c.l.b16 %v7903
      %v8073 = vunpack.c.h.b16 %v7903
      %v8074 = vunpack.c.l.b16 %v7904
      %v8075 = vunpack.c.l.b16 %v7905
      %v8076 = vunpack.c.h.b16 %v7905
      %v8077 = vunpack.c.l.b16 %v7906
      %v8078 = vunpack.c.l.b16 %v7907
      %v8079 = vunpack.c.h.b16 %v7907
      %v8080 = vunpack.c.l.b16 %v7908
      %v8081 = vunpack.c.l.b16 %v7909
      %v8082 = vunpack.c.h.b16 %v7909
      %v8083 = vunpack.c.l.b16 %v7910
      %v8084 = vunpack.c.l.b16 %v7911
      %v8085 = vunpack.c.h.b16 %v7911
      %v8086 = vunpack.c.l.b16 %v7912
      %v8087 = vunpack.c.l.b16 %v7913
      %v8088 = vunpack.c.h.b16 %v7913
      %v8089 = vunpack.c.l.b16 %v7914
      %v8090 = vunpack.c.l.b16 %v7915
      %v8091 = vunpack.c.h.b16 %v7915
      %v8092 = vunpack.c.l.b16 %v7916
      %v8093 = vunpack.c.l.b16 %v7917
      %v8094 = vunpack.c.h.b16 %v7917
      %v8095 = vunpack.c.l.b16 %v7918
      %v8096 = vunpack.c.l.b16 %v7919
      %v8097 = vunpack.c.h.b16 %v7919
      %v8098 = vunpack.c.l.b16 %v7920
      %v8099 = vunpack.c.l.b16 %v7921
      %v8100 = vunpack.c.h.b16 %v7921
      %v8101 = vunpack.c.l.b16 %v7922
      %v8102 = vunpack.c.l.b16 %v7923
      %v8103 = vunpack.c.h.b16 %v7923
      %v8104 = vunpack.c.l.b16 %v7924
      %v8105 = vunpack.c.l.b16 %v7925
      %v8106 = vunpack.c.h.b16 %v7925
      %v8107 = vunpack.c.l.b16 %v7926
      %v8108 = vunpack.c.l.b16 %v7927
      %v8109 = vunpack.c.h.b16 %v7927
      %v8110 = vunpack.c.l.b16 %v7928
      %v8111 = vunpack.c.l.b16 %v7929
      %v8112 = vunpack.c.h.b16 %v7929
      %v8113 = vunpack.c.l.b16 %v7930
      %v8114 = vunpack.c.l.b16 %v7931
      %v8115 = vunpack.c.h.b16 %v7931
      %v8116 = vunpack.c.l.b16 %v7932
      %v8117 = vunpack.c.l.b16 %v7933
      %v8118 = vunpack.c.h.b16 %v7933
      %v8119 = vunpack.c.l.b16 %v7934
      %v8120 = vunpack.c.l.b16 %v7935
      %v8121 = vunpack.c.h.b16 %v7935
      %v8122 = vunpack.c.l.b16 %v7936
      %v8123 = vunpack.c.l.b16 %v7937
      %v8124 = vunpack.c.h.b16 %v7937
      %v8125 = vunpack.c.l.b16 %v7938
      %v8126 = vunpack.c.l.b16 %v7939
      %v8127 = vunpack.c.h.b16 %v7939
      %v8128 = vunpack.c.l.b16 %v7940
      %v8129 = vpack.c.b16 %v8036, %v8033
      %v8130 = vpack.c.b16 %v8037, %v8034
      %v8131 = vpack.c.b16 %v8038, %v8035
      %v8132 = vpack.c.b16 %v8042, %v8039
      %v8133 = vpack.c.b16 %v8043, %v8040
      %v8134 = vpack.c.b16 %v8044, %v8041
      %v8135 = vpack.c.b16 %v8048, %v8045
      %v8136 = vpack.c.b16 %v8049, %v8046
      %v8137 = vpack.c.b16 %v8050, %v8047
      %v8138 = vpack.c.b16 %v8054, %v8051
      %v8139 = vpack.c.b16 %v8055, %v8052
      %v8140 = vpack.c.b16 %v8056, %v8053
      %v8141 = vpack.c.b16 %v8060, %v8057
      %v8142 = vpack.c.b16 %v8061, %v8058
      %v8143 = vpack.c.b16 %v8062, %v8059
      %v8144 = vpack.c.b16 %v8066, %v8063
      %v8145 = vpack.c.b16 %v8067, %v8064
      %v8146 = vpack.c.b16 %v8068, %v8065
      %v8147 = vpack.c.b16 %v8072, %v8069
      %v8148 = vpack.c.b16 %v8073, %v8070
      %v8149 = vpack.c.b16 %v8074, %v8071
      %v8150 = vpack.c.b16 %v8078, %v8075
      %v8151 = vpack.c.b16 %v8079, %v8076
      %v8152 = vpack.c.b16 %v8080, %v8077
      %v8153 = vpack.c.b16 %v8084, %v8081
      %v8154 = vpack.c.b16 %v8085, %v8082
      %v8155 = vpack.c.b16 %v8086, %v8083
      %v8156 = vpack.c.b16 %v8090, %v8087
      %v8157 = vpack.c.b16 %v8091, %v8088
      %v8158 = vpack.c.b16 %v8092, %v8089
      %v8159 = vpack.c.b16 %v8096, %v8093
      %v8160 = vpack.c.b16 %v8097, %v8094
      %v8161 = vpack.c.b16 %v8098, %v8095
      %v8162 = vpack.c.b16 %v8102, %v8099
      %v8163 = vpack.c.b16 %v8103, %v8100
      %v8164 = vpack.c.b16 %v8104, %v8101
      %v8165 = vpack.c.b16 %v8108, %v8105
      %v8166 = vpack.c.b16 %v8109, %v8106
      %v8167 = vpack.c.b16 %v8110, %v8107
      %v8168 = vpack.c.b16 %v8114, %v8111
      %v8169 = vpack.c.b16 %v8115, %v8112
      %v8170 = vpack.c.b16 %v8116, %v8113
      %v8171 = vpack.c.b16 %v8120, %v8117
      %v8172 = vpack.c.b16 %v8121, %v8118
      %v8173 = vpack.c.b16 %v8122, %v8119
      %v8174 = vpack.c.b16 %v8126, %v8123
      %v8175 = vpack.c.b16 %v8127, %v8124
      %v8176 = vpack.c.b16 %v8128, %v8125
      %8225 = vmatprep.subr.bf16.mxu0 %v8151
      %8226 = vmatpush1.bf16.xpose.msra.mxu0 %v8150
      %8227 = vmatprep.subr.bf16.mxu0 %v8148
      %8228 = vmatpush1.bf16.xpose.msra.mxu0 %v8147
      %8229 = vmatprep.subr.bf16.mxu0 %v8145
      %8230 = vmatpush1.bf16.xpose.msra.mxu0 %v8144
      %8231 = vmatprep.subr.bf16.mxu0 %v8142
      %8232 = vmatpush1.bf16.xpose.msra.mxu0 %v8141
      %8233 = vmatprep.subr.bf16.mxu0 %v8139
      %8234 = vmatpush1.bf16.xpose.msra.mxu0 %v8138
      %8235 = vmatprep.subr.bf16.mxu0 %v8136
      %8236 = vmatpush1.bf16.xpose.msra.mxu0 %v8135
      %8237 = vmatprep.subr.bf16.mxu0 %v8133
      %8238 = vmatpush1.bf16.xpose.msra.mxu0 %v8132
      %8239 = vmatprep.subr.bf16.mxu0 %v8130
      %8240 = vmatpush1.bf16.xpose.msra.mxu0 %v8129
      %8241 = vmatprep.subr.bf16.mxu0 %v8175
      %8242 = vmatpush2.bf16.xpose.msra.mxu0 %v8174
      %8243 = vmatprep.subr.bf16.mxu0 %v8172
      %8244 = vmatpush2.bf16.xpose.msra.mxu0 %v8171
      %8245 = vmatprep.subr.bf16.mxu0 %v8169
      %8246 = vmatpush2.bf16.xpose.msra.mxu0 %v8168
      %8247 = vmatprep.subr.bf16.mxu0 %v8166
      %8248 = vmatpush2.bf16.xpose.msra.mxu0 %v8165
      %8249 = vmatprep.subr.bf16.mxu0 %v8163
      %8250 = vmatpush2.bf16.xpose.msra.mxu0 %v8162
      %8251 = vmatprep.subr.bf16.mxu0 %v8160
      %8252 = vmatpush2.bf16.xpose.msra.mxu0 %v8159
      %8253 = vmatprep.subr.bf16.mxu0 %v8157
      %8254 = vmatpush2.bf16.xpose.msra.mxu0 %v8156
      %8255 = vmatprep.subr.bf16.mxu0 %v8154
      %8256 = vmatpush2.bf16.xpose.msra.mxu0 %v8153
      %8257 = vmatprep.mubr.bf16.mxu0 %v7964
      %8258 = vmatmul.mubr.bf16.gmra.mxu0 %v7963
      %v8259 = vpop.f32.mrf.mxu0
      %v8260 = vadd.f32 %v7946, %v8259
      %v8261 = vpop.f32.mrf.mxu0
      %v8262 = vadd.f32 %v7946, %v8261
      %v8263 = vpop.f32.mrf.mxu0
      %v8264 = vadd.f32 %v7951, %v8263
      %v8265 = vpop.f32.mrf.mxu0
      %v8266 = vadd.f32 %v7951, %v8265
      %8267 = vdwg.mxu0
      %8268 = vmatprep.subr.bf16.mxu0 0
      %8269 = vmatpush1.bf16.xpose.msra.mxu0 %v8152
      %8270 = vmatprep.subr.bf16.mxu0 0
      %8271 = vmatpush1.bf16.xpose.msra.mxu0 %v8149
      %8272 = vmatprep.subr.bf16.mxu0 0
      %8273 = vmatpush1.bf16.xpose.msra.mxu0 %v8146
      %8274 = vmatprep.subr.bf16.mxu0 0
      %8275 = vmatpush1.bf16.xpose.msra.mxu0 %v8143
      %8276 = vmatprep.subr.bf16.mxu0 0
      %8277 = vmatpush1.bf16.xpose.msra.mxu0 %v8140
      %8278 = vmatprep.subr.bf16.mxu0 0
      %8279 = vmatpush1.bf16.xpose.msra.mxu0 %v8137
      %8280 = vmatprep.subr.bf16.mxu0 0
      %8281 = vmatpush1.bf16.xpose.msra.mxu0 %v8134
      %8282 = vmatprep.subr.bf16.mxu0 0
      %8283 = vmatpush1.bf16.xpose.msra.mxu0 %v8131
      %8284 = vmatprep.subr.bf16.mxu0 0
      %8285 = vmatpush2.bf16.xpose.msra.mxu0 %v8176
      %8286 = vmatprep.subr.bf16.mxu0 0
      %8287 = vmatpush2.bf16.xpose.msra.mxu0 %v8173
      %8288 = vmatprep.subr.bf16.mxu0 0
      %8289 = vmatpush2.bf16.xpose.msra.mxu0 %v8170
      %8290 = vmatprep.subr.bf16.mxu0 0
      %8291 = vmatpush2.bf16.xpose.msra.mxu0 %v8167
      %8292 = vmatprep.subr.bf16.mxu0 0
      %8293 = vmatpush2.bf16.xpose.msra.mxu0 %v8164
      %8294 = vmatprep.subr.bf16.mxu0 0
      %8295 = vmatpush2.bf16.xpose.msra.mxu0 %v8161
      %8296 = vmatprep.subr.bf16.mxu0 0
      %8297 = vmatpush2.bf16.xpose.msra.mxu0 %v8158
      %8298 = vmatprep.subr.bf16.mxu0 0
      %8299 = vmatpush2.bf16.xpose.msra.mxu0 %v8155
      %8300 = vmatprep.mubr.bf16.mxu0 0
      %8301 = vmatmul.mubr.bf16.gmra.mxu0 %v7965
      %v8302 = vpop.f32.mrf.mxu0
      %v8303 = vadd.f32 %v8260, %v8302
      %v8304 = vpop.f32.mrf.mxu0
      %v8305 = vadd.f32 %v8262, %v8304
      %v8306 = vpop.f32.mrf.mxu0
      %v8307 = vadd.f32 %v8264, %v8306
      %v8308 = vpop.f32.mrf.mxu0
      %v8309 = vadd.f32 %v8266, %v8308
      %8310 = vdwg.mxu0
      %v8311 = vpack.c.bf16 %v8307, %v8303
      %v8312 = vpack.c.bf16 %v8309, %v8305
      %v8315 = vunpack.c.l.b16 %v8311
      %v8316 = vunpack.c.l.b16 %v8312
      %v8317 = vunpack.c.h.b16 %v8311
      %v8318 = vunpack.c.h.b16 %v8312
      %v8319 = vpack.c.b16 %v8316, %v8315
      %v8320 = vpack.c.b16 %v8318, %v8317
      %8323 = vst [vmem:[%s170] sm:$0xff] %v8319
      %8324 = vst [vmem:[%s170 + $0x8] sm:$0xff] %v8320
      %p8325 = scmp.lt.s32.totalorder %s14, 1
      %s8326 = scalar_select %p8325, %s14, 1
      %s8327 = smul.addr %s8326, 4
      %s8328 = smul.addr %s8327, 4
      %s8329 = scalar_lea.vmem %s3, %s8328
      // Predicated region
      $region33: #{mconv2_forward.1} parent=31 // pred_check
        %p8330 = pneg %p100
      $region34: #{mconv2_forward.1} parent=31 // pred_check_branch
        %8332 = sbr.rel (%p8330) target = $region36
      $region35: #{mconv2_forward.1} parent=31 // pred_region
        _
      $region36: #{mconv2_forward.1} parent=31 // pred_fallthru
        _
    $region32: #{mconv2_forward.1} parent=5 // pred_fallthru
      _
    %p8333 = scmp.le.s32.totalorder 2, %s9
    // Predicated region
    $region37: #{mconv2_forward.1} parent=5 // pred_check
      %p8334 = pneg %p8333
    $region38: #{mconv2_forward.1} parent=5 // pred_check_branch
      %8336 = sbr.rel (%p8334) target = $region40
    $region39: #{mconv2_forward.1} parent=5 // pred_region
      %s8337 = ssub.s32 %s9, 2
      // Predicated region
      $region41: #{mconv2_forward.1} parent=39 // pred_check
        %p8338 = pneg %p106
      $region42: #{mconv2_forward.1} parent=39 // pred_check_branch
        %8340 = sbr.rel (%p8338) target = $region44
      $region43: #{mconv2_forward.1} parent=39 // pred_region
        %p8341 = scmp.lt.s32.totalorder %s15, 1
        %s8342 = scalar_select %p8341, %s15, 1
        %s8343 = smul.addr %s8342, 4
        %s8344 = smul.addr %s8343, 4
        %s8345 = scalar_lea.vmem %s3, %s8344
      $region44: #{mconv2_forward.1} parent=39 // pred_fallthru
        _
    $region40: #{mconv2_forward.1} parent=5 // pred_fallthru
      _
  $region6: #{mconv2_forward.1} parent=0 // loop_footer
    %s13 = sadd.s32 1, %s9
  $region7: #{mconv2_forward.1} parent=0 // loop_footer_branch
    %8 = sbr.rel target = $region3
  $region8: #{mconv2_forward.1} parent=0 // loop_exit
    _

</llo_original>
